<compile_context>
chip_gen: v6e
topology: v6e:2x2x1
jax: 0.10.0
libtpu: 0.0.40
codegen_flags: <defaults>
</compile_context>

<pallas_src>
import jax
import jax.numpy as jnp
import numpy as np
from jax.experimental import pallas as pl
from jax.experimental.pallas import tpu as pltpu

MASKING_VALUE = 999.0   # sentinel padding value used by the hmpai pipeline
HIDDEN = 256            # nn.GRU(hidden_size=256)
LIN1 = 128              # nn.LazyLinear(out_features=128)
T_TILE = 8              # timesteps per grid step (streamed gi tile)


# ----------------------------------------------------------------------------
# Pallas kernel: GRU recurrence over one (Tt, Bt, 3H) gi tile + final epilogue
# ----------------------------------------------------------------------------
def sat1_gru_kernel(gi_ref, len_ref, whh_ref, bhn_ref, w1_ref, b1_ref,
                    w2_ref, b2_ref, out_ref, h_scratch):
    # gi_ref : (Tt, Bt, 3H) bf16  -- x @ Wih + bih, with b_hr/b_hz folded in
    # len_ref: (Bt, 1) int32
    # whh_ref: (H, 3H) bf16       bhn_ref: (1, H) f32  (n-gate recurrent bias)
    # w1_ref : (H, 128) f32       b1_ref : (1, 128) f32
    # w2_ref : (128, NCP) f32     b2_ref : (1, NCP) f32 (classes padded to 128)
    t_blk = pl.program_id(1)
    n_t = pl.num_programs(1)
    Tt, Bt, _ = gi_ref.shape

    @pl.when(t_blk == 0)
    def _():
        h_scratch[...] = jnp.zeros_like(h_scratch)

    # Hoist loop-invariant broadcasts (JAX does not CSE broadcast_in_dim).
    len_b = jnp.broadcast_to(len_ref[...], (Bt, HIDDEN))      # (Bt, H) int32
    bhn_b = jnp.broadcast_to(bhn_ref[...], (Bt, HIDDEN))      # (Bt, H) f32
    whh = whh_ref[...]                                        # (H, 3H) bf16
    t0 = t_blk * Tt

    def step(ts, h_prev):
        gi = gi_ref[ts].astype(jnp.float32)                   # (Bt, 3H)
        # Recurrent matmul: bf16 operands, f32 accumulation on the MXU.
        gh = jnp.dot(h_prev.astype(jnp.bfloat16), whh,
                     preferred_element_type=jnp.float32)      # (Bt, 3H)
        # PyTorch GRU gate order: [reset | update | new]
        r = jax.nn.sigmoid(gi[:, :HIDDEN] + gh[:, :HIDDEN])
        z = jax.nn.sigmoid(gi[:, HIDDEN:2 * HIDDEN] + gh[:, HIDDEN:2 * HIDDEN])
        n = jnp.tanh(gi[:, 2 * HIDDEN:] + r * (gh[:, 2 * HIDDEN:] + bhn_b))
        h_new = (1.0 - z) * n + z * h_prev
        # Emulate pack_padded_sequence: only update rows with t < length[b].
        return jnp.where(t0 + ts < len_b, h_new, h_prev)

    h = jax.lax.fori_loop(0, Tt, step, h_scratch[...], unroll=True)
    h_scratch[...] = h

    @pl.when(t_blk == n_t - 1)
    def _():
        # h == GRU output at the last valid timestep of each sequence.
        y = jnp.maximum(h, 0.0)
        y = jnp.dot(y, w1_ref[...], preferred_element_type=jnp.float32) + b1_ref[...]
        y = jnp.dot(y, w2_ref[...], preferred_element_type=jnp.float32) + b2_ref[...]
        out_ref[...] = y


# ----------------------------------------------------------------------------
# Wrapper: lengths, fused time-major input projection, padding, pallas_call
# ----------------------------------------------------------------------------
def _round_up(a, m):
    return ((a + m - 1) // m) * m


def sat1_gru_forward(x, params):
    x = jnp.squeeze(x, axis=1)                                # (B, T, C)
    B, T, C = x.shape

    # Reproduce the PyTorch length logic exactly.
    mask = (x == MASKING_VALUE).astype(jnp.int32)             # (B, T, C)
    values = jnp.max(mask, axis=1)                            # (B, C)
    idx = jnp.argmax(mask, axis=1).astype(jnp.int32)          # first max index
    lengths = idx * values - (1 - values)
    lengths = jnp.where(values == 0, T, lengths)
    lengths = lengths[:, 0].astype(jnp.int32)                 # (B,)

    # Fold the recurrent r/z biases into the (precomputed) input projection
    # bias; only the n-gate recurrent bias stays inside the recurrence.
    b_fold = params["bih"] + jnp.pad(params["bhh"][:, :2 * HIDDEN],
                                     ((0, 0), (0, HIDDEN)))   # (1, 3H)
    bhn = params["bhh"][:, 2 * HIDDEN:]                       # (1, H)

    # Input projection, emitted directly in time-major layout and stored bf16.
    gi = jnp.einsum("btc,ch->tbh", x, params["wih_t"],
                    preferred_element_type=jnp.float32) + b_fold  # (T, B, 3H)
    gi = gi.astype(jnp.bfloat16)

    # Pad batch to a bf16-sublane multiple (16); padded rows get length 0 so
    # their hidden state stays zero and is sliced away below. Pad T to the
    # streaming tile (padded gi is zeros; the t<length mask freezes h anyway).
    Bp = _round_up(max(B, 16), 16)
    if Bp > 128:                       # tile the batch across the grid
        Bp = _round_up(Bp, 128)
        Bt = 128
    else:
        Bt = Bp
    Tp = _round_up(T, T_TILE)
    gi = jnp.pad(gi, ((0, Tp - T), (0, Bp - B), (0, 0)))
    lengths = jnp.pad(lengths, (0, Bp - B))
    len2d = lengths.reshape(Bp, 1)

    # Pad the classifier to a full 128-lane output width (unmasked stores).
    n_classes = params["w2_t"].shape[1]
    NCP = pl.cdiv(n_classes, 128) * 128
    w2p = jnp.pad(params["w2_t"], ((0, 0), (0, NCP - n_classes)))
    b2p = jnp.pad(params["b2"], ((0, 0), (0, NCP - n_classes)))

    # bf16 recurrent weight (f32 accumulation inside the kernel).
    whh_bf16 = params["whh_t"].astype(jnp.bfloat16)

    nb, nt = Bp // Bt, Tp // T_TILE
    const = lambda b, t: (0, 0)
    grid_spec = pltpu.PrefetchScalarGridSpec(
        num_scalar_prefetch=0,
        grid=(nb, nt),
        in_specs=[
            pl.BlockSpec((T_TILE, Bt, 3 * HIDDEN), lambda b, t: (t, b, 0)),  # gi
            pl.BlockSpec((Bt, 1), lambda b, t: (b, 0)),                      # lengths
            pl.BlockSpec((HIDDEN, 3 * HIDDEN), const),                       # whh
            pl.BlockSpec((1, HIDDEN), const),                                # bhn
            pl.BlockSpec((HIDDEN, LIN1), const),                             # w1
            pl.BlockSpec((1, LIN1), const),                                  # b1
            pl.BlockSpec((LIN1, NCP), const),                                # w2
            pl.BlockSpec((1, NCP), const),                                   # b2
        ],
        out_specs=pl.BlockSpec((Bt, NCP), lambda b, t: (b, 0)),
        scratch_shapes=[pltpu.VMEM((Bt, HIDDEN), jnp.float32)],
    )

    out = pl.pallas_call(
        sat1_gru_kernel,
        out_shape=jax.ShapeDtypeStruct((Bp, NCP), jnp.float32),
        grid_spec=grid_spec,
        compiler_params=pltpu.CompilerParams(
            dimension_semantics=("parallel", "arbitrary"),
            vmem_limit_bytes=32 * 1024 * 1024),
    )(gi, len2d, whh_bf16, bhn, params["w1_t"], params["b1"], w2p, b2p)
    return out[:B, :n_classes]


# ----------------------------------------------------------------------------
# Deterministic parameter init (shapes from the module __init__)
# ----------------------------------------------------------------------------
def init_params(key, n_channels, n_classes):
    ks = jax.random.split(key, 8)
    s_gru = 1.0 / np.sqrt(HIDDEN)
    s_l1 = 1.0 / np.sqrt(HIDDEN)
    s_l2 = 1.0 / np.sqrt(LIN1)
    wih = jax.random.uniform(ks[0], (3 * HIDDEN, n_channels), jnp.float32, -s_gru, s_gru)
    whh = jax.random.uniform(ks[1], (3 * HIDDEN, HIDDEN), jnp.float32, -s_gru, s_gru)
    bih = jax.random.uniform(ks[2], (3 * HIDDEN,), jnp.float32, -s_gru, s_gru)
    bhh = jax.random.uniform(ks[3], (3 * HIDDEN,), jnp.float32, -s_gru, s_gru)
    w1 = jax.random.uniform(ks[4], (LIN1, HIDDEN), jnp.float32, -s_l1, s_l1)
    b1 = jax.random.uniform(ks[5], (LIN1,), jnp.float32, -s_l1, s_l1)
    w2 = jax.random.uniform(ks[6], (n_classes, LIN1), jnp.float32, -s_l2, s_l2)
    b2 = jax.random.uniform(ks[7], (n_classes,), jnp.float32, -s_l2, s_l2)
    return dict(
        wih_t=wih.T, whh_t=whh.T,
        bih=bih.reshape(1, -1), bhh=bhh.reshape(1, -1),
        w1_t=w1.T, b1=b1.reshape(1, -1),
        w2_t=w2.T, b2=b2.reshape(1, -1),
    )


# ----------------------------------------------------------------------------
# Pure-JAX reference (mirrors PyTorch forward; same bf16 gi / recurrent-matmul
# numerics as the kernel so the tolerance can stay tight)
# ----------------------------------------------------------------------------
def reference_forward(x, params):
    xs = jnp.squeeze(x, axis=1)
    B, T, C = xs.shape
    mask = (xs == MASKING_VALUE).astype(jnp.int32)
    values = jnp.max(mask, axis=1)
    idx = jnp.argmax(mask, axis=1)
    lengths = jnp.where(values[:, 0] == 0, T, idx[:, 0]).astype(jnp.int32)

    b_fold = params["bih"] + jnp.pad(params["bhh"][:, :2 * HIDDEN],
                                     ((0, 0), (0, HIDDEN)))
    bhn = params["bhh"][:, 2 * HIDDEN:]
    gi_all = (jnp.einsum("btc,ch->tbh", xs, params["wih_t"],
                         preferred_element_type=jnp.float32) + b_fold
              ).astype(jnp.bfloat16).astype(jnp.float32)          # (T, B, 3H)
    whh_bf16 = params["whh_t"].astype(jnp.bfloat16)

    h = jnp.zeros((B, HIDDEN), jnp.float32)
    for t in range(T):
        gi = gi_all[t]
        gh = jnp.dot(h.astype(jnp.bfloat16), whh_bf16,
                     preferred_element_type=jnp.float32)
        r = jax.nn.sigmoid(gi[:, :HIDDEN] + gh[:, :HIDDEN])
        z = jax.nn.sigmoid(gi[:, HIDDEN:2 * HIDDEN] + gh[:, HIDDEN:2 * HIDDEN])
        n = jnp.tanh(gi[:, 2 * HIDDEN:] + r * (gh[:, 2 * HIDDEN:] + bhn))
        h_new = (1.0 - z) * n + z * h
        h = jnp.where((t < lengths)[:, None], h_new, h)
    y = jnp.maximum(h, 0.0)
    y = y @ params["w1_t"] + params["b1"]
    y = y @ params["w2_t"] + params["b2"]
    return y


if __name__ == "__main__":
    B, T, C, N_CLASSES = 2, 16, 8, 5
    key = jax.random.PRNGKey(0)
    kx, kp = jax.random.split(key)

    params = init_params(kp, C, N_CLASSES)

    # Input shaped like the PyTorch module expects: (B, 1, n_samples, n_channels).
    x = jax.random.normal(kx, (B, 1, T, C), jnp.float32)
    # Variable-length sequence: pad batch 0 from timestep 12 onward.
    x = x.at[0, 0, 12:, :].set(MASKING_VALUE)

    out = jax.block_until_ready(jax.jit(sat1_gru_forward)(x, params))
    ref = jax.block_until_ready(reference_forward(x, params))

    np.testing.assert_allclose(np.asarray(out), np.asarray(ref),
                               rtol=2e-3, atol=2e-3)
    print("KERNEL_OK")
</pallas_src>

<mosaic_0001>
module attributes {stable_mosaic.version = 11 : i64} {
  func.func @sat1_gru_kernel(%arg0: i32, %arg1: i32, %arg2: memref<8x16x768xbf16, #tpu.memory_space<vmem>>, %arg3: memref<16x1xi32, #tpu.memory_space<vmem>>, %arg4: memref<256x768xbf16, #tpu.memory_space<vmem>>, %arg5: memref<1x256xf32, #tpu.memory_space<vmem>>, %arg6: memref<256x128xf32, #tpu.memory_space<vmem>>, %arg7: memref<1x128xf32, #tpu.memory_space<vmem>>, %arg8: memref<128x128xf32, #tpu.memory_space<vmem>>, %arg9: memref<1x128xf32, #tpu.memory_space<vmem>>, %arg10: memref<16x128xf32, #tpu.memory_space<vmem>>, %arg11: memref<16x256xf32, #tpu.memory_space<vmem>>) attributes {dimension_semantics = [#tpu.dimension_semantics<parallel>, #tpu.dimension_semantics<arbitrary>], iteration_bounds = array<i64: 1, 2>, scalar_prefetch = 0 : i64, scratch_operands = 1 : i64, tpu.core_type = #tpu.core_type<tc>, window_params = [{transform_indices = @transform_0, window_bounds = array<i64: 8, 16, 768>}, {transform_indices = @transform_1, window_bounds = array<i64: 16, 1>}, {pipeline_mode = #tpu.pipeline_mode<synchronous>, transform_indices = @transform_2, window_bounds = array<i64: 256, 768>}, {pipeline_mode = #tpu.pipeline_mode<synchronous>, transform_indices = @transform_3, window_bounds = array<i64: 1, 256>}, {pipeline_mode = #tpu.pipeline_mode<synchronous>, transform_indices = @transform_4, window_bounds = array<i64: 256, 128>}, {pipeline_mode = #tpu.pipeline_mode<synchronous>, transform_indices = @transform_5, window_bounds = array<i64: 1, 128>}, {pipeline_mode = #tpu.pipeline_mode<synchronous>, transform_indices = @transform_6, window_bounds = array<i64: 128, 128>}, {pipeline_mode = #tpu.pipeline_mode<synchronous>, transform_indices = @transform_7, window_bounds = array<i64: 1, 128>}, {transform_indices = @transform_8, window_bounds = array<i64: 16, 128>}]} {
    %c0_i32 = arith.constant 0 : i32
    %0 = arith.cmpi eq, %arg1, %c0_i32 : i32
    %1 = arith.extui %0 : i1 to i32
    %c0_i32_0 = arith.constant 0 : i32
    %2 = arith.cmpi ne, %1, %c0_i32_0 : i32
    scf.if %2 {
      %cst_61 = arith.constant 0.000000e+00 : f32
      %312 = vector.broadcast %cst_61 : f32 to vector<16x256xf32>
      %c0_62 = arith.constant 0 : index
      %c0_63 = arith.constant 0 : index
      %313 = vector.load %arg11[%c0_62, %c0_63] : memref<16x256xf32, #tpu.memory_space<vmem>>, vector<16x256xf32>
      tpu.vector_store %arg11[%c0_62, %c0_63], %312 {strides = array<i32>} : memref<16x256xf32, #tpu.memory_space<vmem>>, vector<16x256xf32>,
    } else {
    }
    %c0 = arith.constant 0 : index
    %c0_1 = arith.constant 0 : index
    %3 = vector.load %arg3[%c0, %c0_1] : memref<16x1xi32, #tpu.memory_space<vmem>>, vector<16x1xi32>
    %4 = vector.shape_cast %3 : vector<16x1xi32> to vector<16x1xi32>
    %5 = vector.broadcast %4 : vector<16x1xi32> to vector<16x256xi32>
    %c0_2 = arith.constant 0 : index
    %c0_3 = arith.constant 0 : index
    %6 = vector.load %arg5[%c0_2, %c0_3] : memref<1x256xf32, #tpu.memory_space<vmem>>, vector<1x256xf32>
    %7 = vector.shape_cast %6 : vector<1x256xf32> to vector<1x256xf32>
    %8 = vector.broadcast %7 : vector<1x256xf32> to vector<16x256xf32>
    %c0_4 = arith.constant 0 : index
    %c0_5 = arith.constant 0 : index
    %9 = vector.load %arg4[%c0_4, %c0_5] : memref<256x768xbf16, #tpu.memory_space<vmem>>, vector<256x768xbf16>
    %c8_i32 = arith.constant 8 : i32
    %10 = arith.muli %arg1, %c8_i32 : i32
    %c0_6 = arith.constant 0 : index
    %c0_7 = arith.constant 0 : index
    %11 = vector.load %arg11[%c0_6, %c0_7] : memref<16x256xf32, #tpu.memory_space<vmem>>, vector<16x256xf32>
    %c0_i32_8 = arith.constant 0 : i32
    %12 = arith.index_cast %c0_i32_8 : i32 to index
    %c0_9 = arith.constant 0 : index
    %c0_10 = arith.constant 0 : index
    %13 = vector.load %arg2[%12, %c0_9, %c0_10] : memref<8x16x768xbf16, #tpu.memory_space<vmem>>, vector<1x16x768xbf16>
    %14 = vector.shape_cast %13 : vector<1x16x768xbf16> to vector<16x768xbf16>
    %15 = arith.extf %14 : vector<16x768xbf16> to vector<16x768xf32>
    %16 = arith.truncf %11 : vector<16x256xf32> to vector<16x256xbf16>
    %cst = arith.constant dense<0.000000e+00> : vector<16x768xf32>
    %17 = tpu.matmul %16, %9, %cst {dimension_numbers = #tpu.dot_dimension_numbers<[1], [0], [0], [1], [0, 0, 1, 1], [], []>} : vector<16x256xbf16>, vector<256x768xbf16>, vector<16x768xf32> -> vector<16x768xf32>
    %18 = vector.extract_strided_slice %15 {offsets = [0, 0], sizes = [16, 256], strides = [1, 1]} : vector<16x768xf32> to vector<16x256xf32>
    %19 = vector.extract_strided_slice %17 {offsets = [0, 0], sizes = [16, 256], strides = [1, 1]} : vector<16x768xf32> to vector<16x256xf32>
    %20 = arith.addf %18, %19 : vector<16x256xf32>
    %21 = arith.negf %20 : vector<16x256xf32>
    %22 = math.exp %21 : vector<16x256xf32>
    %cst_11 = arith.constant 1.000000e+00 : f32
    %23 = vector.broadcast %cst_11 : f32 to vector<16x256xf32>
    %24 = arith.addf %23, %22 : vector<16x256xf32>
    %25 = arith.divf %23, %24 : vector<16x256xf32>
    %26 = vector.extract_strided_slice %15 {offsets = [0, 256], sizes = [16, 256], strides = [1, 1]} : vector<16x768xf32> to vector<16x256xf32>
    %27 = vector.extract_strided_slice %17 {offsets = [0, 256], sizes = [16, 256], strides = [1, 1]} : vector<16x768xf32> to vector<16x256xf32>
    %28 = arith.addf %26, %27 : vector<16x256xf32>
    %29 = arith.negf %28 : vector<16x256xf32>
    %30 = math.exp %29 : vector<16x256xf32>
    %cst_12 = arith.constant 1.000000e+00 : f32
    %31 = vector.broadcast %cst_12 : f32 to vector<16x256xf32>
    %32 = arith.addf %31, %30 : vector<16x256xf32>
    %33 = arith.divf %31, %32 : vector<16x256xf32>
    %34 = vector.extract_strided_slice %15 {offsets = [0, 512], sizes = [16, 256], strides = [1, 1]} : vector<16x768xf32> to vector<16x256xf32>
    %35 = vector.extract_strided_slice %17 {offsets = [0, 512], sizes = [16, 256], strides = [1, 1]} : vector<16x768xf32> to vector<16x256xf32>
    %36 = arith.addf %35, %8 : vector<16x256xf32>
    %37 = arith.mulf %25, %36 : vector<16x256xf32>
    %38 = arith.addf %34, %37 : vector<16x256xf32>
    %39 = math.tanh %38 : vector<16x256xf32>
    %cst_13 = arith.constant 1.000000e+00 : f32
    %40 = vector.broadcast %cst_13 : f32 to vector<16x256xf32>
    %41 = arith.subf %40, %33 : vector<16x256xf32>
    %42 = arith.mulf %41, %39 : vector<16x256xf32>
    %43 = arith.mulf %33, %11 : vector<16x256xf32>
    %44 = arith.addf %42, %43 : vector<16x256xf32>
    %45 = arith.addi %10, %c0_i32_8 : i32
    %46 = vector.broadcast %45 : i32 to vector<16x256xi32>
    %47 = arith.cmpi slt, %46, %5 : vector<16x256xi32>
    %48 = arith.select %47, %44, %11 : vector<16x256xi1>, vector<16x256xf32>
    %c1_i32 = arith.constant 1 : i32
    %49 = arith.index_cast %c1_i32 : i32 to index
    %c0_14 = arith.constant 0 : index
    %c0_15 = arith.constant 0 : index
    %50 = vector.load %arg2[%49, %c0_14, %c0_15] : memref<8x16x768xbf16, #tpu.memory_space<vmem>>, vector<1x16x768xbf16>
    %51 = vector.shape_cast %50 : vector<1x16x768xbf16> to vector<16x768xbf16>
    %52 = arith.extf %51 : vector<16x768xbf16> to vector<16x768xf32>
    %53 = arith.truncf %48 : vector<16x256xf32> to vector<16x256xbf16>
    %cst_16 = arith.constant dense<0.000000e+00> : vector<16x768xf32>
    %54 = tpu.matmul %53, %9, %cst_16 {dimension_numbers = #tpu.dot_dimension_numbers<[1], [0], [0], [1], [0, 0, 1, 1], [], []>} : vector<16x256xbf16>, vector<256x768xbf16>, vector<16x768xf32> -> vector<16x768xf32>
    %55 = vector.extract_strided_slice %52 {offsets = [0, 0], sizes = [16, 256], strides = [1, 1]} : vector<16x768xf32> to vector<16x256xf32>
    %56 = vector.extract_strided_slice %54 {offsets = [0, 0], sizes = [16, 256], strides = [1, 1]} : vector<16x768xf32> to vector<16x256xf32>
    %57 = arith.addf %55, %56 : vector<16x256xf32>
    %58 = arith.negf %57 : vector<16x256xf32>
    %59 = math.exp %58 : vector<16x256xf32>
    %cst_17 = arith.constant 1.000000e+00 : f32
    %60 = vector.broadcast %cst_17 : f32 to vector<16x256xf32>
    %61 = arith.addf %60, %59 : vector<16x256xf32>
    %62 = arith.divf %60, %61 : vector<16x256xf32>
    %63 = vector.extract_strided_slice %52 {offsets = [0, 256], sizes = [16, 256], strides = [1, 1]} : vector<16x768xf32> to vector<16x256xf32>
    %64 = vector.extract_strided_slice %54 {offsets = [0, 256], sizes = [16, 256], strides = [1, 1]} : vector<16x768xf32> to vector<16x256xf32>
    %65 = arith.addf %63, %64 : vector<16x256xf32>
    %66 = arith.negf %65 : vector<16x256xf32>
    %67 = math.exp %66 : vector<16x256xf32>
    %cst_18 = arith.constant 1.000000e+00 : f32
    %68 = vector.broadcast %cst_18 : f32 to vector<16x256xf32>
    %69 = arith.addf %68, %67 : vector<16x256xf32>
    %70 = arith.divf %68, %69 : vector<16x256xf32>
    %71 = vector.extract_strided_slice %52 {offsets = [0, 512], sizes = [16, 256], strides = [1, 1]} : vector<16x768xf32> to vector<16x256xf32>
    %72 = vector.extract_strided_slice %54 {offsets = [0, 512], sizes = [16, 256], strides = [1, 1]} : vector<16x768xf32> to vector<16x256xf32>
    %73 = arith.addf %72, %8 : vector<16x256xf32>
    %74 = arith.mulf %62, %73 : vector<16x256xf32>
    %75 = arith.addf %71, %74 : vector<16x256xf32>
    %76 = math.tanh %75 : vector<16x256xf32>
    %cst_19 = arith.constant 1.000000e+00 : f32
    %77 = vector.broadcast %cst_19 : f32 to vector<16x256xf32>
    %78 = arith.subf %77, %70 : vector<16x256xf32>
    %79 = arith.mulf %78, %76 : vector<16x256xf32>
    %80 = arith.mulf %70, %48 : vector<16x256xf32>
    %81 = arith.addf %79, %80 : vector<16x256xf32>
    %82 = arith.addi %10, %c1_i32 : i32
    %83 = vector.broadcast %82 : i32 to vector<16x256xi32>
    %84 = arith.cmpi slt, %83, %5 : vector<16x256xi32>
    %85 = arith.select %84, %81, %48 : vector<16x256xi1>, vector<16x256xf32>
    %c2_i32 = arith.constant 2 : i32
    %86 = arith.index_cast %c2_i32 : i32 to index
    %c0_20 = arith.constant 0 : index
    %c0_21 = arith.constant 0 : index
    %87 = vector.load %arg2[%86, %c0_20, %c0_21] : memref<8x16x768xbf16, #tpu.memory_space<vmem>>, vector<1x16x768xbf16>
    %88 = vector.shape_cast %87 : vector<1x16x768xbf16> to vector<16x768xbf16>
    %89 = arith.extf %88 : vector<16x768xbf16> to vector<16x768xf32>
    %90 = arith.truncf %85 : vector<16x256xf32> to vector<16x256xbf16>
    %cst_22 = arith.constant dense<0.000000e+00> : vector<16x768xf32>
    %91 = tpu.matmul %90, %9, %cst_22 {dimension_numbers = #tpu.dot_dimension_numbers<[1], [0], [0], [1], [0, 0, 1, 1], [], []>} : vector<16x256xbf16>, vector<256x768xbf16>, vector<16x768xf32> -> vector<16x768xf32>
    %92 = vector.extract_strided_slice %89 {offsets = [0, 0], sizes = [16, 256], strides = [1, 1]} : vector<16x768xf32> to vector<16x256xf32>
    %93 = vector.extract_strided_slice %91 {offsets = [0, 0], sizes = [16, 256], strides = [1, 1]} : vector<16x768xf32> to vector<16x256xf32>
    %94 = arith.addf %92, %93 : vector<16x256xf32>
    %95 = arith.negf %94 : vector<16x256xf32>
    %96 = math.exp %95 : vector<16x256xf32>
    %cst_23 = arith.constant 1.000000e+00 : f32
    %97 = vector.broadcast %cst_23 : f32 to vector<16x256xf32>
    %98 = arith.addf %97, %96 : vector<16x256xf32>
    %99 = arith.divf %97, %98 : vector<16x256xf32>
    %100 = vector.extract_strided_slice %89 {offsets = [0, 256], sizes = [16, 256], strides = [1, 1]} : vector<16x768xf32> to vector<16x256xf32>
    %101 = vector.extract_strided_slice %91 {offsets = [0, 256], sizes = [16, 256], strides = [1, 1]} : vector<16x768xf32> to vector<16x256xf32>
    %102 = arith.addf %100, %101 : vector<16x256xf32>
    %103 = arith.negf %102 : vector<16x256xf32>
    %104 = math.exp %103 : vector<16x256xf32>
    %cst_24 = arith.constant 1.000000e+00 : f32
    %105 = vector.broadcast %cst_24 : f32 to vector<16x256xf32>
    %106 = arith.addf %105, %104 : vector<16x256xf32>
    %107 = arith.divf %105, %106 : vector<16x256xf32>
    %108 = vector.extract_strided_slice %89 {offsets = [0, 512], sizes = [16, 256], strides = [1, 1]} : vector<16x768xf32> to vector<16x256xf32>
    %109 = vector.extract_strided_slice %91 {offsets = [0, 512], sizes = [16, 256], strides = [1, 1]} : vector<16x768xf32> to vector<16x256xf32>
    %110 = arith.addf %109, %8 : vector<16x256xf32>
    %111 = arith.mulf %99, %110 : vector<16x256xf32>
    %112 = arith.addf %108, %111 : vector<16x256xf32>
    %113 = math.tanh %112 : vector<16x256xf32>
    %cst_25 = arith.constant 1.000000e+00 : f32
    %114 = vector.broadcast %cst_25 : f32 to vector<16x256xf32>
    %115 = arith.subf %114, %107 : vector<16x256xf32>
    %116 = arith.mulf %115, %113 : vector<16x256xf32>
    %117 = arith.mulf %107, %85 : vector<16x256xf32>
    %118 = arith.addf %116, %117 : vector<16x256xf32>
    %119 = arith.addi %10, %c2_i32 : i32
    %120 = vector.broadcast %119 : i32 to vector<16x256xi32>
    %121 = arith.cmpi slt, %120, %5 : vector<16x256xi32>
    %122 = arith.select %121, %118, %85 : vector<16x256xi1>, vector<16x256xf32>
    %c3_i32 = arith.constant 3 : i32
    %123 = arith.index_cast %c3_i32 : i32 to index
    %c0_26 = arith.constant 0 : index
    %c0_27 = arith.constant 0 : index
    %124 = vector.load %arg2[%123, %c0_26, %c0_27] : memref<8x16x768xbf16, #tpu.memory_space<vmem>>, vector<1x16x768xbf16>
    %125 = vector.shape_cast %124 : vector<1x16x768xbf16> to vector<16x768xbf16>
    %126 = arith.extf %125 : vector<16x768xbf16> to vector<16x768xf32>
    %127 = arith.truncf %122 : vector<16x256xf32> to vector<16x256xbf16>
    %cst_28 = arith.constant dense<0.000000e+00> : vector<16x768xf32>
    %128 = tpu.matmul %127, %9, %cst_28 {dimension_numbers = #tpu.dot_dimension_numbers<[1], [0], [0], [1], [0, 0, 1, 1], [], []>} : vector<16x256xbf16>, vector<256x768xbf16>, vector<16x768xf32> -> vector<16x768xf32>
    %129 = vector.extract_strided_slice %126 {offsets = [0, 0], sizes = [16, 256], strides = [1, 1]} : vector<16x768xf32> to vector<16x256xf32>
    %130 = vector.extract_strided_slice %128 {offsets = [0, 0], sizes = [16, 256], strides = [1, 1]} : vector<16x768xf32> to vector<16x256xf32>
    %131 = arith.addf %129, %130 : vector<16x256xf32>
    %132 = arith.negf %131 : vector<16x256xf32>
    %133 = math.exp %132 : vector<16x256xf32>
    %cst_29 = arith.constant 1.000000e+00 : f32
    %134 = vector.broadcast %cst_29 : f32 to vector<16x256xf32>
    %135 = arith.addf %134, %133 : vector<16x256xf32>
    %136 = arith.divf %134, %135 : vector<16x256xf32>
    %137 = vector.extract_strided_slice %126 {offsets = [0, 256], sizes = [16, 256], strides = [1, 1]} : vector<16x768xf32> to vector<16x256xf32>
    %138 = vector.extract_strided_slice %128 {offsets = [0, 256], sizes = [16, 256], strides = [1, 1]} : vector<16x768xf32> to vector<16x256xf32>
    %139 = arith.addf %137, %138 : vector<16x256xf32>
    %140 = arith.negf %139 : vector<16x256xf32>
    %141 = math.exp %140 : vector<16x256xf32>
    %cst_30 = arith.constant 1.000000e+00 : f32
    %142 = vector.broadcast %cst_30 : f32 to vector<16x256xf32>
    %143 = arith.addf %142, %141 : vector<16x256xf32>
    %144 = arith.divf %142, %143 : vector<16x256xf32>
    %145 = vector.extract_strided_slice %126 {offsets = [0, 512], sizes = [16, 256], strides = [1, 1]} : vector<16x768xf32> to vector<16x256xf32>
    %146 = vector.extract_strided_slice %128 {offsets = [0, 512], sizes = [16, 256], strides = [1, 1]} : vector<16x768xf32> to vector<16x256xf32>
    %147 = arith.addf %146, %8 : vector<16x256xf32>
    %148 = arith.mulf %136, %147 : vector<16x256xf32>
    %149 = arith.addf %145, %148 : vector<16x256xf32>
    %150 = math.tanh %149 : vector<16x256xf32>
    %cst_31 = arith.constant 1.000000e+00 : f32
    %151 = vector.broadcast %cst_31 : f32 to vector<16x256xf32>
    %152 = arith.subf %151, %144 : vector<16x256xf32>
    %153 = arith.mulf %152, %150 : vector<16x256xf32>
    %154 = arith.mulf %144, %122 : vector<16x256xf32>
    %155 = arith.addf %153, %154 : vector<16x256xf32>
    %156 = arith.addi %10, %c3_i32 : i32
    %157 = vector.broadcast %156 : i32 to vector<16x256xi32>
    %158 = arith.cmpi slt, %157, %5 : vector<16x256xi32>
    %159 = arith.select %158, %155, %122 : vector<16x256xi1>, vector<16x256xf32>
    %c4_i32 = arith.constant 4 : i32
    %160 = arith.index_cast %c4_i32 : i32 to index
    %c0_32 = arith.constant 0 : index
    %c0_33 = arith.constant 0 : index
    %161 = vector.load %arg2[%160, %c0_32, %c0_33] : memref<8x16x768xbf16, #tpu.memory_space<vmem>>, vector<1x16x768xbf16>
    %162 = vector.shape_cast %161 : vector<1x16x768xbf16> to vector<16x768xbf16>
    %163 = arith.extf %162 : vector<16x768xbf16> to vector<16x768xf32>
    %164 = arith.truncf %159 : vector<16x256xf32> to vector<16x256xbf16>
    %cst_34 = arith.constant dense<0.000000e+00> : vector<16x768xf32>
    %165 = tpu.matmul %164, %9, %cst_34 {dimension_numbers = #tpu.dot_dimension_numbers<[1], [0], [0], [1], [0, 0, 1, 1], [], []>} : vector<16x256xbf16>, vector<256x768xbf16>, vector<16x768xf32> -> vector<16x768xf32>
    %166 = vector.extract_strided_slice %163 {offsets = [0, 0], sizes = [16, 256], strides = [1, 1]} : vector<16x768xf32> to vector<16x256xf32>
    %167 = vector.extract_strided_slice %165 {offsets = [0, 0], sizes = [16, 256], strides = [1, 1]} : vector<16x768xf32> to vector<16x256xf32>
    %168 = arith.addf %166, %167 : vector<16x256xf32>
    %169 = arith.negf %168 : vector<16x256xf32>
    %170 = math.exp %169 : vector<16x256xf32>
    %cst_35 = arith.constant 1.000000e+00 : f32
    %171 = vector.broadcast %cst_35 : f32 to vector<16x256xf32>
    %172 = arith.addf %171, %170 : vector<16x256xf32>
    %173 = arith.divf %171, %172 : vector<16x256xf32>
    %174 = vector.extract_strided_slice %163 {offsets = [0, 256], sizes = [16, 256], strides = [1, 1]} : vector<16x768xf32> to vector<16x256xf32>
    %175 = vector.extract_strided_slice %165 {offsets = [0, 256], sizes = [16, 256], strides = [1, 1]} : vector<16x768xf32> to vector<16x256xf32>
    %176 = arith.addf %174, %175 : vector<16x256xf32>
    %177 = arith.negf %176 : vector<16x256xf32>
    %178 = math.exp %177 : vector<16x256xf32>
    %cst_36 = arith.constant 1.000000e+00 : f32
    %179 = vector.broadcast %cst_36 : f32 to vector<16x256xf32>
    %180 = arith.addf %179, %178 : vector<16x256xf32>
    %181 = arith.divf %179, %180 : vector<16x256xf32>
    %182 = vector.extract_strided_slice %163 {offsets = [0, 512], sizes = [16, 256], strides = [1, 1]} : vector<16x768xf32> to vector<16x256xf32>
    %183 = vector.extract_strided_slice %165 {offsets = [0, 512], sizes = [16, 256], strides = [1, 1]} : vector<16x768xf32> to vector<16x256xf32>
    %184 = arith.addf %183, %8 : vector<16x256xf32>
    %185 = arith.mulf %173, %184 : vector<16x256xf32>
    %186 = arith.addf %182, %185 : vector<16x256xf32>
    %187 = math.tanh %186 : vector<16x256xf32>
    %cst_37 = arith.constant 1.000000e+00 : f32
    %188 = vector.broadcast %cst_37 : f32 to vector<16x256xf32>
    %189 = arith.subf %188, %181 : vector<16x256xf32>
    %190 = arith.mulf %189, %187 : vector<16x256xf32>
    %191 = arith.mulf %181, %159 : vector<16x256xf32>
    %192 = arith.addf %190, %191 : vector<16x256xf32>
    %193 = arith.addi %10, %c4_i32 : i32
    %194 = vector.broadcast %193 : i32 to vector<16x256xi32>
    %195 = arith.cmpi slt, %194, %5 : vector<16x256xi32>
    %196 = arith.select %195, %192, %159 : vector<16x256xi1>, vector<16x256xf32>
    %c5_i32 = arith.constant 5 : i32
    %197 = arith.index_cast %c5_i32 : i32 to index
    %c0_38 = arith.constant 0 : index
    %c0_39 = arith.constant 0 : index
    %198 = vector.load %arg2[%197, %c0_38, %c0_39] : memref<8x16x768xbf16, #tpu.memory_space<vmem>>, vector<1x16x768xbf16>
    %199 = vector.shape_cast %198 : vector<1x16x768xbf16> to vector<16x768xbf16>
    %200 = arith.extf %199 : vector<16x768xbf16> to vector<16x768xf32>
    %201 = arith.truncf %196 : vector<16x256xf32> to vector<16x256xbf16>
    %cst_40 = arith.constant dense<0.000000e+00> : vector<16x768xf32>
    %202 = tpu.matmul %201, %9, %cst_40 {dimension_numbers = #tpu.dot_dimension_numbers<[1], [0], [0], [1], [0, 0, 1, 1], [], []>} : vector<16x256xbf16>, vector<256x768xbf16>, vector<16x768xf32> -> vector<16x768xf32>
    %203 = vector.extract_strided_slice %200 {offsets = [0, 0], sizes = [16, 256], strides = [1, 1]} : vector<16x768xf32> to vector<16x256xf32>
    %204 = vector.extract_strided_slice %202 {offsets = [0, 0], sizes = [16, 256], strides = [1, 1]} : vector<16x768xf32> to vector<16x256xf32>
    %205 = arith.addf %203, %204 : vector<16x256xf32>
    %206 = arith.negf %205 : vector<16x256xf32>
    %207 = math.exp %206 : vector<16x256xf32>
    %cst_41 = arith.constant 1.000000e+00 : f32
    %208 = vector.broadcast %cst_41 : f32 to vector<16x256xf32>
    %209 = arith.addf %208, %207 : vector<16x256xf32>
    %210 = arith.divf %208, %209 : vector<16x256xf32>
    %211 = vector.extract_strided_slice %200 {offsets = [0, 256], sizes = [16, 256], strides = [1, 1]} : vector<16x768xf32> to vector<16x256xf32>
    %212 = vector.extract_strided_slice %202 {offsets = [0, 256], sizes = [16, 256], strides = [1, 1]} : vector<16x768xf32> to vector<16x256xf32>
    %213 = arith.addf %211, %212 : vector<16x256xf32>
    %214 = arith.negf %213 : vector<16x256xf32>
    %215 = math.exp %214 : vector<16x256xf32>
    %cst_42 = arith.constant 1.000000e+00 : f32
    %216 = vector.broadcast %cst_42 : f32 to vector<16x256xf32>
    %217 = arith.addf %216, %215 : vector<16x256xf32>
    %218 = arith.divf %216, %217 : vector<16x256xf32>
    %219 = vector.extract_strided_slice %200 {offsets = [0, 512], sizes = [16, 256], strides = [1, 1]} : vector<16x768xf32> to vector<16x256xf32>
    %220 = vector.extract_strided_slice %202 {offsets = [0, 512], sizes = [16, 256], strides = [1, 1]} : vector<16x768xf32> to vector<16x256xf32>
    %221 = arith.addf %220, %8 : vector<16x256xf32>
    %222 = arith.mulf %210, %221 : vector<16x256xf32>
    %223 = arith.addf %219, %222 : vector<16x256xf32>
    %224 = math.tanh %223 : vector<16x256xf32>
    %cst_43 = arith.constant 1.000000e+00 : f32
    %225 = vector.broadcast %cst_43 : f32 to vector<16x256xf32>
    %226 = arith.subf %225, %218 : vector<16x256xf32>
    %227 = arith.mulf %226, %224 : vector<16x256xf32>
    %228 = arith.mulf %218, %196 : vector<16x256xf32>
    %229 = arith.addf %227, %228 : vector<16x256xf32>
    %230 = arith.addi %10, %c5_i32 : i32
    %231 = vector.broadcast %230 : i32 to vector<16x256xi32>
    %232 = arith.cmpi slt, %231, %5 : vector<16x256xi32>
    %233 = arith.select %232, %229, %196 : vector<16x256xi1>, vector<16x256xf32>
    %c6_i32 = arith.constant 6 : i32
    %234 = arith.index_cast %c6_i32 : i32 to index
    %c0_44 = arith.constant 0 : index
    %c0_45 = arith.constant 0 : index
    %235 = vector.load %arg2[%234, %c0_44, %c0_45] : memref<8x16x768xbf16, #tpu.memory_space<vmem>>, vector<1x16x768xbf16>
    %236 = vector.shape_cast %235 : vector<1x16x768xbf16> to vector<16x768xbf16>
    %237 = arith.extf %236 : vector<16x768xbf16> to vector<16x768xf32>
    %238 = arith.truncf %233 : vector<16x256xf32> to vector<16x256xbf16>
    %cst_46 = arith.constant dense<0.000000e+00> : vector<16x768xf32>
    %239 = tpu.matmul %238, %9, %cst_46 {dimension_numbers = #tpu.dot_dimension_numbers<[1], [0], [0], [1], [0, 0, 1, 1], [], []>} : vector<16x256xbf16>, vector<256x768xbf16>, vector<16x768xf32> -> vector<16x768xf32>
    %240 = vector.extract_strided_slice %237 {offsets = [0, 0], sizes = [16, 256], strides = [1, 1]} : vector<16x768xf32> to vector<16x256xf32>
    %241 = vector.extract_strided_slice %239 {offsets = [0, 0], sizes = [16, 256], strides = [1, 1]} : vector<16x768xf32> to vector<16x256xf32>
    %242 = arith.addf %240, %241 : vector<16x256xf32>
    %243 = arith.negf %242 : vector<16x256xf32>
    %244 = math.exp %243 : vector<16x256xf32>
    %cst_47 = arith.constant 1.000000e+00 : f32
    %245 = vector.broadcast %cst_47 : f32 to vector<16x256xf32>
    %246 = arith.addf %245, %244 : vector<16x256xf32>
    %247 = arith.divf %245, %246 : vector<16x256xf32>
    %248 = vector.extract_strided_slice %237 {offsets = [0, 256], sizes = [16, 256], strides = [1, 1]} : vector<16x768xf32> to vector<16x256xf32>
    %249 = vector.extract_strided_slice %239 {offsets = [0, 256], sizes = [16, 256], strides = [1, 1]} : vector<16x768xf32> to vector<16x256xf32>
    %250 = arith.addf %248, %249 : vector<16x256xf32>
    %251 = arith.negf %250 : vector<16x256xf32>
    %252 = math.exp %251 : vector<16x256xf32>
    %cst_48 = arith.constant 1.000000e+00 : f32
    %253 = vector.broadcast %cst_48 : f32 to vector<16x256xf32>
    %254 = arith.addf %253, %252 : vector<16x256xf32>
    %255 = arith.divf %253, %254 : vector<16x256xf32>
    %256 = vector.extract_strided_slice %237 {offsets = [0, 512], sizes = [16, 256], strides = [1, 1]} : vector<16x768xf32> to vector<16x256xf32>
    %257 = vector.extract_strided_slice %239 {offsets = [0, 512], sizes = [16, 256], strides = [1, 1]} : vector<16x768xf32> to vector<16x256xf32>
    %258 = arith.addf %257, %8 : vector<16x256xf32>
    %259 = arith.mulf %247, %258 : vector<16x256xf32>
    %260 = arith.addf %256, %259 : vector<16x256xf32>
    %261 = math.tanh %260 : vector<16x256xf32>
    %cst_49 = arith.constant 1.000000e+00 : f32
    %262 = vector.broadcast %cst_49 : f32 to vector<16x256xf32>
    %263 = arith.subf %262, %255 : vector<16x256xf32>
    %264 = arith.mulf %263, %261 : vector<16x256xf32>
    %265 = arith.mulf %255, %233 : vector<16x256xf32>
    %266 = arith.addf %264, %265 : vector<16x256xf32>
    %267 = arith.addi %10, %c6_i32 : i32
    %268 = vector.broadcast %267 : i32 to vector<16x256xi32>
    %269 = arith.cmpi slt, %268, %5 : vector<16x256xi32>
    %270 = arith.select %269, %266, %233 : vector<16x256xi1>, vector<16x256xf32>
    %c7_i32 = arith.constant 7 : i32
    %271 = arith.index_cast %c7_i32 : i32 to index
    %c0_50 = arith.constant 0 : index
    %c0_51 = arith.constant 0 : index
    %272 = vector.load %arg2[%271, %c0_50, %c0_51] : memref<8x16x768xbf16, #tpu.memory_space<vmem>>, vector<1x16x768xbf16>
    %273 = vector.shape_cast %272 : vector<1x16x768xbf16> to vector<16x768xbf16>
    %274 = arith.extf %273 : vector<16x768xbf16> to vector<16x768xf32>
    %275 = arith.truncf %270 : vector<16x256xf32> to vector<16x256xbf16>
    %cst_52 = arith.constant dense<0.000000e+00> : vector<16x768xf32>
    %276 = tpu.matmul %275, %9, %cst_52 {dimension_numbers = #tpu.dot_dimension_numbers<[1], [0], [0], [1], [0, 0, 1, 1], [], []>} : vector<16x256xbf16>, vector<256x768xbf16>, vector<16x768xf32> -> vector<16x768xf32>
    %277 = vector.extract_strided_slice %274 {offsets = [0, 0], sizes = [16, 256], strides = [1, 1]} : vector<16x768xf32> to vector<16x256xf32>
    %278 = vector.extract_strided_slice %276 {offsets = [0, 0], sizes = [16, 256], strides = [1, 1]} : vector<16x768xf32> to vector<16x256xf32>
    %279 = arith.addf %277, %278 : vector<16x256xf32>
    %280 = arith.negf %279 : vector<16x256xf32>
    %281 = math.exp %280 : vector<16x256xf32>
    %cst_53 = arith.constant 1.000000e+00 : f32
    %282 = vector.broadcast %cst_53 : f32 to vector<16x256xf32>
    %283 = arith.addf %282, %281 : vector<16x256xf32>
    %284 = arith.divf %282, %283 : vector<16x256xf32>
    %285 = vector.extract_strided_slice %274 {offsets = [0, 256], sizes = [16, 256], strides = [1, 1]} : vector<16x768xf32> to vector<16x256xf32>
    %286 = vector.extract_strided_slice %276 {offsets = [0, 256], sizes = [16, 256], strides = [1, 1]} : vector<16x768xf32> to vector<16x256xf32>
    %287 = arith.addf %285, %286 : vector<16x256xf32>
    %288 = arith.negf %287 : vector<16x256xf32>
    %289 = math.exp %288 : vector<16x256xf32>
    %cst_54 = arith.constant 1.000000e+00 : f32
    %290 = vector.broadcast %cst_54 : f32 to vector<16x256xf32>
    %291 = arith.addf %290, %289 : vector<16x256xf32>
    %292 = arith.divf %290, %291 : vector<16x256xf32>
    %293 = vector.extract_strided_slice %274 {offsets = [0, 512], sizes = [16, 256], strides = [1, 1]} : vector<16x768xf32> to vector<16x256xf32>
    %294 = vector.extract_strided_slice %276 {offsets = [0, 512], sizes = [16, 256], strides = [1, 1]} : vector<16x768xf32> to vector<16x256xf32>
    %295 = arith.addf %294, %8 : vector<16x256xf32>
    %296 = arith.mulf %284, %295 : vector<16x256xf32>
    %297 = arith.addf %293, %296 : vector<16x256xf32>
    %298 = math.tanh %297 : vector<16x256xf32>
    %cst_55 = arith.constant 1.000000e+00 : f32
    %299 = vector.broadcast %cst_55 : f32 to vector<16x256xf32>
    %300 = arith.subf %299, %292 : vector<16x256xf32>
    %301 = arith.mulf %300, %298 : vector<16x256xf32>
    %302 = arith.mulf %292, %270 : vector<16x256xf32>
    %303 = arith.addf %301, %302 : vector<16x256xf32>
    %304 = arith.addi %10, %c7_i32 : i32
    %305 = vector.broadcast %304 : i32 to vector<16x256xi32>
    %306 = arith.cmpi slt, %305, %5 : vector<16x256xi32>
    %307 = arith.select %306, %303, %270 : vector<16x256xi1>, vector<16x256xf32>
    %c8_i32_56 = arith.constant 8 : i32
    %c0_57 = arith.constant 0 : index
    %c0_58 = arith.constant 0 : index
    %308 = vector.load %arg11[%c0_57, %c0_58] : memref<16x256xf32, #tpu.memory_space<vmem>>, vector<16x256xf32>
    tpu.vector_store %arg11[%c0_57, %c0_58], %307 {strides = array<i32>} : memref<16x256xf32, #tpu.memory_space<vmem>>, vector<16x256xf32>,
    %c1_i32_59 = arith.constant 1 : i32
    %309 = arith.cmpi eq, %arg1, %c1_i32_59 : i32
    %310 = arith.extui %309 : i1 to i32
    %c0_i32_60 = arith.constant 0 : i32
    %311 = arith.cmpi ne, %310, %c0_i32_60 : i32
    scf.if %311 {
      %cst_61 = arith.constant 0.000000e+00 : f32
      %312 = vector.broadcast %cst_61 : f32 to vector<16x256xf32>
      %313 = arith.maximumf %307, %312 : vector<16x256xf32>
      %c0_62 = arith.constant 0 : index
      %c0_63 = arith.constant 0 : index
      %314 = vector.load %arg6[%c0_62, %c0_63] : memref<256x128xf32, #tpu.memory_space<vmem>>, vector<256x128xf32>
      %cst_64 = arith.constant dense<0.000000e+00> : vector<16x128xf32>
      %315 = tpu.matmul %313, %314, %cst_64 {dimension_numbers = #tpu.dot_dimension_numbers<[1], [0], [0], [1], [0, 0, 1, 1], [], []>} : vector<16x256xf32>, vector<256x128xf32>, vector<16x128xf32> -> vector<16x128xf32>
      %c0_65 = arith.constant 0 : index
      %c0_66 = arith.constant 0 : index
      %316 = vector.load %arg7[%c0_65, %c0_66] : memref<1x128xf32, #tpu.memory_space<vmem>>, vector<1x128xf32>
      %317 = vector.broadcast %316 : vector<1x128xf32> to vector<16x128xf32>
      %318 = arith.addf %315, %317 : vector<16x128xf32>
      %c0_67 = arith.constant 0 : index
      %c0_68 = arith.constant 0 : index
      %319 = vector.load %arg8[%c0_67, %c0_68] : memref<128x128xf32, #tpu.memory_space<vmem>>, vector<128x128xf32>
      %cst_69 = arith.constant dense<0.000000e+00> : vector<16x128xf32>
      %320 = tpu.matmul %318, %319, %cst_69 {dimension_numbers = #tpu.dot_dimension_numbers<[1], [0], [0], [1], [0, 0, 1, 1], [], []>} : vector<16x128xf32>, vector<128x128xf32>, vector<16x128xf32> -> vector<16x128xf32>
      %c0_70 = arith.constant 0 : index
      %c0_71 = arith.constant 0 : index
      %321 = vector.load %arg9[%c0_70, %c0_71] : memref<1x128xf32, #tpu.memory_space<vmem>>, vector<1x128xf32>
      %322 = vector.broadcast %321 : vector<1x128xf32> to vector<16x128xf32>
      %323 = arith.addf %320, %322 : vector<16x128xf32>
      %c0_72 = arith.constant 0 : index
      %c0_73 = arith.constant 0 : index
      %324 = vector.load %arg10[%c0_72, %c0_73] : memref<16x128xf32, #tpu.memory_space<vmem>>, vector<16x128xf32>
      tpu.vector_store %arg10[%c0_72, %c0_73], %323 {strides = array<i32>} : memref<16x128xf32, #tpu.memory_space<vmem>>, vector<16x128xf32>,
    } else {
    }
    return
  }
  func.func @transform_0(%arg0: i32, %arg1: i32) -> (i32, i32, i32) {
    %c0_i32 = arith.constant 0 : i32
    %c0_i32_0 = arith.constant 0 : i32
    return %arg1, %arg0, %c0_i32 : i32, i32, i32
  }
  func.func @transform_1(%arg0: i32, %arg1: i32) -> (i32, i32) {
    %c0_i32 = arith.constant 0 : i32
    %c0_i32_0 = arith.constant 0 : i32
    return %arg0, %c0_i32 : i32, i32
  }
  func.func @transform_2(%arg0: i32, %arg1: i32) -> (i32, i32) {
    %c0_i32 = arith.constant 0 : i32
    %c0_i32_0 = arith.constant 0 : i32
    %c0_i32_1 = arith.constant 0 : i32
    return %c0_i32, %c0_i32_0 : i32, i32
  }
  func.func @transform_3(%arg0: i32, %arg1: i32) -> (i32, i32) {
    %c0_i32 = arith.constant 0 : i32
    %c0_i32_0 = arith.constant 0 : i32
    %c0_i32_1 = arith.constant 0 : i32
    return %c0_i32, %c0_i32_0 : i32, i32
  }
  func.func @transform_4(%arg0: i32, %arg1: i32) -> (i32, i32) {
    %c0_i32 = arith.constant 0 : i32
    %c0_i32_0 = arith.constant 0 : i32
    %c0_i32_1 = arith.constant 0 : i32
    return %c0_i32, %c0_i32_0 : i32, i32
  }
  func.func @transform_5(%arg0: i32, %arg1: i32) -> (i32, i32) {
    %c0_i32 = arith.constant 0 : i32
    %c0_i32_0 = arith.constant 0 : i32
    %c0_i32_1 = arith.constant 0 : i32
    return %c0_i32, %c0_i32_0 : i32, i32
  }
  func.func @transform_6(%arg0: i32, %arg1: i32) -> (i32, i32) {
    %c0_i32 = arith.constant 0 : i32
    %c0_i32_0 = arith.constant 0 : i32
    %c0_i32_1 = arith.constant 0 : i32
    return %c0_i32, %c0_i32_0 : i32, i32
  }
  func.func @transform_7(%arg0: i32, %arg1: i32) -> (i32, i32) {
    %c0_i32 = arith.constant 0 : i32
    %c0_i32_0 = arith.constant 0 : i32
    %c0_i32_1 = arith.constant 0 : i32
    return %c0_i32, %c0_i32_0 : i32, i32
  }
  func.func @transform_8(%arg0: i32, %arg1: i32) -> (i32, i32) {
    %c0_i32 = arith.constant 0 : i32
    %c0_i32_0 = arith.constant 0 : i32
    return %arg0, %c0_i32 : i32, i32
  }
}

</mosaic_0001>

<llo_original>
// kernel: sat1_gru_forward.1
$region0: #{sat1_gru_forward.1}
  #allocation0 [shape = 'u32[]', space=smem, size = 0x4, offset = 0x4, fixed_abs, tag = 'smem constant byte address 0x4 - core index']
  #allocation1 [shape = 'u32[144,128]{1,0:T(1,128)}', space=vmem, size = 0x12000, scoped, tag = 'internal scratch']
  #allocation2 [shape = 'f32[16,256]{1,0:T(8,128)}', space=vmem, size = 0x4000, scoped, tag = 'scratch operand']
  %s0 = inlined_call_operand.vmem [shape: bf16[16,16,768], index: 0, kind: input, shape index: {}]
  %s1 = inlined_call_operand.vmem [shape: s32[16,1], index: 1, kind: input, shape index: {}]
  %s2 = inlined_call_operand.vmem [shape: bf16[256,768], index: 2, kind: input, shape index: {}]
  %s3 = inlined_call_operand.vmem [shape: f32[1,256], index: 3, kind: input, shape index: {}]
  %s4 = inlined_call_operand.vmem [shape: f32[256,128], index: 4, kind: input, shape index: {}]
  %s5 = inlined_call_operand.vmem [shape: f32[1,128], index: 5, kind: input, shape index: {}]
  %s6 = inlined_call_operand.vmem [shape: f32[128,128], index: 6, kind: input, shape index: {}]
  %s7 = inlined_call_operand.vmem [shape: f32[1,128], index: 7, kind: input, shape index: {}]
  %s8 = inlined_call_operand.vmem [shape: f32[16,128], index: 8, kind: output, shape index: {}]
  %s9 = sld [smem:[#allocation0]]
  $region73: #{sat1_gru_forward.1} parent=0
    _
  %s11 = ssub.s32 1, %s9
  %s12 = scalar_select 0, %s11, %s9
  loop: start=0, step=1, limit=4
  $region2: #{sat1_gru_forward.1} parent=0 // loop_pre_header
    _
  $region3: #{sat1_gru_forward.1} parent=0 // loop_header
    %s14 = sphi 0, %s18
    %p15 = scmp.ge.s32.totalorder %s14, 4
    %s21 = sphi 0, %s33
    %s22 = sphi 0, %s29
    %s23 = sphi 0, %s21
    %s24 = sphi 0, %s22
    %s25 = sphi 0, %s23
    %s26 = sphi 0, %s24
    %s38 = sphi 0, %s40
    %s41 = sphi 0, %s38
    %s42 = sphi 0, %s41
    %s58 = sphi 0, %s42
    %s64 = sphi 0, %s66
    %s67 = sphi 0, %s64
    %s68 = sphi 0, %s67
    %s84 = sphi 0, %s68
    %s88 = sphi 0, %s88
    %s90 = sphi 0, %s88
    %s91 = sphi 0, %s90
    %s105 = sphi 0, %s91
    %s109 = sphi 0, %s109
    %s111 = sphi 0, %s109
    %s112 = sphi 0, %s111
    %s126 = sphi 0, %s112
    %s130 = sphi 0, %s130
    %s132 = sphi 0, %s130
    %s133 = sphi 0, %s132
    %s147 = sphi 0, %s133
    %s151 = sphi 0, %s151
    %s153 = sphi 0, %s151
    %s154 = sphi 0, %s153
    %s168 = sphi 0, %s154
    %s172 = sphi 0, %s172
    %s174 = sphi 0, %s172
    %s175 = sphi 0, %s174
    %s189 = sphi 0, %s175
    %s193 = sphi 0, %s193
    %s195 = sphi 0, %s193
    %s196 = sphi 0, %s195
    %s210 = sphi 0, %s196
    %s216 = sphi 0, %s218
    %s219 = sphi 0, %s216
    %s220 = sphi 0, %s219
    %s236 = sphi 0, %s220
  $region4: #{sat1_gru_forward.1} parent=0 // loop_header_branch
    %17 = sbr.rel (%p15) target = $region8
  $region5: #{sat1_gru_forward.1} parent=0 // loop_body
    %s19 = ssub.s32 %s14, 1
    %s20 = ssub.s32 %s14, 2
    %s27 = sadd.s32 1, %s22
    %p28 = scmp.ge.s32.totalorder %s27, 2
    %s29 = scalar_select %p28, 0, %s27
    %s30 = sadd.s32 1, %s21
    %s31 = scalar_select %p28, %s30, %s21
    %p32 = scmp.ge.s32.totalorder %s31, 1
    %s33 = scalar_select %p32, 0, %s31
    %s34 = ssub.s32 %s22, %s29
    %s35 = ssub.s32 %s21, %s33
    %s36 = sor.u32 %s34, %s35
    %p37 = scmp.eq.s32.totalorder %s36, 0
    %s39 = sadd.s32 %s38, 1
    %s40 = scalar_select %p37, %s38, %s39
    %p43 = pneg %p37
    %p44 = scmp.eq.s32.totalorder %s14, 1
    %p45 = por %p43, %p44
    %p46 = scmp.ne.s32.totalorder %s38, %s41
    %p47 = scmp.eq.s32.totalorder %s14, 0
    %p48 = por %p46, %p47
    %p49 = scmp.ne.s32.totalorder %s38, %s41
    %p50 = scmp.eq.s32.totalorder %s19, 1
    %p51 = por %p49, %p50
    %p52 = scmp.ne.s32.totalorder %s41, %s42
    %p53 = scmp.eq.s32.totalorder %s19, 0
    %p54 = por %p52, %p53
    %p55 = scmp.ne.s32.totalorder %s41, %s42
    %p56 = scmp.eq.s32.totalorder %s20, 1
    %p57 = por %p55, %p56
    %p59 = scmp.ne.s32.totalorder %s42, %s58
    %p60 = scmp.eq.s32.totalorder %s20, 0
    %p61 = por %p59, %p60
    %s62 = ssub.s32 %s21, %s33
    %p63 = scmp.eq.s32.totalorder %s62, 0
    %s65 = sadd.s32 %s64, 1
    %s66 = scalar_select %p63, %s64, %s65
    %p69 = pneg %p63
    %p70 = scmp.eq.s32.totalorder %s14, 1
    %p71 = por %p69, %p70
    %p72 = scmp.ne.s32.totalorder %s64, %s67
    %p73 = scmp.eq.s32.totalorder %s14, 0
    %p74 = por %p72, %p73
    %p75 = scmp.ne.s32.totalorder %s64, %s67
    %p76 = scmp.eq.s32.totalorder %s19, 1
    %p77 = por %p75, %p76
    %p78 = scmp.ne.s32.totalorder %s67, %s68
    %p79 = scmp.eq.s32.totalorder %s19, 0
    %p80 = por %p78, %p79
    %p81 = scmp.ne.s32.totalorder %s67, %s68
    %p82 = scmp.eq.s32.totalorder %s20, 1
    %p83 = por %p81, %p82
    %p85 = scmp.ne.s32.totalorder %s68, %s84
    %p86 = scmp.eq.s32.totalorder %s20, 0
    %p87 = por %p85, %p86
    %s89 = sadd.s32 %s88, 1
    %p92 = scmp.eq.s32.totalorder %s14, 1
    %p93 = scmp.ne.s32.totalorder %s88, %s90
    %p94 = scmp.eq.s32.totalorder %s14, 0
    %p95 = por %p93, %p94
    %p96 = scmp.ne.s32.totalorder %s88, %s90
    %p97 = scmp.eq.s32.totalorder %s19, 1
    %p98 = por %p96, %p97
    %p99 = scmp.ne.s32.totalorder %s90, %s91
    %p100 = scmp.eq.s32.totalorder %s19, 0
    %p101 = por %p99, %p100
    %p102 = scmp.ne.s32.totalorder %s90, %s91
    %p103 = scmp.eq.s32.totalorder %s20, 1
    %p104 = por %p102, %p103
    %p106 = scmp.ne.s32.totalorder %s91, %s105
    %p107 = scmp.eq.s32.totalorder %s20, 0
    %p108 = por %p106, %p107
    %s110 = sadd.s32 %s109, 1
    %p113 = scmp.eq.s32.totalorder %s14, 1
    %p114 = scmp.ne.s32.totalorder %s109, %s111
    %p115 = scmp.eq.s32.totalorder %s14, 0
    %p116 = por %p114, %p115
    %p117 = scmp.ne.s32.totalorder %s109, %s111
    %p118 = scmp.eq.s32.totalorder %s19, 1
    %p119 = por %p117, %p118
    %p120 = scmp.ne.s32.totalorder %s111, %s112
    %p121 = scmp.eq.s32.totalorder %s19, 0
    %p122 = por %p120, %p121
    %p123 = scmp.ne.s32.totalorder %s111, %s112
    %p124 = scmp.eq.s32.totalorder %s20, 1
    %p125 = por %p123, %p124
    %p127 = scmp.ne.s32.totalorder %s112, %s126
    %p128 = scmp.eq.s32.totalorder %s20, 0
    %p129 = por %p127, %p128
    %s131 = sadd.s32 %s130, 1
    %p134 = scmp.eq.s32.totalorder %s14, 1
    %p135 = scmp.ne.s32.totalorder %s130, %s132
    %p136 = scmp.eq.s32.totalorder %s14, 0
    %p137 = por %p135, %p136
    %p138 = scmp.ne.s32.totalorder %s130, %s132
    %p139 = scmp.eq.s32.totalorder %s19, 1
    %p140 = por %p138, %p139
    %p141 = scmp.ne.s32.totalorder %s132, %s133
    %p142 = scmp.eq.s32.totalorder %s19, 0
    %p143 = por %p141, %p142
    %p144 = scmp.ne.s32.totalorder %s132, %s133
    %p145 = scmp.eq.s32.totalorder %s20, 1
    %p146 = por %p144, %p145
    %p148 = scmp.ne.s32.totalorder %s133, %s147
    %p149 = scmp.eq.s32.totalorder %s20, 0
    %p150 = por %p148, %p149
    %s152 = sadd.s32 %s151, 1
    %p155 = scmp.eq.s32.totalorder %s14, 1
    %p156 = scmp.ne.s32.totalorder %s151, %s153
    %p157 = scmp.eq.s32.totalorder %s14, 0
    %p158 = por %p156, %p157
    %p159 = scmp.ne.s32.totalorder %s151, %s153
    %p160 = scmp.eq.s32.totalorder %s19, 1
    %p161 = por %p159, %p160
    %p162 = scmp.ne.s32.totalorder %s153, %s154
    %p163 = scmp.eq.s32.totalorder %s19, 0
    %p164 = por %p162, %p163
    %p165 = scmp.ne.s32.totalorder %s153, %s154
    %p166 = scmp.eq.s32.totalorder %s20, 1
    %p167 = por %p165, %p166
    %p169 = scmp.ne.s32.totalorder %s154, %s168
    %p170 = scmp.eq.s32.totalorder %s20, 0
    %p171 = por %p169, %p170
    %s173 = sadd.s32 %s172, 1
    %p176 = scmp.eq.s32.totalorder %s14, 1
    %p177 = scmp.ne.s32.totalorder %s172, %s174
    %p178 = scmp.eq.s32.totalorder %s14, 0
    %p179 = por %p177, %p178
    %p180 = scmp.ne.s32.totalorder %s172, %s174
    %p181 = scmp.eq.s32.totalorder %s19, 1
    %p182 = por %p180, %p181
    %p183 = scmp.ne.s32.totalorder %s174, %s175
    %p184 = scmp.eq.s32.totalorder %s19, 0
    %p185 = por %p183, %p184
    %p186 = scmp.ne.s32.totalorder %s174, %s175
    %p187 = scmp.eq.s32.totalorder %s20, 1
    %p188 = por %p186, %p187
    %p190 = scmp.ne.s32.totalorder %s175, %s189
    %p191 = scmp.eq.s32.totalorder %s20, 0
    %p192 = por %p190, %p191
    %s194 = sadd.s32 %s193, 1
    %p197 = scmp.eq.s32.totalorder %s14, 1
    %p198 = scmp.ne.s32.totalorder %s193, %s195
    %p199 = scmp.eq.s32.totalorder %s14, 0
    %p200 = por %p198, %p199
    %p201 = scmp.ne.s32.totalorder %s193, %s195
    %p202 = scmp.eq.s32.totalorder %s19, 1
    %p203 = por %p201, %p202
    %p204 = scmp.ne.s32.totalorder %s195, %s196
    %p205 = scmp.eq.s32.totalorder %s19, 0
    %p206 = por %p204, %p205
    %p207 = scmp.ne.s32.totalorder %s195, %s196
    %p208 = scmp.eq.s32.totalorder %s20, 1
    %p209 = por %p207, %p208
    %p211 = scmp.ne.s32.totalorder %s196, %s210
    %p212 = scmp.eq.s32.totalorder %s20, 0
    %p213 = por %p211, %p212
    %s214 = ssub.s32 %s21, %s33
    %p215 = scmp.eq.s32.totalorder %s214, 0
    %s217 = sadd.s32 %s216, 1
    %s218 = scalar_select %p215, %s216, %s217
    %p221 = pneg %p215
    %p222 = scmp.eq.s32.totalorder %s14, 1
    %p223 = por %p221, %p222
    %p224 = scmp.ne.s32.totalorder %s216, %s219
    %p225 = scmp.eq.s32.totalorder %s14, 0
    %p226 = por %p224, %p225
    %p227 = scmp.ne.s32.totalorder %s216, %s219
    %p228 = scmp.eq.s32.totalorder %s19, 1
    %p229 = por %p227, %p228
    %p230 = scmp.ne.s32.totalorder %s219, %s220
    %p231 = scmp.eq.s32.totalorder %s19, 0
    %p232 = por %p230, %p231
    %p233 = scmp.ne.s32.totalorder %s219, %s220
    %p234 = scmp.eq.s32.totalorder %s20, 1
    %p235 = por %p233, %p234
    %p237 = scmp.ne.s32.totalorder %s220, %s236
    %p238 = scmp.eq.s32.totalorder %s20, 0
    %p239 = por %p237, %p238
    %p240 = scmp.le.s32.totalorder 1, %s14
    %p241 = scmp.lt.s32.totalorder %s14, 3
    %p242 = pnand %p240, %p241
    %p243 = pneg %p242
    // Predicated region
    $region9: #{sat1_gru_forward.1} parent=5 // pred_check
      _
    $region10: #{sat1_gru_forward.1} parent=5 // pred_check_branch
      %245 = sbr.rel (%p242) target = $region12
    $region11: #{sat1_gru_forward.1} parent=5 // pred_region
      %s246 = ssub.s32 %s14, 1
      // Predicated region
      $region13: #{sat1_gru_forward.1} parent=11 // pred_check
        %p247 = pneg %p80
      $region14: #{sat1_gru_forward.1} parent=11 // pred_check_branch
        %249 = sbr.rel (%p247) target = $region16
      $region15: #{sat1_gru_forward.1} parent=11 // pred_region
        %s250 = smul.u32 2, %s23
        %p251 = scmp.lt.s32.totalorder %s250, 1
        %s252 = scalar_select %p251, %s250, 1
        %s253 = smul.addr %s252, 8
        %s254 = scalar_lea.vmem %s1, %s253
        %s255 = smul.u32 2, %s23
      $region16: #{sat1_gru_forward.1} parent=11 // pred_fallthru
        _
      // Predicated region
      $region17: #{sat1_gru_forward.1} parent=11 // pred_check
        %p256 = pneg %p101
      $region18: #{sat1_gru_forward.1} parent=11 // pred_check_branch
        %258 = sbr.rel (%p256) target = $region20
      $region19: #{sat1_gru_forward.1} parent=11 // pred_region
        _
      $region20: #{sat1_gru_forward.1} parent=11 // pred_fallthru
        _
      // Predicated region
      $region21: #{sat1_gru_forward.1} parent=11 // pred_check
        %p259 = pneg %p122
      $region22: #{sat1_gru_forward.1} parent=11 // pred_check_branch
        %261 = sbr.rel (%p259) target = $region24
      $region23: #{sat1_gru_forward.1} parent=11 // pred_region
        _
      $region24: #{sat1_gru_forward.1} parent=11 // pred_fallthru
        _
      // Predicated region
      $region25: #{sat1_gru_forward.1} parent=11 // pred_check
        %p262 = pneg %p143
      $region26: #{sat1_gru_forward.1} parent=11 // pred_check_branch
        %264 = sbr.rel (%p262) target = $region28
      $region27: #{sat1_gru_forward.1} parent=11 // pred_region
        _
      $region28: #{sat1_gru_forward.1} parent=11 // pred_fallthru
        _
      // Predicated region
      $region29: #{sat1_gru_forward.1} parent=11 // pred_check
        %p265 = pneg %p164
      $region30: #{sat1_gru_forward.1} parent=11 // pred_check_branch
        %267 = sbr.rel (%p265) target = $region32
      $region31: #{sat1_gru_forward.1} parent=11 // pred_region
        _
      $region32: #{sat1_gru_forward.1} parent=11 // pred_fallthru
        _
      // Predicated region
      $region33: #{sat1_gru_forward.1} parent=11 // pred_check
        %p268 = pneg %p185
      $region34: #{sat1_gru_forward.1} parent=11 // pred_check_branch
        %270 = sbr.rel (%p268) target = $region36
      $region35: #{sat1_gru_forward.1} parent=11 // pred_region
        _
      $region36: #{sat1_gru_forward.1} parent=11 // pred_fallthru
        _
      // Predicated region
      $region37: #{sat1_gru_forward.1} parent=11 // pred_check
        %p271 = pneg %p206
      $region38: #{sat1_gru_forward.1} parent=11 // pred_check_branch
        %273 = sbr.rel (%p271) target = $region40
      $region39: #{sat1_gru_forward.1} parent=11 // pred_region
        _
      $region40: #{sat1_gru_forward.1} parent=11 // pred_fallthru
        _
    $region12: #{sat1_gru_forward.1} parent=5 // pred_fallthru
      _
    %p274 = scmp.lt.s32.totalorder %s14, 2
    // Predicated region
    $region41: #{sat1_gru_forward.1} parent=5 // pred_check
      %p275 = pneg %p274
    $region42: #{sat1_gru_forward.1} parent=5 // pred_check_branch
      %277 = sbr.rel (%p275) target = $region44
    $region43: #{sat1_gru_forward.1} parent=5 // pred_region
      // Predicated region
      $region45: #{sat1_gru_forward.1} parent=43 // pred_check
        %p278 = pneg %p48
      $region46: #{sat1_gru_forward.1} parent=43 // pred_check_branch
        %280 = sbr.rel (%p278) target = $region48
      $region47: #{sat1_gru_forward.1} parent=43 // pred_region
        %s281 = smul.u32 8, %s22
        %s282 = smul.u32 2, %s21
        %p283 = scmp.lt.s32.totalorder %s281, 15
        %s284 = scalar_select %p283, %s281, 15
        %p285 = scmp.lt.s32.totalorder %s282, 1
        %s286 = scalar_select %p285, %s282, 1
        %s287 = smul.addr %s286, 6
        %s288 = smul.addr %s284, 12
        %s289 = sadd.s32 %s287, %s288
        %s290 = smul.addr %s289, 4
        %s291 = scalar_lea.vmem %s0, %s290
        %s292 = smul.u32 8, %s22
        %s293 = smul.u32 2, %s21
      $region48: #{sat1_gru_forward.1} parent=43 // pred_fallthru
        _
    $region44: #{sat1_gru_forward.1} parent=5 // pred_fallthru
      _
    %p294 = scmp.le.s32.totalorder 1, %s14
    %p295 = scmp.lt.s32.totalorder %s14, 3
    %p296 = pnand %p294, %p295
    %p297 = pneg %p296
    // Predicated region
    $region49: #{sat1_gru_forward.1} parent=5 // pred_check
      _
    $region50: #{sat1_gru_forward.1} parent=5 // pred_check_branch
      %299 = sbr.rel (%p296) target = $region52
    $region51: #{sat1_gru_forward.1} parent=5 // pred_region
      %s300 = ssub.s32 %s14, 1
      %s301 = smul.u32 8, %s24
      %s302 = smul.u32 2, %s23
      %p303 = scmp.lt.s32.totalorder %s301, 15
      %s304 = scalar_select %p303, %s301, 15
      %p305 = scmp.lt.s32.totalorder %s302, 1
      %s306 = scalar_select %p305, %s302, 1
      %s307 = smul.addr %s306, 6
      %s308 = smul.addr %s304, 12
      %s309 = sadd.s32 %s307, %s308
      %s310 = smul.addr %s309, 4
      %s311 = scalar_lea.vmem %s0, %s310
      %p312 = pneg %p54
      %p313 = pneg %p51
      %s314 = smul.u32 2, %s23
      %p315 = scmp.lt.s32.totalorder %s314, 1
      %s316 = scalar_select %p315, %s314, 1
      %s317 = smul.addr %s316, 8
      %s318 = scalar_lea.vmem %s1, %s317
      %p319 = pneg %p80
      %p320 = pneg %p77
      %p321 = pneg %p101
      %p322 = pneg %p98
      %p323 = pneg %p122
      %p324 = pneg %p119
      %p325 = pneg %p143
      %p326 = pneg %p140
      %p327 = pneg %p164
      %p328 = pneg %p161
      %p329 = pneg %p185
      %p330 = pneg %p182
      %p331 = pneg %p206
      %p332 = pneg %p203
      %p333 = pneg %p232
      %p334 = pneg %p229
      %s335 = smul.u32 2, %s23
      %p336 = scmp.lt.s32.totalorder %s335, 1
      %s337 = scalar_select %p336, %s335, 1
      %s338 = smul.addr %s337, 8
      %s339 = scalar_lea.vmem %s8, %s338
      %s340 = smul.u32 8, %s24
      %s341 = smul.u32 2, %s23
      %p342 = scmp.lt.s32.totalorder %s340, 15
      %s343 = scalar_select %p342, %s340, 15
      %p344 = scmp.lt.s32.totalorder %s341, 1
      %s345 = scalar_select %p344, %s341, 1
      %s346 = smul.addr %s345, 6
      %s347 = smul.addr %s343, 12
      %s348 = sadd.s32 %s346, %s347
      %s349 = smul.addr %s348, 4
      %s350 = scalar_lea.vmem %s0, %s349
      %s351 = smul.u32 8, %s24
      %s352 = smul.u32 2, %s23
      %s353 = smul.u32 2, %s23
      %p354 = scmp.lt.s32.totalorder %s353, 1
      %s355 = scalar_select %p354, %s353, 1
      %s356 = smul.addr %s355, 8
      %s357 = scalar_lea.vmem %s1, %s356
      %s358 = smul.u32 2, %s23
      %s359 = smul.u32 2, %s23
      %p360 = scmp.lt.s32.totalorder %s359, 1
      %s361 = scalar_select %p360, %s359, 1
      %s362 = smul.addr %s361, 8
      %s363 = scalar_lea.vmem %s8, %s362
      %s364 = smul.u32 2, %s23
      %p365 = scmp.eq.s32.totalorder %s24, 0
      // Predicated region
      $region53: #{sat1_gru_forward.1} parent=51 // pred_check
        %p366 = pneg %p365
      $region54: #{sat1_gru_forward.1} parent=51 // pred_check_branch
        %368 = sbr.rel (%p366) target = $region56
      $region55: #{sat1_gru_forward.1} parent=51 // pred_region
        %369 = vst [vmem:[#allocation2] sm:$0xff] 0.0
        %370 = vst [vmem:[#allocation2 + $0x8] sm:$0xff] 0.0
        %371 = vst [vmem:[#allocation2 + $0x10] sm:$0xff] 0.0
        %372 = vst [vmem:[#allocation2 + $0x18] sm:$0xff] 0.0
      $region56: #{sat1_gru_forward.1} parent=51 // pred_fallthru
        _
      %v373 = vld [vmem:[%s357] sm:$0xff]
      %v374 = vld [vmem:[%s357 + $0x8] sm:$0xff]
      %375 = vset.pattern.permute.xlu0 0
      %376 = vperm.xlu0 %375, %v373
      %v377 = vpop.permute.xlu0 %376
      %378 = vset.pattern.permute.xlu0 0
      %379 = vperm.xlu0 %378, %v374
      %v380 = vpop.permute.xlu0 %379
      %v381 = vld [vmem:[%s3] sm:$0x3]
      %v383 = vlaneseq
      %v384 = vshrl.u32 %v383, 7
      %v385 = vsub.s32 0, %v384
      %v386 = vrot.slane %v381, %v385
      %v387 = vlaneseq
      %v388 = vshrl.u32 %v387, 7
      %v389 = vsub.s32 1, %v388
      %v390 = vrot.slane %v381, %v389
      %v393 = vld [vmem:[%s2] sm:$0xff]
      %v394 = vld [vmem:[%s2 + $0x8] sm:$0xff]
      %v395 = vld [vmem:[%s2 + $0x10] sm:$0xff]
      %v396 = vld [vmem:[%s2 + $0x18] sm:$0xff]
      %v397 = vld [vmem:[%s2 + $0x20] sm:$0xff]
      %v398 = vld [vmem:[%s2 + $0x28] sm:$0xff]
      %v399 = vld [vmem:[%s2 + $0x30] sm:$0xff]
      %v400 = vld [vmem:[%s2 + $0x38] sm:$0xff]
      %v401 = vld [vmem:[%s2 + $0x40] sm:$0xff]
      %v402 = vld [vmem:[%s2 + $0x48] sm:$0xff]
      %v403 = vld [vmem:[%s2 + $0x50] sm:$0xff]
      %v404 = vld [vmem:[%s2 + $0x58] sm:$0xff]
      %v405 = vld [vmem:[%s2 + $0x60] sm:$0xff]
      %v406 = vld [vmem:[%s2 + $0x68] sm:$0xff]
      %v407 = vld [vmem:[%s2 + $0x70] sm:$0xff]
      %v408 = vld [vmem:[%s2 + $0x78] sm:$0xff]
      %v409 = vld [vmem:[%s2 + $0x80] sm:$0xff]
      %v410 = vld [vmem:[%s2 + $0x88] sm:$0xff]
      %v411 = vld [vmem:[%s2 + $0x90] sm:$0xff]
      %v412 = vld [vmem:[%s2 + $0x98] sm:$0xff]
      %v413 = vld [vmem:[%s2 + $0xa0] sm:$0xff]
      %v414 = vld [vmem:[%s2 + $0xa8] sm:$0xff]
      %v415 = vld [vmem:[%s2 + $0xb0] sm:$0xff]
      %v416 = vld [vmem:[%s2 + $0xb8] sm:$0xff]
      %v417 = vld [vmem:[%s2 + $0xc0] sm:$0xff]
      %v418 = vld [vmem:[%s2 + $0xc8] sm:$0xff]
      %v419 = vld [vmem:[%s2 + $0xd0] sm:$0xff]
      %v420 = vld [vmem:[%s2 + $0xd8] sm:$0xff]
      %v421 = vld [vmem:[%s2 + $0xe0] sm:$0xff]
      %v422 = vld [vmem:[%s2 + $0xe8] sm:$0xff]
      %v423 = vld [vmem:[%s2 + $0xf0] sm:$0xff]
      %v424 = vld [vmem:[%s2 + $0xf8] sm:$0xff]
      %v425 = vld [vmem:[%s2 + $0x100] sm:$0xff]
      %v426 = vld [vmem:[%s2 + $0x108] sm:$0xff]
      %v427 = vld [vmem:[%s2 + $0x110] sm:$0xff]
      %v428 = vld [vmem:[%s2 + $0x118] sm:$0xff]
      %v429 = vld [vmem:[%s2 + $0x120] sm:$0xff]
      %v430 = vld [vmem:[%s2 + $0x128] sm:$0xff]
      %v431 = vld [vmem:[%s2 + $0x130] sm:$0xff]
      %v432 = vld [vmem:[%s2 + $0x138] sm:$0xff]
      %v433 = vld [vmem:[%s2 + $0x140] sm:$0xff]
      %v434 = vld [vmem:[%s2 + $0x148] sm:$0xff]
      %v435 = vld [vmem:[%s2 + $0x150] sm:$0xff]
      %v436 = vld [vmem:[%s2 + $0x158] sm:$0xff]
      %v437 = vld [vmem:[%s2 + $0x160] sm:$0xff]
      %v438 = vld [vmem:[%s2 + $0x168] sm:$0xff]
      %v439 = vld [vmem:[%s2 + $0x170] sm:$0xff]
      %v440 = vld [vmem:[%s2 + $0x178] sm:$0xff]
      %v441 = vld [vmem:[%s2 + $0x180] sm:$0xff]
      %v442 = vld [vmem:[%s2 + $0x188] sm:$0xff]
      %v443 = vld [vmem:[%s2 + $0x190] sm:$0xff]
      %v444 = vld [vmem:[%s2 + $0x198] sm:$0xff]
      %v445 = vld [vmem:[%s2 + $0x1a0] sm:$0xff]
      %v446 = vld [vmem:[%s2 + $0x1a8] sm:$0xff]
      %v447 = vld [vmem:[%s2 + $0x1b0] sm:$0xff]
      %v448 = vld [vmem:[%s2 + $0x1b8] sm:$0xff]
      %v449 = vld [vmem:[%s2 + $0x1c0] sm:$0xff]
      %v450 = vld [vmem:[%s2 + $0x1c8] sm:$0xff]
      %v451 = vld [vmem:[%s2 + $0x1d0] sm:$0xff]
      %v452 = vld [vmem:[%s2 + $0x1d8] sm:$0xff]
      %v453 = vld [vmem:[%s2 + $0x1e0] sm:$0xff]
      %v454 = vld [vmem:[%s2 + $0x1e8] sm:$0xff]
      %v455 = vld [vmem:[%s2 + $0x1f0] sm:$0xff]
      %v456 = vld [vmem:[%s2 + $0x1f8] sm:$0xff]
      %v457 = vld [vmem:[%s2 + $0x200] sm:$0xff]
      %v458 = vld [vmem:[%s2 + $0x208] sm:$0xff]
      %v459 = vld [vmem:[%s2 + $0x210] sm:$0xff]
      %v460 = vld [vmem:[%s2 + $0x218] sm:$0xff]
      %v461 = vld [vmem:[%s2 + $0x220] sm:$0xff]
      %v462 = vld [vmem:[%s2 + $0x228] sm:$0xff]
      %v463 = vld [vmem:[%s2 + $0x230] sm:$0xff]
      %v464 = vld [vmem:[%s2 + $0x238] sm:$0xff]
      %v465 = vld [vmem:[%s2 + $0x240] sm:$0xff]
      %v466 = vld [vmem:[%s2 + $0x248] sm:$0xff]
      %v467 = vld [vmem:[%s2 + $0x250] sm:$0xff]
      %v468 = vld [vmem:[%s2 + $0x258] sm:$0xff]
      %v469 = vld [vmem:[%s2 + $0x260] sm:$0xff]
      %v470 = vld [vmem:[%s2 + $0x268] sm:$0xff]
      %v471 = vld [vmem:[%s2 + $0x270] sm:$0xff]
      %v472 = vld [vmem:[%s2 + $0x278] sm:$0xff]
      %v473 = vld [vmem:[%s2 + $0x280] sm:$0xff]
      %v474 = vld [vmem:[%s2 + $0x288] sm:$0xff]
      %v475 = vld [vmem:[%s2 + $0x290] sm:$0xff]
      %v476 = vld [vmem:[%s2 + $0x298] sm:$0xff]
      %v477 = vld [vmem:[%s2 + $0x2a0] sm:$0xff]
      %v478 = vld [vmem:[%s2 + $0x2a8] sm:$0xff]
      %v479 = vld [vmem:[%s2 + $0x2b0] sm:$0xff]
      %v480 = vld [vmem:[%s2 + $0x2b8] sm:$0xff]
      %v481 = vld [vmem:[%s2 + $0x2c0] sm:$0xff]
      %v482 = vld [vmem:[%s2 + $0x2c8] sm:$0xff]
      %v483 = vld [vmem:[%s2 + $0x2d0] sm:$0xff]
      %v484 = vld [vmem:[%s2 + $0x2d8] sm:$0xff]
      %v485 = vld [vmem:[%s2 + $0x2e0] sm:$0xff]
      %v486 = vld [vmem:[%s2 + $0x2e8] sm:$0xff]
      %v487 = vld [vmem:[%s2 + $0x2f0] sm:$0xff]
      %v488 = vld [vmem:[%s2 + $0x2f8] sm:$0xff]
      %s489 = smul.u32 %s24, 8
      %v490 = vld [vmem:[#allocation2] sm:$0xff]
      %v491 = vld [vmem:[#allocation2 + $0x8] sm:$0xff]
      %v492 = vld [vmem:[#allocation2 + $0x10] sm:$0xff]
      %v493 = vld [vmem:[#allocation2 + $0x18] sm:$0xff]
      %v494 = vld [vmem:[%s350] sm:$0xff]
      %v495 = vld [vmem:[%s350 + $0x8] sm:$0xff]
      %v496 = vld [vmem:[%s350 + $0x10] sm:$0xff]
      %v497 = vld [vmem:[%s350 + $0x18] sm:$0xff]
      %v498 = vld [vmem:[%s350 + $0x20] sm:$0xff]
      %v499 = vld [vmem:[%s350 + $0x28] sm:$0xff]
      %v500 = vunpack.c.l.bf16 %v494
      %v501 = vunpack.c.h.bf16 %v494
      %v502 = vunpack.c.l.bf16 %v495
      %v503 = vunpack.c.h.bf16 %v495
      %v504 = vunpack.c.l.bf16 %v496
      %v505 = vunpack.c.h.bf16 %v496
      %v506 = vunpack.c.l.bf16 %v497
      %v507 = vunpack.c.h.bf16 %v497
      %v508 = vunpack.c.l.bf16 %v498
      %v509 = vunpack.c.h.bf16 %v498
      %v510 = vunpack.c.l.bf16 %v499
      %v511 = vunpack.c.h.bf16 %v499
      %v512 = vpack.c.bf16 %v492, %v490
      %v513 = vpack.c.bf16 %v493, %v491
      %v610 = vunpack.c.l.b16 %v393
      %v611 = vunpack.c.h.b16 %v393
      %v612 = vunpack.c.l.b16 %v394
      %v613 = vunpack.c.h.b16 %v394
      %v614 = vunpack.c.l.b16 %v395
      %v615 = vunpack.c.h.b16 %v395
      %v616 = vunpack.c.l.b16 %v396
      %v617 = vunpack.c.h.b16 %v396
      %v618 = vunpack.c.l.b16 %v397
      %v619 = vunpack.c.h.b16 %v397
      %v620 = vunpack.c.l.b16 %v398
      %v621 = vunpack.c.h.b16 %v398
      %v622 = vunpack.c.l.b16 %v399
      %v623 = vunpack.c.h.b16 %v399
      %v624 = vunpack.c.l.b16 %v400
      %v625 = vunpack.c.h.b16 %v400
      %v626 = vunpack.c.l.b16 %v401
      %v627 = vunpack.c.h.b16 %v401
      %v628 = vunpack.c.l.b16 %v402
      %v629 = vunpack.c.h.b16 %v402
      %v630 = vunpack.c.l.b16 %v403
      %v631 = vunpack.c.h.b16 %v403
      %v632 = vunpack.c.l.b16 %v404
      %v633 = vunpack.c.h.b16 %v404
      %v634 = vunpack.c.l.b16 %v405
      %v635 = vunpack.c.h.b16 %v405
      %v636 = vunpack.c.l.b16 %v406
      %v637 = vunpack.c.h.b16 %v406
      %v638 = vunpack.c.l.b16 %v407
      %v639 = vunpack.c.h.b16 %v407
      %v640 = vunpack.c.l.b16 %v408
      %v641 = vunpack.c.h.b16 %v408
      %v642 = vunpack.c.l.b16 %v409
      %v643 = vunpack.c.h.b16 %v409
      %v644 = vunpack.c.l.b16 %v410
      %v645 = vunpack.c.h.b16 %v410
      %v646 = vunpack.c.l.b16 %v411
      %v647 = vunpack.c.h.b16 %v411
      %v648 = vunpack.c.l.b16 %v412
      %v649 = vunpack.c.h.b16 %v412
      %v650 = vunpack.c.l.b16 %v413
      %v651 = vunpack.c.h.b16 %v413
      %v652 = vunpack.c.l.b16 %v414
      %v653 = vunpack.c.h.b16 %v414
      %v654 = vunpack.c.l.b16 %v415
      %v655 = vunpack.c.h.b16 %v415
      %v656 = vunpack.c.l.b16 %v416
      %v657 = vunpack.c.h.b16 %v416
      %v658 = vunpack.c.l.b16 %v417
      %v659 = vunpack.c.h.b16 %v417
      %v660 = vunpack.c.l.b16 %v418
      %v661 = vunpack.c.h.b16 %v418
      %v662 = vunpack.c.l.b16 %v419
      %v663 = vunpack.c.h.b16 %v419
      %v664 = vunpack.c.l.b16 %v420
      %v665 = vunpack.c.h.b16 %v420
      %v666 = vunpack.c.l.b16 %v421
      %v667 = vunpack.c.h.b16 %v421
      %v668 = vunpack.c.l.b16 %v422
      %v669 = vunpack.c.h.b16 %v422
      %v670 = vunpack.c.l.b16 %v423
      %v671 = vunpack.c.h.b16 %v423
      %v672 = vunpack.c.l.b16 %v424
      %v673 = vunpack.c.h.b16 %v424
      %v674 = vunpack.c.l.b16 %v425
      %v675 = vunpack.c.h.b16 %v425
      %v676 = vunpack.c.l.b16 %v426
      %v677 = vunpack.c.h.b16 %v426
      %v678 = vunpack.c.l.b16 %v427
      %v679 = vunpack.c.h.b16 %v427
      %v680 = vunpack.c.l.b16 %v428
      %v681 = vunpack.c.h.b16 %v428
      %v682 = vunpack.c.l.b16 %v429
      %v683 = vunpack.c.h.b16 %v429
      %v684 = vunpack.c.l.b16 %v430
      %v685 = vunpack.c.h.b16 %v430
      %v686 = vunpack.c.l.b16 %v431
      %v687 = vunpack.c.h.b16 %v431
      %v688 = vunpack.c.l.b16 %v432
      %v689 = vunpack.c.h.b16 %v432
      %v690 = vunpack.c.l.b16 %v433
      %v691 = vunpack.c.h.b16 %v433
      %v692 = vunpack.c.l.b16 %v434
      %v693 = vunpack.c.h.b16 %v434
      %v694 = vunpack.c.l.b16 %v435
      %v695 = vunpack.c.h.b16 %v435
      %v696 = vunpack.c.l.b16 %v436
      %v697 = vunpack.c.h.b16 %v436
      %v698 = vunpack.c.l.b16 %v437
      %v699 = vunpack.c.h.b16 %v437
      %v700 = vunpack.c.l.b16 %v438
      %v701 = vunpack.c.h.b16 %v438
      %v702 = vunpack.c.l.b16 %v439
      %v703 = vunpack.c.h.b16 %v439
      %v704 = vunpack.c.l.b16 %v440
      %v705 = vunpack.c.h.b16 %v440
      %v706 = vunpack.c.l.b16 %v441
      %v707 = vunpack.c.h.b16 %v441
      %v708 = vunpack.c.l.b16 %v442
      %v709 = vunpack.c.h.b16 %v442
      %v710 = vunpack.c.l.b16 %v443
      %v711 = vunpack.c.h.b16 %v443
      %v712 = vunpack.c.l.b16 %v444
      %v713 = vunpack.c.h.b16 %v444
      %v714 = vunpack.c.l.b16 %v445
      %v715 = vunpack.c.h.b16 %v445
      %v716 = vunpack.c.l.b16 %v446
      %v717 = vunpack.c.h.b16 %v446
      %v718 = vunpack.c.l.b16 %v447
      %v719 = vunpack.c.h.b16 %v447
      %v720 = vunpack.c.l.b16 %v448
      %v721 = vunpack.c.h.b16 %v448
      %v722 = vunpack.c.l.b16 %v449
      %v723 = vunpack.c.h.b16 %v449
      %v724 = vunpack.c.l.b16 %v450
      %v725 = vunpack.c.h.b16 %v450
      %v726 = vunpack.c.l.b16 %v451
      %v727 = vunpack.c.h.b16 %v451
      %v728 = vunpack.c.l.b16 %v452
      %v729 = vunpack.c.h.b16 %v452
      %v730 = vunpack.c.l.b16 %v453
      %v731 = vunpack.c.h.b16 %v453
      %v732 = vunpack.c.l.b16 %v454
      %v733 = vunpack.c.h.b16 %v454
      %v734 = vunpack.c.l.b16 %v455
      %v735 = vunpack.c.h.b16 %v455
      %v736 = vunpack.c.l.b16 %v456
      %v737 = vunpack.c.h.b16 %v456
      %v738 = vunpack.c.l.b16 %v457
      %v739 = vunpack.c.h.b16 %v457
      %v740 = vunpack.c.l.b16 %v458
      %v741 = vunpack.c.h.b16 %v458
      %v742 = vunpack.c.l.b16 %v459
      %v743 = vunpack.c.h.b16 %v459
      %v744 = vunpack.c.l.b16 %v460
      %v745 = vunpack.c.h.b16 %v460
      %v746 = vunpack.c.l.b16 %v461
      %v747 = vunpack.c.h.b16 %v461
      %v748 = vunpack.c.l.b16 %v462
      %v749 = vunpack.c.h.b16 %v462
      %v750 = vunpack.c.l.b16 %v463
      %v751 = vunpack.c.h.b16 %v463
      %v752 = vunpack.c.l.b16 %v464
      %v753 = vunpack.c.h.b16 %v464
      %v754 = vunpack.c.l.b16 %v465
      %v755 = vunpack.c.h.b16 %v465
      %v756 = vunpack.c.l.b16 %v466
      %v757 = vunpack.c.h.b16 %v466
      %v758 = vunpack.c.l.b16 %v467
      %v759 = vunpack.c.h.b16 %v467
      %v760 = vunpack.c.l.b16 %v468
      %v761 = vunpack.c.h.b16 %v468
      %v762 = vunpack.c.l.b16 %v469
      %v763 = vunpack.c.h.b16 %v469
      %v764 = vunpack.c.l.b16 %v470
      %v765 = vunpack.c.h.b16 %v470
      %v766 = vunpack.c.l.b16 %v471
      %v767 = vunpack.c.h.b16 %v471
      %v768 = vunpack.c.l.b16 %v472
      %v769 = vunpack.c.h.b16 %v472
      %v770 = vunpack.c.l.b16 %v473
      %v771 = vunpack.c.h.b16 %v473
      %v772 = vunpack.c.l.b16 %v474
      %v773 = vunpack.c.h.b16 %v474
      %v774 = vunpack.c.l.b16 %v475
      %v775 = vunpack.c.h.b16 %v475
      %v776 = vunpack.c.l.b16 %v476
      %v777 = vunpack.c.h.b16 %v476
      %v778 = vunpack.c.l.b16 %v477
      %v779 = vunpack.c.h.b16 %v477
      %v780 = vunpack.c.l.b16 %v478
      %v781 = vunpack.c.h.b16 %v478
      %v782 = vunpack.c.l.b16 %v479
      %v783 = vunpack.c.h.b16 %v479
      %v784 = vunpack.c.l.b16 %v480
      %v785 = vunpack.c.h.b16 %v480
      %v786 = vunpack.c.l.b16 %v481
      %v787 = vunpack.c.h.b16 %v481
      %v788 = vunpack.c.l.b16 %v482
      %v789 = vunpack.c.h.b16 %v482
      %v790 = vunpack.c.l.b16 %v483
      %v791 = vunpack.c.h.b16 %v483
      %v792 = vunpack.c.l.b16 %v484
      %v793 = vunpack.c.h.b16 %v484
      %v794 = vunpack.c.l.b16 %v485
      %v795 = vunpack.c.h.b16 %v485
      %v796 = vunpack.c.l.b16 %v486
      %v797 = vunpack.c.h.b16 %v486
      %v798 = vunpack.c.l.b16 %v487
      %v799 = vunpack.c.h.b16 %v487
      %v800 = vunpack.c.l.b16 %v488
      %v801 = vunpack.c.h.b16 %v488
      %v802 = vpack.c.b16 %v616, %v610
      %v803 = vpack.c.b16 %v617, %v611
      %v804 = vpack.c.b16 %v618, %v612
      %v805 = vpack.c.b16 %v619, %v613
      %v806 = vpack.c.b16 %v620, %v614
      %v807 = vpack.c.b16 %v621, %v615
      %v808 = vpack.c.b16 %v628, %v622
      %v809 = vpack.c.b16 %v629, %v623
      %v810 = vpack.c.b16 %v630, %v624
      %v811 = vpack.c.b16 %v631, %v625
      %v812 = vpack.c.b16 %v632, %v626
      %v813 = vpack.c.b16 %v633, %v627
      %v814 = vpack.c.b16 %v640, %v634
      %v815 = vpack.c.b16 %v641, %v635
      %v816 = vpack.c.b16 %v642, %v636
      %v817 = vpack.c.b16 %v643, %v637
      %v818 = vpack.c.b16 %v644, %v638
      %v819 = vpack.c.b16 %v645, %v639
      %v820 = vpack.c.b16 %v652, %v646
      %v821 = vpack.c.b16 %v653, %v647
      %v822 = vpack.c.b16 %v654, %v648
      %v823 = vpack.c.b16 %v655, %v649
      %v824 = vpack.c.b16 %v656, %v650
      %v825 = vpack.c.b16 %v657, %v651
      %v826 = vpack.c.b16 %v664, %v658
      %v827 = vpack.c.b16 %v665, %v659
      %v828 = vpack.c.b16 %v666, %v660
      %v829 = vpack.c.b16 %v667, %v661
      %v830 = vpack.c.b16 %v668, %v662
      %v831 = vpack.c.b16 %v669, %v663
      %v832 = vpack.c.b16 %v676, %v670
      %v833 = vpack.c.b16 %v677, %v671
      %v834 = vpack.c.b16 %v678, %v672
      %v835 = vpack.c.b16 %v679, %v673
      %v836 = vpack.c.b16 %v680, %v674
      %v837 = vpack.c.b16 %v681, %v675
      %v838 = vpack.c.b16 %v688, %v682
      %v839 = vpack.c.b16 %v689, %v683
      %v840 = vpack.c.b16 %v690, %v684
      %v841 = vpack.c.b16 %v691, %v685
      %v842 = vpack.c.b16 %v692, %v686
      %v843 = vpack.c.b16 %v693, %v687
      %v844 = vpack.c.b16 %v700, %v694
      %v845 = vpack.c.b16 %v701, %v695
      %v846 = vpack.c.b16 %v702, %v696
      %v847 = vpack.c.b16 %v703, %v697
      %v848 = vpack.c.b16 %v704, %v698
      %v849 = vpack.c.b16 %v705, %v699
      %v850 = vpack.c.b16 %v712, %v706
      %v851 = vpack.c.b16 %v713, %v707
      %v852 = vpack.c.b16 %v714, %v708
      %v853 = vpack.c.b16 %v715, %v709
      %v854 = vpack.c.b16 %v716, %v710
      %v855 = vpack.c.b16 %v717, %v711
      %v856 = vpack.c.b16 %v724, %v718
      %v857 = vpack.c.b16 %v725, %v719
      %v858 = vpack.c.b16 %v726, %v720
      %v859 = vpack.c.b16 %v727, %v721
      %v860 = vpack.c.b16 %v728, %v722
      %v861 = vpack.c.b16 %v729, %v723
      %v862 = vpack.c.b16 %v736, %v730
      %v863 = vpack.c.b16 %v737, %v731
      %v864 = vpack.c.b16 %v738, %v732
      %v865 = vpack.c.b16 %v739, %v733
      %v866 = vpack.c.b16 %v740, %v734
      %v867 = vpack.c.b16 %v741, %v735
      %v868 = vpack.c.b16 %v748, %v742
      %v869 = vpack.c.b16 %v749, %v743
      %v870 = vpack.c.b16 %v750, %v744
      %v871 = vpack.c.b16 %v751, %v745
      %v872 = vpack.c.b16 %v752, %v746
      %v873 = vpack.c.b16 %v753, %v747
      %v874 = vpack.c.b16 %v760, %v754
      %v875 = vpack.c.b16 %v761, %v755
      %v876 = vpack.c.b16 %v762, %v756
      %v877 = vpack.c.b16 %v763, %v757
      %v878 = vpack.c.b16 %v764, %v758
      %v879 = vpack.c.b16 %v765, %v759
      %v880 = vpack.c.b16 %v772, %v766
      %v881 = vpack.c.b16 %v773, %v767
      %v882 = vpack.c.b16 %v774, %v768
      %v883 = vpack.c.b16 %v775, %v769
      %v884 = vpack.c.b16 %v776, %v770
      %v885 = vpack.c.b16 %v777, %v771
      %v886 = vpack.c.b16 %v784, %v778
      %v887 = vpack.c.b16 %v785, %v779
      %v888 = vpack.c.b16 %v786, %v780
      %v889 = vpack.c.b16 %v787, %v781
      %v890 = vpack.c.b16 %v788, %v782
      %v891 = vpack.c.b16 %v789, %v783
      %v892 = vpack.c.b16 %v796, %v790
      %v893 = vpack.c.b16 %v797, %v791
      %v894 = vpack.c.b16 %v798, %v792
      %v895 = vpack.c.b16 %v799, %v793
      %v896 = vpack.c.b16 %v800, %v794
      %v897 = vpack.c.b16 %v801, %v795
      %994 = vmatprep.subr.bf16.mxu0 %v845
      %995 = vmatpush1.bf16.msra.mxu0 %v844
      %996 = vmatprep.subr.bf16.mxu0 %v839
      %997 = vmatpush1.bf16.msra.mxu0 %v838
      %998 = vmatprep.subr.bf16.mxu0 %v833
      %999 = vmatpush1.bf16.msra.mxu0 %v832
      %1000 = vmatprep.subr.bf16.mxu0 %v827
      %1001 = vmatpush1.bf16.msra.mxu0 %v826
      %1002 = vmatprep.subr.bf16.mxu0 %v821
      %1003 = vmatpush1.bf16.msra.mxu0 %v820
      %1004 = vmatprep.subr.bf16.mxu0 %v815
      %1005 = vmatpush1.bf16.msra.mxu0 %v814
      %1006 = vmatprep.subr.bf16.mxu0 %v809
      %1007 = vmatpush1.bf16.msra.mxu0 %v808
      %1008 = vmatprep.subr.bf16.mxu0 %v803
      %1009 = vmatpush1.bf16.msra.mxu0 %v802
      %1010 = vmatprep.subr.bf16.mxu0 %v893
      %1011 = vmatpush2.bf16.msra.mxu0 %v892
      %1012 = vmatprep.subr.bf16.mxu0 %v887
      %1013 = vmatpush2.bf16.msra.mxu0 %v886
      %1014 = vmatprep.subr.bf16.mxu0 %v881
      %1015 = vmatpush2.bf16.msra.mxu0 %v880
      %1016 = vmatprep.subr.bf16.mxu0 %v875
      %1017 = vmatpush2.bf16.msra.mxu0 %v874
      %1018 = vmatprep.subr.bf16.mxu0 %v869
      %1019 = vmatpush2.bf16.msra.mxu0 %v868
      %1020 = vmatprep.subr.bf16.mxu0 %v863
      %1021 = vmatpush2.bf16.msra.mxu0 %v862
      %1022 = vmatprep.subr.bf16.mxu0 %v857
      %1023 = vmatpush2.bf16.msra.mxu0 %v856
      %1024 = vmatprep.subr.bf16.mxu0 %v851
      %1025 = vmatpush2.bf16.msra.mxu0 %v850
      %1026 = vmatprep.mubr.bf16.mxu0 %v513
      %1027 = vmatmul.mubr.bf16.gmra.mxu0 %v512
      %v1028 = vpop.f32.mrf.mxu0
      %v1029 = vadd.f32 0.0, %v1028
      %v1030 = vpop.f32.mrf.mxu0
      %v1031 = vadd.f32 0.0, %v1030
      %v1032 = vpop.f32.mrf.mxu0
      %v1033 = vadd.f32 0.0, %v1032
      %v1034 = vpop.f32.mrf.mxu0
      %v1035 = vadd.f32 0.0, %v1034
      %1036 = vdwg.mxu0
      %1037 = vmatprep.subr.bf16.mxu0 %v847
      %1038 = vmatpush1.bf16.msra.mxu0 %v846
      %1039 = vmatprep.subr.bf16.mxu0 %v841
      %1040 = vmatpush1.bf16.msra.mxu0 %v840
      %1041 = vmatprep.subr.bf16.mxu0 %v835
      %1042 = vmatpush1.bf16.msra.mxu0 %v834
      %1043 = vmatprep.subr.bf16.mxu0 %v829
      %1044 = vmatpush1.bf16.msra.mxu0 %v828
      %1045 = vmatprep.subr.bf16.mxu0 %v823
      %1046 = vmatpush1.bf16.msra.mxu0 %v822
      %1047 = vmatprep.subr.bf16.mxu0 %v817
      %1048 = vmatpush1.bf16.msra.mxu0 %v816
      %1049 = vmatprep.subr.bf16.mxu0 %v811
      %1050 = vmatpush1.bf16.msra.mxu0 %v810
      %1051 = vmatprep.subr.bf16.mxu0 %v805
      %1052 = vmatpush1.bf16.msra.mxu0 %v804
      %1053 = vmatprep.subr.bf16.mxu0 %v895
      %1054 = vmatpush2.bf16.msra.mxu0 %v894
      %1055 = vmatprep.subr.bf16.mxu0 %v889
      %1056 = vmatpush2.bf16.msra.mxu0 %v888
      %1057 = vmatprep.subr.bf16.mxu0 %v883
      %1058 = vmatpush2.bf16.msra.mxu0 %v882
      %1059 = vmatprep.subr.bf16.mxu0 %v877
      %1060 = vmatpush2.bf16.msra.mxu0 %v876
      %1061 = vmatprep.subr.bf16.mxu0 %v871
      %1062 = vmatpush2.bf16.msra.mxu0 %v870
      %1063 = vmatprep.subr.bf16.mxu0 %v865
      %1064 = vmatpush2.bf16.msra.mxu0 %v864
      %1065 = vmatprep.subr.bf16.mxu0 %v859
      %1066 = vmatpush2.bf16.msra.mxu0 %v858
      %1067 = vmatprep.subr.bf16.mxu0 %v853
      %1068 = vmatpush2.bf16.msra.mxu0 %v852
      %1069 = vmatprep.mubr.bf16.mxu0 %v513
      %1070 = vmatmul.mubr.bf16.gmra.mxu0 %v512
      %v1071 = vpop.f32.mrf.mxu0
      %v1072 = vadd.f32 0.0, %v1071
      %v1073 = vpop.f32.mrf.mxu0
      %v1074 = vadd.f32 0.0, %v1073
      %v1075 = vpop.f32.mrf.mxu0
      %v1076 = vadd.f32 0.0, %v1075
      %v1077 = vpop.f32.mrf.mxu0
      %v1078 = vadd.f32 0.0, %v1077
      %1079 = vdwg.mxu0
      %1080 = vmatprep.subr.bf16.mxu0 %v849
      %1081 = vmatpush1.bf16.msra.mxu0 %v848
      %1082 = vmatprep.subr.bf16.mxu0 %v843
      %1083 = vmatpush1.bf16.msra.mxu0 %v842
      %1084 = vmatprep.subr.bf16.mxu0 %v837
      %1085 = vmatpush1.bf16.msra.mxu0 %v836
      %1086 = vmatprep.subr.bf16.mxu0 %v831
      %1087 = vmatpush1.bf16.msra.mxu0 %v830
      %1088 = vmatprep.subr.bf16.mxu0 %v825
      %1089 = vmatpush1.bf16.msra.mxu0 %v824
      %1090 = vmatprep.subr.bf16.mxu0 %v819
      %1091 = vmatpush1.bf16.msra.mxu0 %v818
      %1092 = vmatprep.subr.bf16.mxu0 %v813
      %1093 = vmatpush1.bf16.msra.mxu0 %v812
      %1094 = vmatprep.subr.bf16.mxu0 %v807
      %1095 = vmatpush1.bf16.msra.mxu0 %v806
      %1096 = vmatprep.subr.bf16.mxu0 %v897
      %1097 = vmatpush2.bf16.msra.mxu0 %v896
      %1098 = vmatprep.subr.bf16.mxu0 %v891
      %1099 = vmatpush2.bf16.msra.mxu0 %v890
      %1100 = vmatprep.subr.bf16.mxu0 %v885
      %1101 = vmatpush2.bf16.msra.mxu0 %v884
      %1102 = vmatprep.subr.bf16.mxu0 %v879
      %1103 = vmatpush2.bf16.msra.mxu0 %v878
      %1104 = vmatprep.subr.bf16.mxu0 %v873
      %1105 = vmatpush2.bf16.msra.mxu0 %v872
      %1106 = vmatprep.subr.bf16.mxu0 %v867
      %1107 = vmatpush2.bf16.msra.mxu0 %v866
      %1108 = vmatprep.subr.bf16.mxu0 %v861
      %1109 = vmatpush2.bf16.msra.mxu0 %v860
      %1110 = vmatprep.subr.bf16.mxu0 %v855
      %1111 = vmatpush2.bf16.msra.mxu0 %v854
      %1112 = vmatprep.mubr.bf16.mxu0 %v513
      %1113 = vmatmul.mubr.bf16.gmra.mxu0 %v512
      %v1114 = vpop.f32.mrf.mxu0
      %v1115 = vadd.f32 0.0, %v1114
      %v1116 = vpop.f32.mrf.mxu0
      %v1117 = vadd.f32 0.0, %v1116
      %v1118 = vpop.f32.mrf.mxu0
      %v1119 = vadd.f32 0.0, %v1118
      %v1120 = vpop.f32.mrf.mxu0
      %v1121 = vadd.f32 0.0, %v1120
      %1122 = vdwg.mxu0
      %v1123 = vadd.f32 %v500, %v1029
      %v1124 = vadd.f32 %v501, %v1031
      %v1125 = vadd.f32 %v506, %v1033
      %v1126 = vadd.f32 %v507, %v1035
      %v1127 = vxor.u32 %v1123, 2147483648
      %v1128 = vxor.u32 %v1124, 2147483648
      %v1129 = vxor.u32 %v1125, 2147483648
      %v1130 = vxor.u32 %v1126, 2147483648
      %v1131 = vmul.f32 %v1127, 1.442695
      %v1132 = vpow.pop %v1131
      %v1133 = vmul.f32 %v1128, 1.442695
      %v1134 = vpow.pop %v1133
      %v1135 = vmul.f32 %v1129, 1.442695
      %v1136 = vpow.pop %v1135
      %v1137 = vmul.f32 %v1130, 1.442695
      %v1138 = vpow.pop %v1137
      %v1139 = vadd.f32 %v1132, 1.0
      %v1140 = vadd.f32 %v1134, 1.0
      %v1141 = vadd.f32 %v1136, 1.0
      %v1142 = vadd.f32 %v1138, 1.0
      %v1143 = vrcp.pop %v1139
      %v1144 = vmul.f32 1.0, %v1143
      %v1145 = vrcp.pop %v1140
      %v1146 = vmul.f32 1.0, %v1145
      %v1147 = vrcp.pop %v1141
      %v1148 = vmul.f32 1.0, %v1147
      %v1149 = vrcp.pop %v1142
      %v1150 = vmul.f32 1.0, %v1149
      %v1151 = vadd.f32 %v502, %v1072
      %v1152 = vadd.f32 %v503, %v1074
      %v1153 = vadd.f32 %v508, %v1076
      %v1154 = vadd.f32 %v509, %v1078
      %v1155 = vxor.u32 %v1151, 2147483648
      %v1156 = vxor.u32 %v1152, 2147483648
      %v1157 = vxor.u32 %v1153, 2147483648
      %v1158 = vxor.u32 %v1154, 2147483648
      %v1159 = vmul.f32 %v1155, 1.442695
      %v1160 = vpow.pop %v1159
      %v1161 = vmul.f32 %v1156, 1.442695
      %v1162 = vpow.pop %v1161
      %v1163 = vmul.f32 %v1157, 1.442695
      %v1164 = vpow.pop %v1163
      %v1165 = vmul.f32 %v1158, 1.442695
      %v1166 = vpow.pop %v1165
      %v1167 = vadd.f32 %v1160, 1.0
      %v1168 = vadd.f32 %v1162, 1.0
      %v1169 = vadd.f32 %v1164, 1.0
      %v1170 = vadd.f32 %v1166, 1.0
      %v1171 = vrcp.pop %v1167
      %v1172 = vmul.f32 1.0, %v1171
      %v1173 = vrcp.pop %v1168
      %v1174 = vmul.f32 1.0, %v1173
      %v1175 = vrcp.pop %v1169
      %v1176 = vmul.f32 1.0, %v1175
      %v1177 = vrcp.pop %v1170
      %v1178 = vmul.f32 1.0, %v1177
      %v1179 = vadd.f32 %v1115, %v386
      %v1180 = vadd.f32 %v1117, %v390
      %v1181 = vadd.f32 %v1119, %v386
      %v1182 = vadd.f32 %v1121, %v390
      %v1183 = vmul.f32 %v1144, %v1179
      %v1184 = vmul.f32 %v1146, %v1180
      %v1185 = vmul.f32 %v1148, %v1181
      %v1186 = vmul.f32 %v1150, %v1182
      %v1187 = vadd.f32 %v504, %v1183
      %v1188 = vadd.f32 %v505, %v1184
      %v1189 = vadd.f32 %v510, %v1185
      %v1190 = vadd.f32 %v511, %v1186
      %v1191 = vtanh.pop %v1187
      %v1192 = vtanh.pop %v1188
      %v1193 = vtanh.pop %v1189
      %v1194 = vtanh.pop %v1190
      %v1195 = vsub.f32 1.0, %v1172
      %v1196 = vsub.f32 1.0, %v1174
      %v1197 = vsub.f32 1.0, %v1176
      %v1198 = vsub.f32 1.0, %v1178
      %v1199 = vmul.f32 %v1195, %v1191
      %v1200 = vmul.f32 %v1196, %v1192
      %v1201 = vmul.f32 %v1197, %v1193
      %v1202 = vmul.f32 %v1198, %v1194
      %v1203 = vmul.f32 %v1172, %v490
      %v1204 = vmul.f32 %v1174, %v491
      %v1205 = vmul.f32 %v1176, %v492
      %v1206 = vmul.f32 %v1178, %v493
      %v1207 = vadd.f32 %v1199, %v1203
      %v1208 = vadd.f32 %v1200, %v1204
      %v1209 = vadd.f32 %v1201, %v1205
      %v1210 = vadd.f32 %v1202, %v1206
      %v1211 = vstv %s489
      %vm1212 = vcmp.lt.s32.totalorder %v1211, %v377
      %vm1213 = vcmp.lt.s32.totalorder %v1211, %v380
      %v1214 = vsel %vm1212, %v1207, %v490
      %v1215 = vsel %vm1212, %v1208, %v491
      %v1216 = vsel %vm1213, %v1209, %v492
      %v1217 = vsel %vm1213, %v1210, %v493
      %s1218 = scalar_lea.vmem %s350, 48
      %v1219 = vld [vmem:[%s1218] sm:$0xff]
      %v1220 = vld [vmem:[%s1218 + $0x8] sm:$0xff]
      %v1221 = vld [vmem:[%s1218 + $0x10] sm:$0xff]
      %v1222 = vld [vmem:[%s1218 + $0x18] sm:$0xff]
      %v1223 = vld [vmem:[%s1218 + $0x20] sm:$0xff]
      %v1224 = vld [vmem:[%s1218 + $0x28] sm:$0xff]
      %v1225 = vunpack.c.l.bf16 %v1219
      %v1226 = vunpack.c.h.bf16 %v1219
      %v1227 = vunpack.c.l.bf16 %v1220
      %v1228 = vunpack.c.h.bf16 %v1220
      %v1229 = vunpack.c.l.bf16 %v1221
      %v1230 = vunpack.c.h.bf16 %v1221
      %v1231 = vunpack.c.l.bf16 %v1222
      %v1232 = vunpack.c.h.bf16 %v1222
      %v1233 = vunpack.c.l.bf16 %v1223
      %v1234 = vunpack.c.h.bf16 %v1223
      %v1235 = vunpack.c.l.bf16 %v1224
      %v1236 = vunpack.c.h.bf16 %v1224
      %v1237 = vpack.c.bf16 %v1216, %v1214
      %v1238 = vpack.c.bf16 %v1217, %v1215
      %1239 = vmatprep.subr.bf16.mxu0 %v845
      %1240 = vmatpush1.bf16.msra.mxu0 %v844
      %1241 = vmatprep.subr.bf16.mxu0 %v839
      %1242 = vmatpush1.bf16.msra.mxu0 %v838
      %1243 = vmatprep.subr.bf16.mxu0 %v833
      %1244 = vmatpush1.bf16.msra.mxu0 %v832
      %1245 = vmatprep.subr.bf16.mxu0 %v827
      %1246 = vmatpush1.bf16.msra.mxu0 %v826
      %1247 = vmatprep.subr.bf16.mxu0 %v821
      %1248 = vmatpush1.bf16.msra.mxu0 %v820
      %1249 = vmatprep.subr.bf16.mxu0 %v815
      %1250 = vmatpush1.bf16.msra.mxu0 %v814
      %1251 = vmatprep.subr.bf16.mxu0 %v809
      %1252 = vmatpush1.bf16.msra.mxu0 %v808
      %1253 = vmatprep.subr.bf16.mxu0 %v803
      %1254 = vmatpush1.bf16.msra.mxu0 %v802
      %1255 = vmatprep.subr.bf16.mxu0 %v893
      %1256 = vmatpush2.bf16.msra.mxu0 %v892
      %1257 = vmatprep.subr.bf16.mxu0 %v887
      %1258 = vmatpush2.bf16.msra.mxu0 %v886
      %1259 = vmatprep.subr.bf16.mxu0 %v881
      %1260 = vmatpush2.bf16.msra.mxu0 %v880
      %1261 = vmatprep.subr.bf16.mxu0 %v875
      %1262 = vmatpush2.bf16.msra.mxu0 %v874
      %1263 = vmatprep.subr.bf16.mxu0 %v869
      %1264 = vmatpush2.bf16.msra.mxu0 %v868
      %1265 = vmatprep.subr.bf16.mxu0 %v863
      %1266 = vmatpush2.bf16.msra.mxu0 %v862
      %1267 = vmatprep.subr.bf16.mxu0 %v857
      %1268 = vmatpush2.bf16.msra.mxu0 %v856
      %1269 = vmatprep.subr.bf16.mxu0 %v851
      %1270 = vmatpush2.bf16.msra.mxu0 %v850
      %1271 = vmatprep.mubr.bf16.mxu0 %v1238
      %1272 = vmatmul.mubr.bf16.gmra.mxu0 %v1237
      %v1273 = vpop.f32.mrf.mxu0
      %v1274 = vadd.f32 0.0, %v1273
      %v1275 = vpop.f32.mrf.mxu0
      %v1276 = vadd.f32 0.0, %v1275
      %v1277 = vpop.f32.mrf.mxu0
      %v1278 = vadd.f32 0.0, %v1277
      %v1279 = vpop.f32.mrf.mxu0
      %v1280 = vadd.f32 0.0, %v1279
      %1281 = vdwg.mxu0
      %1282 = vmatprep.subr.bf16.mxu0 %v847
      %1283 = vmatpush1.bf16.msra.mxu0 %v846
      %1284 = vmatprep.subr.bf16.mxu0 %v841
      %1285 = vmatpush1.bf16.msra.mxu0 %v840
      %1286 = vmatprep.subr.bf16.mxu0 %v835
      %1287 = vmatpush1.bf16.msra.mxu0 %v834
      %1288 = vmatprep.subr.bf16.mxu0 %v829
      %1289 = vmatpush1.bf16.msra.mxu0 %v828
      %1290 = vmatprep.subr.bf16.mxu0 %v823
      %1291 = vmatpush1.bf16.msra.mxu0 %v822
      %1292 = vmatprep.subr.bf16.mxu0 %v817
      %1293 = vmatpush1.bf16.msra.mxu0 %v816
      %1294 = vmatprep.subr.bf16.mxu0 %v811
      %1295 = vmatpush1.bf16.msra.mxu0 %v810
      %1296 = vmatprep.subr.bf16.mxu0 %v805
      %1297 = vmatpush1.bf16.msra.mxu0 %v804
      %1298 = vmatprep.subr.bf16.mxu0 %v895
      %1299 = vmatpush2.bf16.msra.mxu0 %v894
      %1300 = vmatprep.subr.bf16.mxu0 %v889
      %1301 = vmatpush2.bf16.msra.mxu0 %v888
      %1302 = vmatprep.subr.bf16.mxu0 %v883
      %1303 = vmatpush2.bf16.msra.mxu0 %v882
      %1304 = vmatprep.subr.bf16.mxu0 %v877
      %1305 = vmatpush2.bf16.msra.mxu0 %v876
      %1306 = vmatprep.subr.bf16.mxu0 %v871
      %1307 = vmatpush2.bf16.msra.mxu0 %v870
      %1308 = vmatprep.subr.bf16.mxu0 %v865
      %1309 = vmatpush2.bf16.msra.mxu0 %v864
      %1310 = vmatprep.subr.bf16.mxu0 %v859
      %1311 = vmatpush2.bf16.msra.mxu0 %v858
      %1312 = vmatprep.subr.bf16.mxu0 %v853
      %1313 = vmatpush2.bf16.msra.mxu0 %v852
      %1314 = vmatprep.mubr.bf16.mxu0 %v1238
      %1315 = vmatmul.mubr.bf16.gmra.mxu0 %v1237
      %v1316 = vpop.f32.mrf.mxu0
      %v1317 = vadd.f32 0.0, %v1316
      %v1318 = vpop.f32.mrf.mxu0
      %v1319 = vadd.f32 0.0, %v1318
      %v1320 = vpop.f32.mrf.mxu0
      %v1321 = vadd.f32 0.0, %v1320
      %v1322 = vpop.f32.mrf.mxu0
      %v1323 = vadd.f32 0.0, %v1322
      %1324 = vdwg.mxu0
      %1325 = vmatprep.subr.bf16.mxu0 %v849
      %1326 = vmatpush1.bf16.msra.mxu0 %v848
      %1327 = vmatprep.subr.bf16.mxu0 %v843
      %1328 = vmatpush1.bf16.msra.mxu0 %v842
      %1329 = vmatprep.subr.bf16.mxu0 %v837
      %1330 = vmatpush1.bf16.msra.mxu0 %v836
      %1331 = vmatprep.subr.bf16.mxu0 %v831
      %1332 = vmatpush1.bf16.msra.mxu0 %v830
      %1333 = vmatprep.subr.bf16.mxu0 %v825
      %1334 = vmatpush1.bf16.msra.mxu0 %v824
      %1335 = vmatprep.subr.bf16.mxu0 %v819
      %1336 = vmatpush1.bf16.msra.mxu0 %v818
      %1337 = vmatprep.subr.bf16.mxu0 %v813
      %1338 = vmatpush1.bf16.msra.mxu0 %v812
      %1339 = vmatprep.subr.bf16.mxu0 %v807
      %1340 = vmatpush1.bf16.msra.mxu0 %v806
      %1341 = vmatprep.subr.bf16.mxu0 %v897
      %1342 = vmatpush2.bf16.msra.mxu0 %v896
      %1343 = vmatprep.subr.bf16.mxu0 %v891
      %1344 = vmatpush2.bf16.msra.mxu0 %v890
      %1345 = vmatprep.subr.bf16.mxu0 %v885
      %1346 = vmatpush2.bf16.msra.mxu0 %v884
      %1347 = vmatprep.subr.bf16.mxu0 %v879
      %1348 = vmatpush2.bf16.msra.mxu0 %v878
      %1349 = vmatprep.subr.bf16.mxu0 %v873
      %1350 = vmatpush2.bf16.msra.mxu0 %v872
      %1351 = vmatprep.subr.bf16.mxu0 %v867
      %1352 = vmatpush2.bf16.msra.mxu0 %v866
      %1353 = vmatprep.subr.bf16.mxu0 %v861
      %1354 = vmatpush2.bf16.msra.mxu0 %v860
      %1355 = vmatprep.subr.bf16.mxu0 %v855
      %1356 = vmatpush2.bf16.msra.mxu0 %v854
      %1357 = vmatprep.mubr.bf16.mxu0 %v1238
      %1358 = vmatmul.mubr.bf16.gmra.mxu0 %v1237
      %v1359 = vpop.f32.mrf.mxu0
      %v1360 = vadd.f32 0.0, %v1359
      %v1361 = vpop.f32.mrf.mxu0
      %v1362 = vadd.f32 0.0, %v1361
      %v1363 = vpop.f32.mrf.mxu0
      %v1364 = vadd.f32 0.0, %v1363
      %v1365 = vpop.f32.mrf.mxu0
      %v1366 = vadd.f32 0.0, %v1365
      %1367 = vdwg.mxu0
      %v1368 = vadd.f32 %v1225, %v1274
      %v1369 = vadd.f32 %v1226, %v1276
      %v1370 = vadd.f32 %v1231, %v1278
      %v1371 = vadd.f32 %v1232, %v1280
      %v1372 = vxor.u32 %v1368, 2147483648
      %v1373 = vxor.u32 %v1369, 2147483648
      %v1374 = vxor.u32 %v1370, 2147483648
      %v1375 = vxor.u32 %v1371, 2147483648
      %v1376 = vmul.f32 %v1372, 1.442695
      %v1377 = vpow.pop %v1376
      %v1378 = vmul.f32 %v1373, 1.442695
      %v1379 = vpow.pop %v1378
      %v1380 = vmul.f32 %v1374, 1.442695
      %v1381 = vpow.pop %v1380
      %v1382 = vmul.f32 %v1375, 1.442695
      %v1383 = vpow.pop %v1382
      %v1384 = vadd.f32 %v1377, 1.0
      %v1385 = vadd.f32 %v1379, 1.0
      %v1386 = vadd.f32 %v1381, 1.0
      %v1387 = vadd.f32 %v1383, 1.0
      %v1388 = vrcp.pop %v1384
      %v1389 = vmul.f32 1.0, %v1388
      %v1390 = vrcp.pop %v1385
      %v1391 = vmul.f32 1.0, %v1390
      %v1392 = vrcp.pop %v1386
      %v1393 = vmul.f32 1.0, %v1392
      %v1394 = vrcp.pop %v1387
      %v1395 = vmul.f32 1.0, %v1394
      %v1396 = vadd.f32 %v1227, %v1317
      %v1397 = vadd.f32 %v1228, %v1319
      %v1398 = vadd.f32 %v1233, %v1321
      %v1399 = vadd.f32 %v1234, %v1323
      %v1400 = vxor.u32 %v1396, 2147483648
      %v1401 = vxor.u32 %v1397, 2147483648
      %v1402 = vxor.u32 %v1398, 2147483648
      %v1403 = vxor.u32 %v1399, 2147483648
      %v1404 = vmul.f32 %v1400, 1.442695
      %v1405 = vpow.pop %v1404
      %v1406 = vmul.f32 %v1401, 1.442695
      %v1407 = vpow.pop %v1406
      %v1408 = vmul.f32 %v1402, 1.442695
      %v1409 = vpow.pop %v1408
      %v1410 = vmul.f32 %v1403, 1.442695
      %v1411 = vpow.pop %v1410
      %v1412 = vadd.f32 %v1405, 1.0
      %v1413 = vadd.f32 %v1407, 1.0
      %v1414 = vadd.f32 %v1409, 1.0
      %v1415 = vadd.f32 %v1411, 1.0
      %v1416 = vrcp.pop %v1412
      %v1417 = vmul.f32 1.0, %v1416
      %v1418 = vrcp.pop %v1413
      %v1419 = vmul.f32 1.0, %v1418
      %v1420 = vrcp.pop %v1414
      %v1421 = vmul.f32 1.0, %v1420
      %v1422 = vrcp.pop %v1415
      %v1423 = vmul.f32 1.0, %v1422
      %v1424 = vadd.f32 %v1360, %v386
      %v1425 = vadd.f32 %v1362, %v390
      %v1426 = vadd.f32 %v1364, %v386
      %v1427 = vadd.f32 %v1366, %v390
      %v1428 = vmul.f32 %v1389, %v1424
      %v1429 = vmul.f32 %v1391, %v1425
      %v1430 = vmul.f32 %v1393, %v1426
      %v1431 = vmul.f32 %v1395, %v1427
      %v1432 = vadd.f32 %v1229, %v1428
      %v1433 = vadd.f32 %v1230, %v1429
      %v1434 = vadd.f32 %v1235, %v1430
      %v1435 = vadd.f32 %v1236, %v1431
      %v1436 = vtanh.pop %v1432
      %v1437 = vtanh.pop %v1433
      %v1438 = vtanh.pop %v1434
      %v1439 = vtanh.pop %v1435
      %v1440 = vsub.f32 1.0, %v1417
      %v1441 = vsub.f32 1.0, %v1419
      %v1442 = vsub.f32 1.0, %v1421
      %v1443 = vsub.f32 1.0, %v1423
      %v1444 = vmul.f32 %v1440, %v1436
      %v1445 = vmul.f32 %v1441, %v1437
      %v1446 = vmul.f32 %v1442, %v1438
      %v1447 = vmul.f32 %v1443, %v1439
      %v1448 = vmul.f32 %v1417, %v1214
      %v1449 = vmul.f32 %v1419, %v1215
      %v1450 = vmul.f32 %v1421, %v1216
      %v1451 = vmul.f32 %v1423, %v1217
      %v1452 = vadd.f32 %v1444, %v1448
      %v1453 = vadd.f32 %v1445, %v1449
      %v1454 = vadd.f32 %v1446, %v1450
      %v1455 = vadd.f32 %v1447, %v1451
      %s1456 = sadd.s32 %s489, 1
      %v1457 = vstv %s1456
      %vm1458 = vcmp.lt.s32.totalorder %v1457, %v377
      %vm1459 = vcmp.lt.s32.totalorder %v1457, %v380
      %v1460 = vsel %vm1458, %v1452, %v1214
      %v1461 = vsel %vm1458, %v1453, %v1215
      %v1462 = vsel %vm1459, %v1454, %v1216
      %v1463 = vsel %vm1459, %v1455, %v1217
      %s1464 = scalar_lea.vmem %s350, 96
      %v1465 = vld [vmem:[%s1464] sm:$0xff]
      %v1466 = vld [vmem:[%s1464 + $0x8] sm:$0xff]
      %v1467 = vld [vmem:[%s1464 + $0x10] sm:$0xff]
      %v1468 = vld [vmem:[%s1464 + $0x18] sm:$0xff]
      %v1469 = vld [vmem:[%s1464 + $0x20] sm:$0xff]
      %v1470 = vld [vmem:[%s1464 + $0x28] sm:$0xff]
      %v1471 = vunpack.c.l.bf16 %v1465
      %v1472 = vunpack.c.h.bf16 %v1465
      %v1473 = vunpack.c.l.bf16 %v1466
      %v1474 = vunpack.c.h.bf16 %v1466
      %v1475 = vunpack.c.l.bf16 %v1467
      %v1476 = vunpack.c.h.bf16 %v1467
      %v1477 = vunpack.c.l.bf16 %v1468
      %v1478 = vunpack.c.h.bf16 %v1468
      %v1479 = vunpack.c.l.bf16 %v1469
      %v1480 = vunpack.c.h.bf16 %v1469
      %v1481 = vunpack.c.l.bf16 %v1470
      %v1482 = vunpack.c.h.bf16 %v1470
      %v1483 = vpack.c.bf16 %v1462, %v1460
      %v1484 = vpack.c.bf16 %v1463, %v1461
      %1485 = vmatprep.subr.bf16.mxu0 %v845
      %1486 = vmatpush1.bf16.msra.mxu0 %v844
      %1487 = vmatprep.subr.bf16.mxu0 %v839
      %1488 = vmatpush1.bf16.msra.mxu0 %v838
      %1489 = vmatprep.subr.bf16.mxu0 %v833
      %1490 = vmatpush1.bf16.msra.mxu0 %v832
      %1491 = vmatprep.subr.bf16.mxu0 %v827
      %1492 = vmatpush1.bf16.msra.mxu0 %v826
      %1493 = vmatprep.subr.bf16.mxu0 %v821
      %1494 = vmatpush1.bf16.msra.mxu0 %v820
      %1495 = vmatprep.subr.bf16.mxu0 %v815
      %1496 = vmatpush1.bf16.msra.mxu0 %v814
      %1497 = vmatprep.subr.bf16.mxu0 %v809
      %1498 = vmatpush1.bf16.msra.mxu0 %v808
      %1499 = vmatprep.subr.bf16.mxu0 %v803
      %1500 = vmatpush1.bf16.msra.mxu0 %v802
      %1501 = vmatprep.subr.bf16.mxu0 %v893
      %1502 = vmatpush2.bf16.msra.mxu0 %v892
      %1503 = vmatprep.subr.bf16.mxu0 %v887
      %1504 = vmatpush2.bf16.msra.mxu0 %v886
      %1505 = vmatprep.subr.bf16.mxu0 %v881
      %1506 = vmatpush2.bf16.msra.mxu0 %v880
      %1507 = vmatprep.subr.bf16.mxu0 %v875
      %1508 = vmatpush2.bf16.msra.mxu0 %v874
      %1509 = vmatprep.subr.bf16.mxu0 %v869
      %1510 = vmatpush2.bf16.msra.mxu0 %v868
      %1511 = vmatprep.subr.bf16.mxu0 %v863
      %1512 = vmatpush2.bf16.msra.mxu0 %v862
      %1513 = vmatprep.subr.bf16.mxu0 %v857
      %1514 = vmatpush2.bf16.msra.mxu0 %v856
      %1515 = vmatprep.subr.bf16.mxu0 %v851
      %1516 = vmatpush2.bf16.msra.mxu0 %v850
      %1517 = vmatprep.mubr.bf16.mxu0 %v1484
      %1518 = vmatmul.mubr.bf16.gmra.mxu0 %v1483
      %v1519 = vpop.f32.mrf.mxu0
      %v1520 = vadd.f32 0.0, %v1519
      %v1521 = vpop.f32.mrf.mxu0
      %v1522 = vadd.f32 0.0, %v1521
      %v1523 = vpop.f32.mrf.mxu0
      %v1524 = vadd.f32 0.0, %v1523
      %v1525 = vpop.f32.mrf.mxu0
      %v1526 = vadd.f32 0.0, %v1525
      %1527 = vdwg.mxu0
      %1528 = vmatprep.subr.bf16.mxu0 %v847
      %1529 = vmatpush1.bf16.msra.mxu0 %v846
      %1530 = vmatprep.subr.bf16.mxu0 %v841
      %1531 = vmatpush1.bf16.msra.mxu0 %v840
      %1532 = vmatprep.subr.bf16.mxu0 %v835
      %1533 = vmatpush1.bf16.msra.mxu0 %v834
      %1534 = vmatprep.subr.bf16.mxu0 %v829
      %1535 = vmatpush1.bf16.msra.mxu0 %v828
      %1536 = vmatprep.subr.bf16.mxu0 %v823
      %1537 = vmatpush1.bf16.msra.mxu0 %v822
      %1538 = vmatprep.subr.bf16.mxu0 %v817
      %1539 = vmatpush1.bf16.msra.mxu0 %v816
      %1540 = vmatprep.subr.bf16.mxu0 %v811
      %1541 = vmatpush1.bf16.msra.mxu0 %v810
      %1542 = vmatprep.subr.bf16.mxu0 %v805
      %1543 = vmatpush1.bf16.msra.mxu0 %v804
      %1544 = vmatprep.subr.bf16.mxu0 %v895
      %1545 = vmatpush2.bf16.msra.mxu0 %v894
      %1546 = vmatprep.subr.bf16.mxu0 %v889
      %1547 = vmatpush2.bf16.msra.mxu0 %v888
      %1548 = vmatprep.subr.bf16.mxu0 %v883
      %1549 = vmatpush2.bf16.msra.mxu0 %v882
      %1550 = vmatprep.subr.bf16.mxu0 %v877
      %1551 = vmatpush2.bf16.msra.mxu0 %v876
      %1552 = vmatprep.subr.bf16.mxu0 %v871
      %1553 = vmatpush2.bf16.msra.mxu0 %v870
      %1554 = vmatprep.subr.bf16.mxu0 %v865
      %1555 = vmatpush2.bf16.msra.mxu0 %v864
      %1556 = vmatprep.subr.bf16.mxu0 %v859
      %1557 = vmatpush2.bf16.msra.mxu0 %v858
      %1558 = vmatprep.subr.bf16.mxu0 %v853
      %1559 = vmatpush2.bf16.msra.mxu0 %v852
      %1560 = vmatprep.mubr.bf16.mxu0 %v1484
      %1561 = vmatmul.mubr.bf16.gmra.mxu0 %v1483
      %v1562 = vpop.f32.mrf.mxu0
      %v1563 = vadd.f32 0.0, %v1562
      %v1564 = vpop.f32.mrf.mxu0
      %v1565 = vadd.f32 0.0, %v1564
      %v1566 = vpop.f32.mrf.mxu0
      %v1567 = vadd.f32 0.0, %v1566
      %v1568 = vpop.f32.mrf.mxu0
      %v1569 = vadd.f32 0.0, %v1568
      %1570 = vdwg.mxu0
      %1571 = vmatprep.subr.bf16.mxu0 %v849
      %1572 = vmatpush1.bf16.msra.mxu0 %v848
      %1573 = vmatprep.subr.bf16.mxu0 %v843
      %1574 = vmatpush1.bf16.msra.mxu0 %v842
      %1575 = vmatprep.subr.bf16.mxu0 %v837
      %1576 = vmatpush1.bf16.msra.mxu0 %v836
      %1577 = vmatprep.subr.bf16.mxu0 %v831
      %1578 = vmatpush1.bf16.msra.mxu0 %v830
      %1579 = vmatprep.subr.bf16.mxu0 %v825
      %1580 = vmatpush1.bf16.msra.mxu0 %v824
      %1581 = vmatprep.subr.bf16.mxu0 %v819
      %1582 = vmatpush1.bf16.msra.mxu0 %v818
      %1583 = vmatprep.subr.bf16.mxu0 %v813
      %1584 = vmatpush1.bf16.msra.mxu0 %v812
      %1585 = vmatprep.subr.bf16.mxu0 %v807
      %1586 = vmatpush1.bf16.msra.mxu0 %v806
      %1587 = vmatprep.subr.bf16.mxu0 %v897
      %1588 = vmatpush2.bf16.msra.mxu0 %v896
      %1589 = vmatprep.subr.bf16.mxu0 %v891
      %1590 = vmatpush2.bf16.msra.mxu0 %v890
      %1591 = vmatprep.subr.bf16.mxu0 %v885
      %1592 = vmatpush2.bf16.msra.mxu0 %v884
      %1593 = vmatprep.subr.bf16.mxu0 %v879
      %1594 = vmatpush2.bf16.msra.mxu0 %v878
      %1595 = vmatprep.subr.bf16.mxu0 %v873
      %1596 = vmatpush2.bf16.msra.mxu0 %v872
      %1597 = vmatprep.subr.bf16.mxu0 %v867
      %1598 = vmatpush2.bf16.msra.mxu0 %v866
      %1599 = vmatprep.subr.bf16.mxu0 %v861
      %1600 = vmatpush2.bf16.msra.mxu0 %v860
      %1601 = vmatprep.subr.bf16.mxu0 %v855
      %1602 = vmatpush2.bf16.msra.mxu0 %v854
      %1603 = vmatprep.mubr.bf16.mxu0 %v1484
      %1604 = vmatmul.mubr.bf16.gmra.mxu0 %v1483
      %v1605 = vpop.f32.mrf.mxu0
      %v1606 = vadd.f32 0.0, %v1605
      %v1607 = vpop.f32.mrf.mxu0
      %v1608 = vadd.f32 0.0, %v1607
      %v1609 = vpop.f32.mrf.mxu0
      %v1610 = vadd.f32 0.0, %v1609
      %v1611 = vpop.f32.mrf.mxu0
      %v1612 = vadd.f32 0.0, %v1611
      %1613 = vdwg.mxu0
      %v1614 = vadd.f32 %v1471, %v1520
      %v1615 = vadd.f32 %v1472, %v1522
      %v1616 = vadd.f32 %v1477, %v1524
      %v1617 = vadd.f32 %v1478, %v1526
      %v1618 = vxor.u32 %v1614, 2147483648
      %v1619 = vxor.u32 %v1615, 2147483648
      %v1620 = vxor.u32 %v1616, 2147483648
      %v1621 = vxor.u32 %v1617, 2147483648
      %v1622 = vmul.f32 %v1618, 1.442695
      %v1623 = vpow.pop %v1622
      %v1624 = vmul.f32 %v1619, 1.442695
      %v1625 = vpow.pop %v1624
      %v1626 = vmul.f32 %v1620, 1.442695
      %v1627 = vpow.pop %v1626
      %v1628 = vmul.f32 %v1621, 1.442695
      %v1629 = vpow.pop %v1628
      %v1630 = vadd.f32 %v1623, 1.0
      %v1631 = vadd.f32 %v1625, 1.0
      %v1632 = vadd.f32 %v1627, 1.0
      %v1633 = vadd.f32 %v1629, 1.0
      %v1634 = vrcp.pop %v1630
      %v1635 = vmul.f32 1.0, %v1634
      %v1636 = vrcp.pop %v1631
      %v1637 = vmul.f32 1.0, %v1636
      %v1638 = vrcp.pop %v1632
      %v1639 = vmul.f32 1.0, %v1638
      %v1640 = vrcp.pop %v1633
      %v1641 = vmul.f32 1.0, %v1640
      %v1642 = vadd.f32 %v1473, %v1563
      %v1643 = vadd.f32 %v1474, %v1565
      %v1644 = vadd.f32 %v1479, %v1567
      %v1645 = vadd.f32 %v1480, %v1569
      %v1646 = vxor.u32 %v1642, 2147483648
      %v1647 = vxor.u32 %v1643, 2147483648
      %v1648 = vxor.u32 %v1644, 2147483648
      %v1649 = vxor.u32 %v1645, 2147483648
      %v1650 = vmul.f32 %v1646, 1.442695
      %v1651 = vpow.pop %v1650
      %v1652 = vmul.f32 %v1647, 1.442695
      %v1653 = vpow.pop %v1652
      %v1654 = vmul.f32 %v1648, 1.442695
      %v1655 = vpow.pop %v1654
      %v1656 = vmul.f32 %v1649, 1.442695
      %v1657 = vpow.pop %v1656
      %v1658 = vadd.f32 %v1651, 1.0
      %v1659 = vadd.f32 %v1653, 1.0
      %v1660 = vadd.f32 %v1655, 1.0
      %v1661 = vadd.f32 %v1657, 1.0
      %v1662 = vrcp.pop %v1658
      %v1663 = vmul.f32 1.0, %v1662
      %v1664 = vrcp.pop %v1659
      %v1665 = vmul.f32 1.0, %v1664
      %v1666 = vrcp.pop %v1660
      %v1667 = vmul.f32 1.0, %v1666
      %v1668 = vrcp.pop %v1661
      %v1669 = vmul.f32 1.0, %v1668
      %v1670 = vadd.f32 %v1606, %v386
      %v1671 = vadd.f32 %v1608, %v390
      %v1672 = vadd.f32 %v1610, %v386
      %v1673 = vadd.f32 %v1612, %v390
      %v1674 = vmul.f32 %v1635, %v1670
      %v1675 = vmul.f32 %v1637, %v1671
      %v1676 = vmul.f32 %v1639, %v1672
      %v1677 = vmul.f32 %v1641, %v1673
      %v1678 = vadd.f32 %v1475, %v1674
      %v1679 = vadd.f32 %v1476, %v1675
      %v1680 = vadd.f32 %v1481, %v1676
      %v1681 = vadd.f32 %v1482, %v1677
      %v1682 = vtanh.pop %v1678
      %v1683 = vtanh.pop %v1679
      %v1684 = vtanh.pop %v1680
      %v1685 = vtanh.pop %v1681
      %v1686 = vsub.f32 1.0, %v1663
      %v1687 = vsub.f32 1.0, %v1665
      %v1688 = vsub.f32 1.0, %v1667
      %v1689 = vsub.f32 1.0, %v1669
      %v1690 = vmul.f32 %v1686, %v1682
      %v1691 = vmul.f32 %v1687, %v1683
      %v1692 = vmul.f32 %v1688, %v1684
      %v1693 = vmul.f32 %v1689, %v1685
      %v1694 = vmul.f32 %v1663, %v1460
      %v1695 = vmul.f32 %v1665, %v1461
      %v1696 = vmul.f32 %v1667, %v1462
      %v1697 = vmul.f32 %v1669, %v1463
      %v1698 = vadd.f32 %v1690, %v1694
      %v1699 = vadd.f32 %v1691, %v1695
      %v1700 = vadd.f32 %v1692, %v1696
      %v1701 = vadd.f32 %v1693, %v1697
      %s1702 = sadd.s32 %s489, 2
      %v1703 = vstv %s1702
      %vm1704 = vcmp.lt.s32.totalorder %v1703, %v377
      %vm1705 = vcmp.lt.s32.totalorder %v1703, %v380
      %v1706 = vsel %vm1704, %v1698, %v1460
      %v1707 = vsel %vm1704, %v1699, %v1461
      %v1708 = vsel %vm1705, %v1700, %v1462
      %v1709 = vsel %vm1705, %v1701, %v1463
      %s1710 = scalar_lea.vmem %s350, 144
      %v1711 = vld [vmem:[%s1710] sm:$0xff]
      %v1712 = vld [vmem:[%s1710 + $0x8] sm:$0xff]
      %v1713 = vld [vmem:[%s1710 + $0x10] sm:$0xff]
      %v1714 = vld [vmem:[%s1710 + $0x18] sm:$0xff]
      %v1715 = vld [vmem:[%s1710 + $0x20] sm:$0xff]
      %v1716 = vld [vmem:[%s1710 + $0x28] sm:$0xff]
      %v1717 = vunpack.c.l.bf16 %v1711
      %v1718 = vunpack.c.h.bf16 %v1711
      %v1719 = vunpack.c.l.bf16 %v1712
      %v1720 = vunpack.c.h.bf16 %v1712
      %v1721 = vunpack.c.l.bf16 %v1713
      %v1722 = vunpack.c.h.bf16 %v1713
      %v1723 = vunpack.c.l.bf16 %v1714
      %v1724 = vunpack.c.h.bf16 %v1714
      %v1725 = vunpack.c.l.bf16 %v1715
      %v1726 = vunpack.c.h.bf16 %v1715
      %v1727 = vunpack.c.l.bf16 %v1716
      %v1728 = vunpack.c.h.bf16 %v1716
      %v1729 = vpack.c.bf16 %v1708, %v1706
      %v1730 = vpack.c.bf16 %v1709, %v1707
      %1731 = vmatprep.subr.bf16.mxu0 %v845
      %1732 = vmatpush1.bf16.msra.mxu0 %v844
      %1733 = vmatprep.subr.bf16.mxu0 %v839
      %1734 = vmatpush1.bf16.msra.mxu0 %v838
      %1735 = vmatprep.subr.bf16.mxu0 %v833
      %1736 = vmatpush1.bf16.msra.mxu0 %v832
      %1737 = vmatprep.subr.bf16.mxu0 %v827
      %1738 = vmatpush1.bf16.msra.mxu0 %v826
      %1739 = vmatprep.subr.bf16.mxu0 %v821
      %1740 = vmatpush1.bf16.msra.mxu0 %v820
      %1741 = vmatprep.subr.bf16.mxu0 %v815
      %1742 = vmatpush1.bf16.msra.mxu0 %v814
      %1743 = vmatprep.subr.bf16.mxu0 %v809
      %1744 = vmatpush1.bf16.msra.mxu0 %v808
      %1745 = vmatprep.subr.bf16.mxu0 %v803
      %1746 = vmatpush1.bf16.msra.mxu0 %v802
      %1747 = vmatprep.subr.bf16.mxu0 %v893
      %1748 = vmatpush2.bf16.msra.mxu0 %v892
      %1749 = vmatprep.subr.bf16.mxu0 %v887
      %1750 = vmatpush2.bf16.msra.mxu0 %v886
      %1751 = vmatprep.subr.bf16.mxu0 %v881
      %1752 = vmatpush2.bf16.msra.mxu0 %v880
      %1753 = vmatprep.subr.bf16.mxu0 %v875
      %1754 = vmatpush2.bf16.msra.mxu0 %v874
      %1755 = vmatprep.subr.bf16.mxu0 %v869
      %1756 = vmatpush2.bf16.msra.mxu0 %v868
      %1757 = vmatprep.subr.bf16.mxu0 %v863
      %1758 = vmatpush2.bf16.msra.mxu0 %v862
      %1759 = vmatprep.subr.bf16.mxu0 %v857
      %1760 = vmatpush2.bf16.msra.mxu0 %v856
      %1761 = vmatprep.subr.bf16.mxu0 %v851
      %1762 = vmatpush2.bf16.msra.mxu0 %v850
      %1763 = vmatprep.mubr.bf16.mxu0 %v1730
      %1764 = vmatmul.mubr.bf16.gmra.mxu0 %v1729
      %v1765 = vpop.f32.mrf.mxu0
      %v1766 = vadd.f32 0.0, %v1765
      %v1767 = vpop.f32.mrf.mxu0
      %v1768 = vadd.f32 0.0, %v1767
      %v1769 = vpop.f32.mrf.mxu0
      %v1770 = vadd.f32 0.0, %v1769
      %v1771 = vpop.f32.mrf.mxu0
      %v1772 = vadd.f32 0.0, %v1771
      %1773 = vdwg.mxu0
      %1774 = vmatprep.subr.bf16.mxu0 %v847
      %1775 = vmatpush1.bf16.msra.mxu0 %v846
      %1776 = vmatprep.subr.bf16.mxu0 %v841
      %1777 = vmatpush1.bf16.msra.mxu0 %v840
      %1778 = vmatprep.subr.bf16.mxu0 %v835
      %1779 = vmatpush1.bf16.msra.mxu0 %v834
      %1780 = vmatprep.subr.bf16.mxu0 %v829
      %1781 = vmatpush1.bf16.msra.mxu0 %v828
      %1782 = vmatprep.subr.bf16.mxu0 %v823
      %1783 = vmatpush1.bf16.msra.mxu0 %v822
      %1784 = vmatprep.subr.bf16.mxu0 %v817
      %1785 = vmatpush1.bf16.msra.mxu0 %v816
      %1786 = vmatprep.subr.bf16.mxu0 %v811
      %1787 = vmatpush1.bf16.msra.mxu0 %v810
      %1788 = vmatprep.subr.bf16.mxu0 %v805
      %1789 = vmatpush1.bf16.msra.mxu0 %v804
      %1790 = vmatprep.subr.bf16.mxu0 %v895
      %1791 = vmatpush2.bf16.msra.mxu0 %v894
      %1792 = vmatprep.subr.bf16.mxu0 %v889
      %1793 = vmatpush2.bf16.msra.mxu0 %v888
      %1794 = vmatprep.subr.bf16.mxu0 %v883
      %1795 = vmatpush2.bf16.msra.mxu0 %v882
      %1796 = vmatprep.subr.bf16.mxu0 %v877
      %1797 = vmatpush2.bf16.msra.mxu0 %v876
      %1798 = vmatprep.subr.bf16.mxu0 %v871
      %1799 = vmatpush2.bf16.msra.mxu0 %v870
      %1800 = vmatprep.subr.bf16.mxu0 %v865
      %1801 = vmatpush2.bf16.msra.mxu0 %v864
      %1802 = vmatprep.subr.bf16.mxu0 %v859
      %1803 = vmatpush2.bf16.msra.mxu0 %v858
      %1804 = vmatprep.subr.bf16.mxu0 %v853
      %1805 = vmatpush2.bf16.msra.mxu0 %v852
      %1806 = vmatprep.mubr.bf16.mxu0 %v1730
      %1807 = vmatmul.mubr.bf16.gmra.mxu0 %v1729
      %v1808 = vpop.f32.mrf.mxu0
      %v1809 = vadd.f32 0.0, %v1808
      %v1810 = vpop.f32.mrf.mxu0
      %v1811 = vadd.f32 0.0, %v1810
      %v1812 = vpop.f32.mrf.mxu0
      %v1813 = vadd.f32 0.0, %v1812
      %v1814 = vpop.f32.mrf.mxu0
      %v1815 = vadd.f32 0.0, %v1814
      %1816 = vdwg.mxu0
      %1817 = vmatprep.subr.bf16.mxu0 %v849
      %1818 = vmatpush1.bf16.msra.mxu0 %v848
      %1819 = vmatprep.subr.bf16.mxu0 %v843
      %1820 = vmatpush1.bf16.msra.mxu0 %v842
      %1821 = vmatprep.subr.bf16.mxu0 %v837
      %1822 = vmatpush1.bf16.msra.mxu0 %v836
      %1823 = vmatprep.subr.bf16.mxu0 %v831
      %1824 = vmatpush1.bf16.msra.mxu0 %v830
      %1825 = vmatprep.subr.bf16.mxu0 %v825
      %1826 = vmatpush1.bf16.msra.mxu0 %v824
      %1827 = vmatprep.subr.bf16.mxu0 %v819
      %1828 = vmatpush1.bf16.msra.mxu0 %v818
      %1829 = vmatprep.subr.bf16.mxu0 %v813
      %1830 = vmatpush1.bf16.msra.mxu0 %v812
      %1831 = vmatprep.subr.bf16.mxu0 %v807
      %1832 = vmatpush1.bf16.msra.mxu0 %v806
      %1833 = vmatprep.subr.bf16.mxu0 %v897
      %1834 = vmatpush2.bf16.msra.mxu0 %v896
      %1835 = vmatprep.subr.bf16.mxu0 %v891
      %1836 = vmatpush2.bf16.msra.mxu0 %v890
      %1837 = vmatprep.subr.bf16.mxu0 %v885
      %1838 = vmatpush2.bf16.msra.mxu0 %v884
      %1839 = vmatprep.subr.bf16.mxu0 %v879
      %1840 = vmatpush2.bf16.msra.mxu0 %v878
      %1841 = vmatprep.subr.bf16.mxu0 %v873
      %1842 = vmatpush2.bf16.msra.mxu0 %v872
      %1843 = vmatprep.subr.bf16.mxu0 %v867
      %1844 = vmatpush2.bf16.msra.mxu0 %v866
      %1845 = vmatprep.subr.bf16.mxu0 %v861
      %1846 = vmatpush2.bf16.msra.mxu0 %v860
      %1847 = vmatprep.subr.bf16.mxu0 %v855
      %1848 = vmatpush2.bf16.msra.mxu0 %v854
      %1849 = vmatprep.mubr.bf16.mxu0 %v1730
      %1850 = vmatmul.mubr.bf16.gmra.mxu0 %v1729
      %v1851 = vpop.f32.mrf.mxu0
      %v1852 = vadd.f32 0.0, %v1851
      %v1853 = vpop.f32.mrf.mxu0
      %v1854 = vadd.f32 0.0, %v1853
      %v1855 = vpop.f32.mrf.mxu0
      %v1856 = vadd.f32 0.0, %v1855
      %v1857 = vpop.f32.mrf.mxu0
      %v1858 = vadd.f32 0.0, %v1857
      %1859 = vdwg.mxu0
      %v1860 = vadd.f32 %v1717, %v1766
      %v1861 = vadd.f32 %v1718, %v1768
      %v1862 = vadd.f32 %v1723, %v1770
      %v1863 = vadd.f32 %v1724, %v1772
      %v1864 = vxor.u32 %v1860, 2147483648
      %v1865 = vxor.u32 %v1861, 2147483648
      %v1866 = vxor.u32 %v1862, 2147483648
      %v1867 = vxor.u32 %v1863, 2147483648
      %v1868 = vmul.f32 %v1864, 1.442695
      %v1869 = vpow.pop %v1868
      %v1870 = vmul.f32 %v1865, 1.442695
      %v1871 = vpow.pop %v1870
      %v1872 = vmul.f32 %v1866, 1.442695
      %v1873 = vpow.pop %v1872
      %v1874 = vmul.f32 %v1867, 1.442695
      %v1875 = vpow.pop %v1874
      %v1876 = vadd.f32 %v1869, 1.0
      %v1877 = vadd.f32 %v1871, 1.0
      %v1878 = vadd.f32 %v1873, 1.0
      %v1879 = vadd.f32 %v1875, 1.0
      %v1880 = vrcp.pop %v1876
      %v1881 = vmul.f32 1.0, %v1880
      %v1882 = vrcp.pop %v1877
      %v1883 = vmul.f32 1.0, %v1882
      %v1884 = vrcp.pop %v1878
      %v1885 = vmul.f32 1.0, %v1884
      %v1886 = vrcp.pop %v1879
      %v1887 = vmul.f32 1.0, %v1886
      %v1888 = vadd.f32 %v1719, %v1809
      %v1889 = vadd.f32 %v1720, %v1811
      %v1890 = vadd.f32 %v1725, %v1813
      %v1891 = vadd.f32 %v1726, %v1815
      %v1892 = vxor.u32 %v1888, 2147483648
      %v1893 = vxor.u32 %v1889, 2147483648
      %v1894 = vxor.u32 %v1890, 2147483648
      %v1895 = vxor.u32 %v1891, 2147483648
      %v1896 = vmul.f32 %v1892, 1.442695
      %v1897 = vpow.pop %v1896
      %v1898 = vmul.f32 %v1893, 1.442695
      %v1899 = vpow.pop %v1898
      %v1900 = vmul.f32 %v1894, 1.442695
      %v1901 = vpow.pop %v1900
      %v1902 = vmul.f32 %v1895, 1.442695
      %v1903 = vpow.pop %v1902
      %v1904 = vadd.f32 %v1897, 1.0
      %v1905 = vadd.f32 %v1899, 1.0
      %v1906 = vadd.f32 %v1901, 1.0
      %v1907 = vadd.f32 %v1903, 1.0
      %v1908 = vrcp.pop %v1904
      %v1909 = vmul.f32 1.0, %v1908
      %v1910 = vrcp.pop %v1905
      %v1911 = vmul.f32 1.0, %v1910
      %v1912 = vrcp.pop %v1906
      %v1913 = vmul.f32 1.0, %v1912
      %v1914 = vrcp.pop %v1907
      %v1915 = vmul.f32 1.0, %v1914
      %v1916 = vadd.f32 %v1852, %v386
      %v1917 = vadd.f32 %v1854, %v390
      %v1918 = vadd.f32 %v1856, %v386
      %v1919 = vadd.f32 %v1858, %v390
      %v1920 = vmul.f32 %v1881, %v1916
      %v1921 = vmul.f32 %v1883, %v1917
      %v1922 = vmul.f32 %v1885, %v1918
      %v1923 = vmul.f32 %v1887, %v1919
      %v1924 = vadd.f32 %v1721, %v1920
      %v1925 = vadd.f32 %v1722, %v1921
      %v1926 = vadd.f32 %v1727, %v1922
      %v1927 = vadd.f32 %v1728, %v1923
      %v1928 = vtanh.pop %v1924
      %v1929 = vtanh.pop %v1925
      %v1930 = vtanh.pop %v1926
      %v1931 = vtanh.pop %v1927
      %v1932 = vsub.f32 1.0, %v1909
      %v1933 = vsub.f32 1.0, %v1911
      %v1934 = vsub.f32 1.0, %v1913
      %v1935 = vsub.f32 1.0, %v1915
      %v1936 = vmul.f32 %v1932, %v1928
      %v1937 = vmul.f32 %v1933, %v1929
      %v1938 = vmul.f32 %v1934, %v1930
      %v1939 = vmul.f32 %v1935, %v1931
      %v1940 = vmul.f32 %v1909, %v1706
      %v1941 = vmul.f32 %v1911, %v1707
      %v1942 = vmul.f32 %v1913, %v1708
      %v1943 = vmul.f32 %v1915, %v1709
      %v1944 = vadd.f32 %v1936, %v1940
      %v1945 = vadd.f32 %v1937, %v1941
      %v1946 = vadd.f32 %v1938, %v1942
      %v1947 = vadd.f32 %v1939, %v1943
      %s1948 = sadd.s32 %s489, 3
      %v1949 = vstv %s1948
      %vm1950 = vcmp.lt.s32.totalorder %v1949, %v377
      %vm1951 = vcmp.lt.s32.totalorder %v1949, %v380
      %v1952 = vsel %vm1950, %v1944, %v1706
      %v1953 = vsel %vm1950, %v1945, %v1707
      %v1954 = vsel %vm1951, %v1946, %v1708
      %v1955 = vsel %vm1951, %v1947, %v1709
      %s1956 = scalar_lea.vmem %s350, 192
      %v1957 = vld [vmem:[%s1956] sm:$0xff]
      %v1958 = vld [vmem:[%s1956 + $0x8] sm:$0xff]
      %v1959 = vld [vmem:[%s1956 + $0x10] sm:$0xff]
      %v1960 = vld [vmem:[%s1956 + $0x18] sm:$0xff]
      %v1961 = vld [vmem:[%s1956 + $0x20] sm:$0xff]
      %v1962 = vld [vmem:[%s1956 + $0x28] sm:$0xff]
      %v1963 = vunpack.c.l.bf16 %v1957
      %v1964 = vunpack.c.h.bf16 %v1957
      %v1965 = vunpack.c.l.bf16 %v1958
      %v1966 = vunpack.c.h.bf16 %v1958
      %v1967 = vunpack.c.l.bf16 %v1959
      %v1968 = vunpack.c.h.bf16 %v1959
      %v1969 = vunpack.c.l.bf16 %v1960
      %v1970 = vunpack.c.h.bf16 %v1960
      %v1971 = vunpack.c.l.bf16 %v1961
      %v1972 = vunpack.c.h.bf16 %v1961
      %v1973 = vunpack.c.l.bf16 %v1962
      %v1974 = vunpack.c.h.bf16 %v1962
      %v1975 = vpack.c.bf16 %v1954, %v1952
      %v1976 = vpack.c.bf16 %v1955, %v1953
      %1977 = vmatprep.subr.bf16.mxu0 %v845
      %1978 = vmatpush1.bf16.msra.mxu0 %v844
      %1979 = vmatprep.subr.bf16.mxu0 %v839
      %1980 = vmatpush1.bf16.msra.mxu0 %v838
      %1981 = vmatprep.subr.bf16.mxu0 %v833
      %1982 = vmatpush1.bf16.msra.mxu0 %v832
      %1983 = vmatprep.subr.bf16.mxu0 %v827
      %1984 = vmatpush1.bf16.msra.mxu0 %v826
      %1985 = vmatprep.subr.bf16.mxu0 %v821
      %1986 = vmatpush1.bf16.msra.mxu0 %v820
      %1987 = vmatprep.subr.bf16.mxu0 %v815
      %1988 = vmatpush1.bf16.msra.mxu0 %v814
      %1989 = vmatprep.subr.bf16.mxu0 %v809
      %1990 = vmatpush1.bf16.msra.mxu0 %v808
      %1991 = vmatprep.subr.bf16.mxu0 %v803
      %1992 = vmatpush1.bf16.msra.mxu0 %v802
      %1993 = vmatprep.subr.bf16.mxu0 %v893
      %1994 = vmatpush2.bf16.msra.mxu0 %v892
      %1995 = vmatprep.subr.bf16.mxu0 %v887
      %1996 = vmatpush2.bf16.msra.mxu0 %v886
      %1997 = vmatprep.subr.bf16.mxu0 %v881
      %1998 = vmatpush2.bf16.msra.mxu0 %v880
      %1999 = vmatprep.subr.bf16.mxu0 %v875
      %2000 = vmatpush2.bf16.msra.mxu0 %v874
      %2001 = vmatprep.subr.bf16.mxu0 %v869
      %2002 = vmatpush2.bf16.msra.mxu0 %v868
      %2003 = vmatprep.subr.bf16.mxu0 %v863
      %2004 = vmatpush2.bf16.msra.mxu0 %v862
      %2005 = vmatprep.subr.bf16.mxu0 %v857
      %2006 = vmatpush2.bf16.msra.mxu0 %v856
      %2007 = vmatprep.subr.bf16.mxu0 %v851
      %2008 = vmatpush2.bf16.msra.mxu0 %v850
      %2009 = vmatprep.mubr.bf16.mxu0 %v1976
      %2010 = vmatmul.mubr.bf16.gmra.mxu0 %v1975
      %v2011 = vpop.f32.mrf.mxu0
      %v2012 = vadd.f32 0.0, %v2011
      %v2013 = vpop.f32.mrf.mxu0
      %v2014 = vadd.f32 0.0, %v2013
      %v2015 = vpop.f32.mrf.mxu0
      %v2016 = vadd.f32 0.0, %v2015
      %v2017 = vpop.f32.mrf.mxu0
      %v2018 = vadd.f32 0.0, %v2017
      %2019 = vdwg.mxu0
      %2020 = vmatprep.subr.bf16.mxu0 %v847
      %2021 = vmatpush1.bf16.msra.mxu0 %v846
      %2022 = vmatprep.subr.bf16.mxu0 %v841
      %2023 = vmatpush1.bf16.msra.mxu0 %v840
      %2024 = vmatprep.subr.bf16.mxu0 %v835
      %2025 = vmatpush1.bf16.msra.mxu0 %v834
      %2026 = vmatprep.subr.bf16.mxu0 %v829
      %2027 = vmatpush1.bf16.msra.mxu0 %v828
      %2028 = vmatprep.subr.bf16.mxu0 %v823
      %2029 = vmatpush1.bf16.msra.mxu0 %v822
      %2030 = vmatprep.subr.bf16.mxu0 %v817
      %2031 = vmatpush1.bf16.msra.mxu0 %v816
      %2032 = vmatprep.subr.bf16.mxu0 %v811
      %2033 = vmatpush1.bf16.msra.mxu0 %v810
      %2034 = vmatprep.subr.bf16.mxu0 %v805
      %2035 = vmatpush1.bf16.msra.mxu0 %v804
      %2036 = vmatprep.subr.bf16.mxu0 %v895
      %2037 = vmatpush2.bf16.msra.mxu0 %v894
      %2038 = vmatprep.subr.bf16.mxu0 %v889
      %2039 = vmatpush2.bf16.msra.mxu0 %v888
      %2040 = vmatprep.subr.bf16.mxu0 %v883
      %2041 = vmatpush2.bf16.msra.mxu0 %v882
      %2042 = vmatprep.subr.bf16.mxu0 %v877
      %2043 = vmatpush2.bf16.msra.mxu0 %v876
      %2044 = vmatprep.subr.bf16.mxu0 %v871
      %2045 = vmatpush2.bf16.msra.mxu0 %v870
      %2046 = vmatprep.subr.bf16.mxu0 %v865
      %2047 = vmatpush2.bf16.msra.mxu0 %v864
      %2048 = vmatprep.subr.bf16.mxu0 %v859
      %2049 = vmatpush2.bf16.msra.mxu0 %v858
      %2050 = vmatprep.subr.bf16.mxu0 %v853
      %2051 = vmatpush2.bf16.msra.mxu0 %v852
      %2052 = vmatprep.mubr.bf16.mxu0 %v1976
      %2053 = vmatmul.mubr.bf16.gmra.mxu0 %v1975
      %v2054 = vpop.f32.mrf.mxu0
      %v2055 = vadd.f32 0.0, %v2054
      %v2056 = vpop.f32.mrf.mxu0
      %v2057 = vadd.f32 0.0, %v2056
      %v2058 = vpop.f32.mrf.mxu0
      %v2059 = vadd.f32 0.0, %v2058
      %v2060 = vpop.f32.mrf.mxu0
      %v2061 = vadd.f32 0.0, %v2060
      %2062 = vdwg.mxu0
      %2063 = vmatprep.subr.bf16.mxu0 %v849
      %2064 = vmatpush1.bf16.msra.mxu0 %v848
      %2065 = vmatprep.subr.bf16.mxu0 %v843
      %2066 = vmatpush1.bf16.msra.mxu0 %v842
      %2067 = vmatprep.subr.bf16.mxu0 %v837
      %2068 = vmatpush1.bf16.msra.mxu0 %v836
      %2069 = vmatprep.subr.bf16.mxu0 %v831
      %2070 = vmatpush1.bf16.msra.mxu0 %v830
      %2071 = vmatprep.subr.bf16.mxu0 %v825
      %2072 = vmatpush1.bf16.msra.mxu0 %v824
      %2073 = vmatprep.subr.bf16.mxu0 %v819
      %2074 = vmatpush1.bf16.msra.mxu0 %v818
      %2075 = vmatprep.subr.bf16.mxu0 %v813
      %2076 = vmatpush1.bf16.msra.mxu0 %v812
      %2077 = vmatprep.subr.bf16.mxu0 %v807
      %2078 = vmatpush1.bf16.msra.mxu0 %v806
      %2079 = vmatprep.subr.bf16.mxu0 %v897
      %2080 = vmatpush2.bf16.msra.mxu0 %v896
      %2081 = vmatprep.subr.bf16.mxu0 %v891
      %2082 = vmatpush2.bf16.msra.mxu0 %v890
      %2083 = vmatprep.subr.bf16.mxu0 %v885
      %2084 = vmatpush2.bf16.msra.mxu0 %v884
      %2085 = vmatprep.subr.bf16.mxu0 %v879
      %2086 = vmatpush2.bf16.msra.mxu0 %v878
      %2087 = vmatprep.subr.bf16.mxu0 %v873
      %2088 = vmatpush2.bf16.msra.mxu0 %v872
      %2089 = vmatprep.subr.bf16.mxu0 %v867
      %2090 = vmatpush2.bf16.msra.mxu0 %v866
      %2091 = vmatprep.subr.bf16.mxu0 %v861
      %2092 = vmatpush2.bf16.msra.mxu0 %v860
      %2093 = vmatprep.subr.bf16.mxu0 %v855
      %2094 = vmatpush2.bf16.msra.mxu0 %v854
      %2095 = vmatprep.mubr.bf16.mxu0 %v1976
      %2096 = vmatmul.mubr.bf16.gmra.mxu0 %v1975
      %v2097 = vpop.f32.mrf.mxu0
      %v2098 = vadd.f32 0.0, %v2097
      %v2099 = vpop.f32.mrf.mxu0
      %v2100 = vadd.f32 0.0, %v2099
      %v2101 = vpop.f32.mrf.mxu0
      %v2102 = vadd.f32 0.0, %v2101
      %v2103 = vpop.f32.mrf.mxu0
      %v2104 = vadd.f32 0.0, %v2103
      %2105 = vdwg.mxu0
      %v2106 = vadd.f32 %v1963, %v2012
      %v2107 = vadd.f32 %v1964, %v2014
      %v2108 = vadd.f32 %v1969, %v2016
      %v2109 = vadd.f32 %v1970, %v2018
      %v2110 = vxor.u32 %v2106, 2147483648
      %v2111 = vxor.u32 %v2107, 2147483648
      %v2112 = vxor.u32 %v2108, 2147483648
      %v2113 = vxor.u32 %v2109, 2147483648
      %v2114 = vmul.f32 %v2110, 1.442695
      %v2115 = vpow.pop %v2114
      %v2116 = vmul.f32 %v2111, 1.442695
      %v2117 = vpow.pop %v2116
      %v2118 = vmul.f32 %v2112, 1.442695
      %v2119 = vpow.pop %v2118
      %v2120 = vmul.f32 %v2113, 1.442695
      %v2121 = vpow.pop %v2120
      %v2122 = vadd.f32 %v2115, 1.0
      %v2123 = vadd.f32 %v2117, 1.0
      %v2124 = vadd.f32 %v2119, 1.0
      %v2125 = vadd.f32 %v2121, 1.0
      %v2126 = vrcp.pop %v2122
      %v2127 = vmul.f32 1.0, %v2126
      %v2128 = vrcp.pop %v2123
      %v2129 = vmul.f32 1.0, %v2128
      %v2130 = vrcp.pop %v2124
      %v2131 = vmul.f32 1.0, %v2130
      %v2132 = vrcp.pop %v2125
      %v2133 = vmul.f32 1.0, %v2132
      %v2134 = vadd.f32 %v1965, %v2055
      %v2135 = vadd.f32 %v1966, %v2057
      %v2136 = vadd.f32 %v1971, %v2059
      %v2137 = vadd.f32 %v1972, %v2061
      %v2138 = vxor.u32 %v2134, 2147483648
      %v2139 = vxor.u32 %v2135, 2147483648
      %v2140 = vxor.u32 %v2136, 2147483648
      %v2141 = vxor.u32 %v2137, 2147483648
      %v2142 = vmul.f32 %v2138, 1.442695
      %v2143 = vpow.pop %v2142
      %v2144 = vmul.f32 %v2139, 1.442695
      %v2145 = vpow.pop %v2144
      %v2146 = vmul.f32 %v2140, 1.442695
      %v2147 = vpow.pop %v2146
      %v2148 = vmul.f32 %v2141, 1.442695
      %v2149 = vpow.pop %v2148
      %v2150 = vadd.f32 %v2143, 1.0
      %v2151 = vadd.f32 %v2145, 1.0
      %v2152 = vadd.f32 %v2147, 1.0
      %v2153 = vadd.f32 %v2149, 1.0
      %v2154 = vrcp.pop %v2150
      %v2155 = vmul.f32 1.0, %v2154
      %v2156 = vrcp.pop %v2151
      %v2157 = vmul.f32 1.0, %v2156
      %v2158 = vrcp.pop %v2152
      %v2159 = vmul.f32 1.0, %v2158
      %v2160 = vrcp.pop %v2153
      %v2161 = vmul.f32 1.0, %v2160
      %v2162 = vadd.f32 %v2098, %v386
      %v2163 = vadd.f32 %v2100, %v390
      %v2164 = vadd.f32 %v2102, %v386
      %v2165 = vadd.f32 %v2104, %v390
      %v2166 = vmul.f32 %v2127, %v2162
      %v2167 = vmul.f32 %v2129, %v2163
      %v2168 = vmul.f32 %v2131, %v2164
      %v2169 = vmul.f32 %v2133, %v2165
      %v2170 = vadd.f32 %v1967, %v2166
      %v2171 = vadd.f32 %v1968, %v2167
      %v2172 = vadd.f32 %v1973, %v2168
      %v2173 = vadd.f32 %v1974, %v2169
      %v2174 = vtanh.pop %v2170
      %v2175 = vtanh.pop %v2171
      %v2176 = vtanh.pop %v2172
      %v2177 = vtanh.pop %v2173
      %v2178 = vsub.f32 1.0, %v2155
      %v2179 = vsub.f32 1.0, %v2157
      %v2180 = vsub.f32 1.0, %v2159
      %v2181 = vsub.f32 1.0, %v2161
      %v2182 = vmul.f32 %v2178, %v2174
      %v2183 = vmul.f32 %v2179, %v2175
      %v2184 = vmul.f32 %v2180, %v2176
      %v2185 = vmul.f32 %v2181, %v2177
      %v2186 = vmul.f32 %v2155, %v1952
      %v2187 = vmul.f32 %v2157, %v1953
      %v2188 = vmul.f32 %v2159, %v1954
      %v2189 = vmul.f32 %v2161, %v1955
      %v2190 = vadd.f32 %v2182, %v2186
      %v2191 = vadd.f32 %v2183, %v2187
      %v2192 = vadd.f32 %v2184, %v2188
      %v2193 = vadd.f32 %v2185, %v2189
      %s2194 = sadd.s32 %s489, 4
      %v2195 = vstv %s2194
      %vm2196 = vcmp.lt.s32.totalorder %v2195, %v377
      %vm2197 = vcmp.lt.s32.totalorder %v2195, %v380
      %v2198 = vsel %vm2196, %v2190, %v1952
      %v2199 = vsel %vm2196, %v2191, %v1953
      %v2200 = vsel %vm2197, %v2192, %v1954
      %v2201 = vsel %vm2197, %v2193, %v1955
      %s2202 = scalar_lea.vmem %s350, 240
      %v2203 = vld [vmem:[%s2202] sm:$0xff]
      %v2204 = vld [vmem:[%s2202 + $0x8] sm:$0xff]
      %v2205 = vld [vmem:[%s2202 + $0x10] sm:$0xff]
      %v2206 = vld [vmem:[%s2202 + $0x18] sm:$0xff]
      %v2207 = vld [vmem:[%s2202 + $0x20] sm:$0xff]
      %v2208 = vld [vmem:[%s2202 + $0x28] sm:$0xff]
      %v2209 = vunpack.c.l.bf16 %v2203
      %v2210 = vunpack.c.h.bf16 %v2203
      %v2211 = vunpack.c.l.bf16 %v2204
      %v2212 = vunpack.c.h.bf16 %v2204
      %v2213 = vunpack.c.l.bf16 %v2205
      %v2214 = vunpack.c.h.bf16 %v2205
      %v2215 = vunpack.c.l.bf16 %v2206
      %v2216 = vunpack.c.h.bf16 %v2206
      %v2217 = vunpack.c.l.bf16 %v2207
      %v2218 = vunpack.c.h.bf16 %v2207
      %v2219 = vunpack.c.l.bf16 %v2208
      %v2220 = vunpack.c.h.bf16 %v2208
      %v2221 = vpack.c.bf16 %v2200, %v2198
      %v2222 = vpack.c.bf16 %v2201, %v2199
      %2223 = vmatprep.subr.bf16.mxu0 %v845
      %2224 = vmatpush1.bf16.msra.mxu0 %v844
      %2225 = vmatprep.subr.bf16.mxu0 %v839
      %2226 = vmatpush1.bf16.msra.mxu0 %v838
      %2227 = vmatprep.subr.bf16.mxu0 %v833
      %2228 = vmatpush1.bf16.msra.mxu0 %v832
      %2229 = vmatprep.subr.bf16.mxu0 %v827
      %2230 = vmatpush1.bf16.msra.mxu0 %v826
      %2231 = vmatprep.subr.bf16.mxu0 %v821
      %2232 = vmatpush1.bf16.msra.mxu0 %v820
      %2233 = vmatprep.subr.bf16.mxu0 %v815
      %2234 = vmatpush1.bf16.msra.mxu0 %v814
      %2235 = vmatprep.subr.bf16.mxu0 %v809
      %2236 = vmatpush1.bf16.msra.mxu0 %v808
      %2237 = vmatprep.subr.bf16.mxu0 %v803
      %2238 = vmatpush1.bf16.msra.mxu0 %v802
      %2239 = vmatprep.subr.bf16.mxu0 %v893
      %2240 = vmatpush2.bf16.msra.mxu0 %v892
      %2241 = vmatprep.subr.bf16.mxu0 %v887
      %2242 = vmatpush2.bf16.msra.mxu0 %v886
      %2243 = vmatprep.subr.bf16.mxu0 %v881
      %2244 = vmatpush2.bf16.msra.mxu0 %v880
      %2245 = vmatprep.subr.bf16.mxu0 %v875
      %2246 = vmatpush2.bf16.msra.mxu0 %v874
      %2247 = vmatprep.subr.bf16.mxu0 %v869
      %2248 = vmatpush2.bf16.msra.mxu0 %v868
      %2249 = vmatprep.subr.bf16.mxu0 %v863
      %2250 = vmatpush2.bf16.msra.mxu0 %v862
      %2251 = vmatprep.subr.bf16.mxu0 %v857
      %2252 = vmatpush2.bf16.msra.mxu0 %v856
      %2253 = vmatprep.subr.bf16.mxu0 %v851
      %2254 = vmatpush2.bf16.msra.mxu0 %v850
      %2255 = vmatprep.mubr.bf16.mxu0 %v2222
      %2256 = vmatmul.mubr.bf16.gmra.mxu0 %v2221
      %v2257 = vpop.f32.mrf.mxu0
      %v2258 = vadd.f32 0.0, %v2257
      %v2259 = vpop.f32.mrf.mxu0
      %v2260 = vadd.f32 0.0, %v2259
      %v2261 = vpop.f32.mrf.mxu0
      %v2262 = vadd.f32 0.0, %v2261
      %v2263 = vpop.f32.mrf.mxu0
      %v2264 = vadd.f32 0.0, %v2263
      %2265 = vdwg.mxu0
      %2266 = vmatprep.subr.bf16.mxu0 %v847
      %2267 = vmatpush1.bf16.msra.mxu0 %v846
      %2268 = vmatprep.subr.bf16.mxu0 %v841
      %2269 = vmatpush1.bf16.msra.mxu0 %v840
      %2270 = vmatprep.subr.bf16.mxu0 %v835
      %2271 = vmatpush1.bf16.msra.mxu0 %v834
      %2272 = vmatprep.subr.bf16.mxu0 %v829
      %2273 = vmatpush1.bf16.msra.mxu0 %v828
      %2274 = vmatprep.subr.bf16.mxu0 %v823
      %2275 = vmatpush1.bf16.msra.mxu0 %v822
      %2276 = vmatprep.subr.bf16.mxu0 %v817
      %2277 = vmatpush1.bf16.msra.mxu0 %v816
      %2278 = vmatprep.subr.bf16.mxu0 %v811
      %2279 = vmatpush1.bf16.msra.mxu0 %v810
      %2280 = vmatprep.subr.bf16.mxu0 %v805
      %2281 = vmatpush1.bf16.msra.mxu0 %v804
      %2282 = vmatprep.subr.bf16.mxu0 %v895
      %2283 = vmatpush2.bf16.msra.mxu0 %v894
      %2284 = vmatprep.subr.bf16.mxu0 %v889
      %2285 = vmatpush2.bf16.msra.mxu0 %v888
      %2286 = vmatprep.subr.bf16.mxu0 %v883
      %2287 = vmatpush2.bf16.msra.mxu0 %v882
      %2288 = vmatprep.subr.bf16.mxu0 %v877
      %2289 = vmatpush2.bf16.msra.mxu0 %v876
      %2290 = vmatprep.subr.bf16.mxu0 %v871
      %2291 = vmatpush2.bf16.msra.mxu0 %v870
      %2292 = vmatprep.subr.bf16.mxu0 %v865
      %2293 = vmatpush2.bf16.msra.mxu0 %v864
      %2294 = vmatprep.subr.bf16.mxu0 %v859
      %2295 = vmatpush2.bf16.msra.mxu0 %v858
      %2296 = vmatprep.subr.bf16.mxu0 %v853
      %2297 = vmatpush2.bf16.msra.mxu0 %v852
      %2298 = vmatprep.mubr.bf16.mxu0 %v2222
      %2299 = vmatmul.mubr.bf16.gmra.mxu0 %v2221
      %v2300 = vpop.f32.mrf.mxu0
      %v2301 = vadd.f32 0.0, %v2300
      %v2302 = vpop.f32.mrf.mxu0
      %v2303 = vadd.f32 0.0, %v2302
      %v2304 = vpop.f32.mrf.mxu0
      %v2305 = vadd.f32 0.0, %v2304
      %v2306 = vpop.f32.mrf.mxu0
      %v2307 = vadd.f32 0.0, %v2306
      %2308 = vdwg.mxu0
      %2309 = vmatprep.subr.bf16.mxu0 %v849
      %2310 = vmatpush1.bf16.msra.mxu0 %v848
      %2311 = vmatprep.subr.bf16.mxu0 %v843
      %2312 = vmatpush1.bf16.msra.mxu0 %v842
      %2313 = vmatprep.subr.bf16.mxu0 %v837
      %2314 = vmatpush1.bf16.msra.mxu0 %v836
      %2315 = vmatprep.subr.bf16.mxu0 %v831
      %2316 = vmatpush1.bf16.msra.mxu0 %v830
      %2317 = vmatprep.subr.bf16.mxu0 %v825
      %2318 = vmatpush1.bf16.msra.mxu0 %v824
      %2319 = vmatprep.subr.bf16.mxu0 %v819
      %2320 = vmatpush1.bf16.msra.mxu0 %v818
      %2321 = vmatprep.subr.bf16.mxu0 %v813
      %2322 = vmatpush1.bf16.msra.mxu0 %v812
      %2323 = vmatprep.subr.bf16.mxu0 %v807
      %2324 = vmatpush1.bf16.msra.mxu0 %v806
      %2325 = vmatprep.subr.bf16.mxu0 %v897
      %2326 = vmatpush2.bf16.msra.mxu0 %v896
      %2327 = vmatprep.subr.bf16.mxu0 %v891
      %2328 = vmatpush2.bf16.msra.mxu0 %v890
      %2329 = vmatprep.subr.bf16.mxu0 %v885
      %2330 = vmatpush2.bf16.msra.mxu0 %v884
      %2331 = vmatprep.subr.bf16.mxu0 %v879
      %2332 = vmatpush2.bf16.msra.mxu0 %v878
      %2333 = vmatprep.subr.bf16.mxu0 %v873
      %2334 = vmatpush2.bf16.msra.mxu0 %v872
      %2335 = vmatprep.subr.bf16.mxu0 %v867
      %2336 = vmatpush2.bf16.msra.mxu0 %v866
      %2337 = vmatprep.subr.bf16.mxu0 %v861
      %2338 = vmatpush2.bf16.msra.mxu0 %v860
      %2339 = vmatprep.subr.bf16.mxu0 %v855
      %2340 = vmatpush2.bf16.msra.mxu0 %v854
      %2341 = vmatprep.mubr.bf16.mxu0 %v2222
      %2342 = vmatmul.mubr.bf16.gmra.mxu0 %v2221
      %v2343 = vpop.f32.mrf.mxu0
      %v2344 = vadd.f32 0.0, %v2343
      %v2345 = vpop.f32.mrf.mxu0
      %v2346 = vadd.f32 0.0, %v2345
      %v2347 = vpop.f32.mrf.mxu0
      %v2348 = vadd.f32 0.0, %v2347
      %v2349 = vpop.f32.mrf.mxu0
      %v2350 = vadd.f32 0.0, %v2349
      %2351 = vdwg.mxu0
      %v2352 = vadd.f32 %v2209, %v2258
      %v2353 = vadd.f32 %v2210, %v2260
      %v2354 = vadd.f32 %v2215, %v2262
      %v2355 = vadd.f32 %v2216, %v2264
      %v2356 = vxor.u32 %v2352, 2147483648
      %v2357 = vxor.u32 %v2353, 2147483648
      %v2358 = vxor.u32 %v2354, 2147483648
      %v2359 = vxor.u32 %v2355, 2147483648
      %v2360 = vmul.f32 %v2356, 1.442695
      %v2361 = vpow.pop %v2360
      %v2362 = vmul.f32 %v2357, 1.442695
      %v2363 = vpow.pop %v2362
      %v2364 = vmul.f32 %v2358, 1.442695
      %v2365 = vpow.pop %v2364
      %v2366 = vmul.f32 %v2359, 1.442695
      %v2367 = vpow.pop %v2366
      %v2368 = vadd.f32 %v2361, 1.0
      %v2369 = vadd.f32 %v2363, 1.0
      %v2370 = vadd.f32 %v2365, 1.0
      %v2371 = vadd.f32 %v2367, 1.0
      %v2372 = vrcp.pop %v2368
      %v2373 = vmul.f32 1.0, %v2372
      %v2374 = vrcp.pop %v2369
      %v2375 = vmul.f32 1.0, %v2374
      %v2376 = vrcp.pop %v2370
      %v2377 = vmul.f32 1.0, %v2376
      %v2378 = vrcp.pop %v2371
      %v2379 = vmul.f32 1.0, %v2378
      %v2380 = vadd.f32 %v2211, %v2301
      %v2381 = vadd.f32 %v2212, %v2303
      %v2382 = vadd.f32 %v2217, %v2305
      %v2383 = vadd.f32 %v2218, %v2307
      %v2384 = vxor.u32 %v2380, 2147483648
      %v2385 = vxor.u32 %v2381, 2147483648
      %v2386 = vxor.u32 %v2382, 2147483648
      %v2387 = vxor.u32 %v2383, 2147483648
      %v2388 = vmul.f32 %v2384, 1.442695
      %v2389 = vpow.pop %v2388
      %v2390 = vmul.f32 %v2385, 1.442695
      %v2391 = vpow.pop %v2390
      %v2392 = vmul.f32 %v2386, 1.442695
      %v2393 = vpow.pop %v2392
      %v2394 = vmul.f32 %v2387, 1.442695
      %v2395 = vpow.pop %v2394
      %v2396 = vadd.f32 %v2389, 1.0
      %v2397 = vadd.f32 %v2391, 1.0
      %v2398 = vadd.f32 %v2393, 1.0
      %v2399 = vadd.f32 %v2395, 1.0
      %v2400 = vrcp.pop %v2396
      %v2401 = vmul.f32 1.0, %v2400
      %v2402 = vrcp.pop %v2397
      %v2403 = vmul.f32 1.0, %v2402
      %v2404 = vrcp.pop %v2398
      %v2405 = vmul.f32 1.0, %v2404
      %v2406 = vrcp.pop %v2399
      %v2407 = vmul.f32 1.0, %v2406
      %v2408 = vadd.f32 %v2344, %v386
      %v2409 = vadd.f32 %v2346, %v390
      %v2410 = vadd.f32 %v2348, %v386
      %v2411 = vadd.f32 %v2350, %v390
      %v2412 = vmul.f32 %v2373, %v2408
      %v2413 = vmul.f32 %v2375, %v2409
      %v2414 = vmul.f32 %v2377, %v2410
      %v2415 = vmul.f32 %v2379, %v2411
      %v2416 = vadd.f32 %v2213, %v2412
      %v2417 = vadd.f32 %v2214, %v2413
      %v2418 = vadd.f32 %v2219, %v2414
      %v2419 = vadd.f32 %v2220, %v2415
      %v2420 = vtanh.pop %v2416
      %v2421 = vtanh.pop %v2417
      %v2422 = vtanh.pop %v2418
      %v2423 = vtanh.pop %v2419
      %v2424 = vsub.f32 1.0, %v2401
      %v2425 = vsub.f32 1.0, %v2403
      %v2426 = vsub.f32 1.0, %v2405
      %v2427 = vsub.f32 1.0, %v2407
      %v2428 = vmul.f32 %v2424, %v2420
      %v2429 = vmul.f32 %v2425, %v2421
      %v2430 = vmul.f32 %v2426, %v2422
      %v2431 = vmul.f32 %v2427, %v2423
      %v2432 = vmul.f32 %v2401, %v2198
      %v2433 = vmul.f32 %v2403, %v2199
      %v2434 = vmul.f32 %v2405, %v2200
      %v2435 = vmul.f32 %v2407, %v2201
      %v2436 = vadd.f32 %v2428, %v2432
      %v2437 = vadd.f32 %v2429, %v2433
      %v2438 = vadd.f32 %v2430, %v2434
      %v2439 = vadd.f32 %v2431, %v2435
      %s2440 = sadd.s32 %s489, 5
      %v2441 = vstv %s2440
      %vm2442 = vcmp.lt.s32.totalorder %v2441, %v377
      %vm2443 = vcmp.lt.s32.totalorder %v2441, %v380
      %v2444 = vsel %vm2442, %v2436, %v2198
      %v2445 = vsel %vm2442, %v2437, %v2199
      %v2446 = vsel %vm2443, %v2438, %v2200
      %v2447 = vsel %vm2443, %v2439, %v2201
      %s2448 = scalar_lea.vmem %s350, 288
      %v2449 = vld [vmem:[%s2448] sm:$0xff]
      %v2450 = vld [vmem:[%s2448 + $0x8] sm:$0xff]
      %v2451 = vld [vmem:[%s2448 + $0x10] sm:$0xff]
      %v2452 = vld [vmem:[%s2448 + $0x18] sm:$0xff]
      %v2453 = vld [vmem:[%s2448 + $0x20] sm:$0xff]
      %v2454 = vld [vmem:[%s2448 + $0x28] sm:$0xff]
      %v2455 = vunpack.c.l.bf16 %v2449
      %v2456 = vunpack.c.h.bf16 %v2449
      %v2457 = vunpack.c.l.bf16 %v2450
      %v2458 = vunpack.c.h.bf16 %v2450
      %v2459 = vunpack.c.l.bf16 %v2451
      %v2460 = vunpack.c.h.bf16 %v2451
      %v2461 = vunpack.c.l.bf16 %v2452
      %v2462 = vunpack.c.h.bf16 %v2452
      %v2463 = vunpack.c.l.bf16 %v2453
      %v2464 = vunpack.c.h.bf16 %v2453
      %v2465 = vunpack.c.l.bf16 %v2454
      %v2466 = vunpack.c.h.bf16 %v2454
      %v2467 = vpack.c.bf16 %v2446, %v2444
      %v2468 = vpack.c.bf16 %v2447, %v2445
      %2469 = vmatprep.subr.bf16.mxu0 %v845
      %2470 = vmatpush1.bf16.msra.mxu0 %v844
      %2471 = vmatprep.subr.bf16.mxu0 %v839
      %2472 = vmatpush1.bf16.msra.mxu0 %v838
      %2473 = vmatprep.subr.bf16.mxu0 %v833
      %2474 = vmatpush1.bf16.msra.mxu0 %v832
      %2475 = vmatprep.subr.bf16.mxu0 %v827
      %2476 = vmatpush1.bf16.msra.mxu0 %v826
      %2477 = vmatprep.subr.bf16.mxu0 %v821
      %2478 = vmatpush1.bf16.msra.mxu0 %v820
      %2479 = vmatprep.subr.bf16.mxu0 %v815
      %2480 = vmatpush1.bf16.msra.mxu0 %v814
      %2481 = vmatprep.subr.bf16.mxu0 %v809
      %2482 = vmatpush1.bf16.msra.mxu0 %v808
      %2483 = vmatprep.subr.bf16.mxu0 %v803
      %2484 = vmatpush1.bf16.msra.mxu0 %v802
      %2485 = vmatprep.subr.bf16.mxu0 %v893
      %2486 = vmatpush2.bf16.msra.mxu0 %v892
      %2487 = vmatprep.subr.bf16.mxu0 %v887
      %2488 = vmatpush2.bf16.msra.mxu0 %v886
      %2489 = vmatprep.subr.bf16.mxu0 %v881
      %2490 = vmatpush2.bf16.msra.mxu0 %v880
      %2491 = vmatprep.subr.bf16.mxu0 %v875
      %2492 = vmatpush2.bf16.msra.mxu0 %v874
      %2493 = vmatprep.subr.bf16.mxu0 %v869
      %2494 = vmatpush2.bf16.msra.mxu0 %v868
      %2495 = vmatprep.subr.bf16.mxu0 %v863
      %2496 = vmatpush2.bf16.msra.mxu0 %v862
      %2497 = vmatprep.subr.bf16.mxu0 %v857
      %2498 = vmatpush2.bf16.msra.mxu0 %v856
      %2499 = vmatprep.subr.bf16.mxu0 %v851
      %2500 = vmatpush2.bf16.msra.mxu0 %v850
      %2501 = vmatprep.mubr.bf16.mxu0 %v2468
      %2502 = vmatmul.mubr.bf16.gmra.mxu0 %v2467
      %v2503 = vpop.f32.mrf.mxu0
      %v2504 = vadd.f32 0.0, %v2503
      %v2505 = vpop.f32.mrf.mxu0
      %v2506 = vadd.f32 0.0, %v2505
      %v2507 = vpop.f32.mrf.mxu0
      %v2508 = vadd.f32 0.0, %v2507
      %v2509 = vpop.f32.mrf.mxu0
      %v2510 = vadd.f32 0.0, %v2509
      %2511 = vdwg.mxu0
      %2512 = vmatprep.subr.bf16.mxu0 %v847
      %2513 = vmatpush1.bf16.msra.mxu0 %v846
      %2514 = vmatprep.subr.bf16.mxu0 %v841
      %2515 = vmatpush1.bf16.msra.mxu0 %v840
      %2516 = vmatprep.subr.bf16.mxu0 %v835
      %2517 = vmatpush1.bf16.msra.mxu0 %v834
      %2518 = vmatprep.subr.bf16.mxu0 %v829
      %2519 = vmatpush1.bf16.msra.mxu0 %v828
      %2520 = vmatprep.subr.bf16.mxu0 %v823
      %2521 = vmatpush1.bf16.msra.mxu0 %v822
      %2522 = vmatprep.subr.bf16.mxu0 %v817
      %2523 = vmatpush1.bf16.msra.mxu0 %v816
      %2524 = vmatprep.subr.bf16.mxu0 %v811
      %2525 = vmatpush1.bf16.msra.mxu0 %v810
      %2526 = vmatprep.subr.bf16.mxu0 %v805
      %2527 = vmatpush1.bf16.msra.mxu0 %v804
      %2528 = vmatprep.subr.bf16.mxu0 %v895
      %2529 = vmatpush2.bf16.msra.mxu0 %v894
      %2530 = vmatprep.subr.bf16.mxu0 %v889
      %2531 = vmatpush2.bf16.msra.mxu0 %v888
      %2532 = vmatprep.subr.bf16.mxu0 %v883
      %2533 = vmatpush2.bf16.msra.mxu0 %v882
      %2534 = vmatprep.subr.bf16.mxu0 %v877
      %2535 = vmatpush2.bf16.msra.mxu0 %v876
      %2536 = vmatprep.subr.bf16.mxu0 %v871
      %2537 = vmatpush2.bf16.msra.mxu0 %v870
      %2538 = vmatprep.subr.bf16.mxu0 %v865
      %2539 = vmatpush2.bf16.msra.mxu0 %v864
      %2540 = vmatprep.subr.bf16.mxu0 %v859
      %2541 = vmatpush2.bf16.msra.mxu0 %v858
      %2542 = vmatprep.subr.bf16.mxu0 %v853
      %2543 = vmatpush2.bf16.msra.mxu0 %v852
      %2544 = vmatprep.mubr.bf16.mxu0 %v2468
      %2545 = vmatmul.mubr.bf16.gmra.mxu0 %v2467
      %v2546 = vpop.f32.mrf.mxu0
      %v2547 = vadd.f32 0.0, %v2546
      %v2548 = vpop.f32.mrf.mxu0
      %v2549 = vadd.f32 0.0, %v2548
      %v2550 = vpop.f32.mrf.mxu0
      %v2551 = vadd.f32 0.0, %v2550
      %v2552 = vpop.f32.mrf.mxu0
      %v2553 = vadd.f32 0.0, %v2552
      %2554 = vdwg.mxu0
      %2555 = vmatprep.subr.bf16.mxu0 %v849
      %2556 = vmatpush1.bf16.msra.mxu0 %v848
      %2557 = vmatprep.subr.bf16.mxu0 %v843
      %2558 = vmatpush1.bf16.msra.mxu0 %v842
      %2559 = vmatprep.subr.bf16.mxu0 %v837
      %2560 = vmatpush1.bf16.msra.mxu0 %v836
      %2561 = vmatprep.subr.bf16.mxu0 %v831
      %2562 = vmatpush1.bf16.msra.mxu0 %v830
      %2563 = vmatprep.subr.bf16.mxu0 %v825
      %2564 = vmatpush1.bf16.msra.mxu0 %v824
      %2565 = vmatprep.subr.bf16.mxu0 %v819
      %2566 = vmatpush1.bf16.msra.mxu0 %v818
      %2567 = vmatprep.subr.bf16.mxu0 %v813
      %2568 = vmatpush1.bf16.msra.mxu0 %v812
      %2569 = vmatprep.subr.bf16.mxu0 %v807
      %2570 = vmatpush1.bf16.msra.mxu0 %v806
      %2571 = vmatprep.subr.bf16.mxu0 %v897
      %2572 = vmatpush2.bf16.msra.mxu0 %v896
      %2573 = vmatprep.subr.bf16.mxu0 %v891
      %2574 = vmatpush2.bf16.msra.mxu0 %v890
      %2575 = vmatprep.subr.bf16.mxu0 %v885
      %2576 = vmatpush2.bf16.msra.mxu0 %v884
      %2577 = vmatprep.subr.bf16.mxu0 %v879
      %2578 = vmatpush2.bf16.msra.mxu0 %v878
      %2579 = vmatprep.subr.bf16.mxu0 %v873
      %2580 = vmatpush2.bf16.msra.mxu0 %v872
      %2581 = vmatprep.subr.bf16.mxu0 %v867
      %2582 = vmatpush2.bf16.msra.mxu0 %v866
      %2583 = vmatprep.subr.bf16.mxu0 %v861
      %2584 = vmatpush2.bf16.msra.mxu0 %v860
      %2585 = vmatprep.subr.bf16.mxu0 %v855
      %2586 = vmatpush2.bf16.msra.mxu0 %v854
      %2587 = vmatprep.mubr.bf16.mxu0 %v2468
      %2588 = vmatmul.mubr.bf16.gmra.mxu0 %v2467
      %v2589 = vpop.f32.mrf.mxu0
      %v2590 = vadd.f32 0.0, %v2589
      %v2591 = vpop.f32.mrf.mxu0
      %v2592 = vadd.f32 0.0, %v2591
      %v2593 = vpop.f32.mrf.mxu0
      %v2594 = vadd.f32 0.0, %v2593
      %v2595 = vpop.f32.mrf.mxu0
      %v2596 = vadd.f32 0.0, %v2595
      %2597 = vdwg.mxu0
      %v2598 = vadd.f32 %v2455, %v2504
      %v2599 = vadd.f32 %v2456, %v2506
      %v2600 = vadd.f32 %v2461, %v2508
      %v2601 = vadd.f32 %v2462, %v2510
      %v2602 = vxor.u32 %v2598, 2147483648
      %v2603 = vxor.u32 %v2599, 2147483648
      %v2604 = vxor.u32 %v2600, 2147483648
      %v2605 = vxor.u32 %v2601, 2147483648
      %v2606 = vmul.f32 %v2602, 1.442695
      %v2607 = vpow.pop %v2606
      %v2608 = vmul.f32 %v2603, 1.442695
      %v2609 = vpow.pop %v2608
      %v2610 = vmul.f32 %v2604, 1.442695
      %v2611 = vpow.pop %v2610
      %v2612 = vmul.f32 %v2605, 1.442695
      %v2613 = vpow.pop %v2612
      %v2614 = vadd.f32 %v2607, 1.0
      %v2615 = vadd.f32 %v2609, 1.0
      %v2616 = vadd.f32 %v2611, 1.0
      %v2617 = vadd.f32 %v2613, 1.0
      %v2618 = vrcp.pop %v2614
      %v2619 = vmul.f32 1.0, %v2618
      %v2620 = vrcp.pop %v2615
      %v2621 = vmul.f32 1.0, %v2620
      %v2622 = vrcp.pop %v2616
      %v2623 = vmul.f32 1.0, %v2622
      %v2624 = vrcp.pop %v2617
      %v2625 = vmul.f32 1.0, %v2624
      %v2626 = vadd.f32 %v2457, %v2547
      %v2627 = vadd.f32 %v2458, %v2549
      %v2628 = vadd.f32 %v2463, %v2551
      %v2629 = vadd.f32 %v2464, %v2553
      %v2630 = vxor.u32 %v2626, 2147483648
      %v2631 = vxor.u32 %v2627, 2147483648
      %v2632 = vxor.u32 %v2628, 2147483648
      %v2633 = vxor.u32 %v2629, 2147483648
      %v2634 = vmul.f32 %v2630, 1.442695
      %v2635 = vpow.pop %v2634
      %v2636 = vmul.f32 %v2631, 1.442695
      %v2637 = vpow.pop %v2636
      %v2638 = vmul.f32 %v2632, 1.442695
      %v2639 = vpow.pop %v2638
      %v2640 = vmul.f32 %v2633, 1.442695
      %v2641 = vpow.pop %v2640
      %v2642 = vadd.f32 %v2635, 1.0
      %v2643 = vadd.f32 %v2637, 1.0
      %v2644 = vadd.f32 %v2639, 1.0
      %v2645 = vadd.f32 %v2641, 1.0
      %v2646 = vrcp.pop %v2642
      %v2647 = vmul.f32 1.0, %v2646
      %v2648 = vrcp.pop %v2643
      %v2649 = vmul.f32 1.0, %v2648
      %v2650 = vrcp.pop %v2644
      %v2651 = vmul.f32 1.0, %v2650
      %v2652 = vrcp.pop %v2645
      %v2653 = vmul.f32 1.0, %v2652
      %v2654 = vadd.f32 %v2590, %v386
      %v2655 = vadd.f32 %v2592, %v390
      %v2656 = vadd.f32 %v2594, %v386
      %v2657 = vadd.f32 %v2596, %v390
      %v2658 = vmul.f32 %v2619, %v2654
      %v2659 = vmul.f32 %v2621, %v2655
      %v2660 = vmul.f32 %v2623, %v2656
      %v2661 = vmul.f32 %v2625, %v2657
      %v2662 = vadd.f32 %v2459, %v2658
      %v2663 = vadd.f32 %v2460, %v2659
      %v2664 = vadd.f32 %v2465, %v2660
      %v2665 = vadd.f32 %v2466, %v2661
      %v2666 = vtanh.pop %v2662
      %v2667 = vtanh.pop %v2663
      %v2668 = vtanh.pop %v2664
      %v2669 = vtanh.pop %v2665
      %v2670 = vsub.f32 1.0, %v2647
      %v2671 = vsub.f32 1.0, %v2649
      %v2672 = vsub.f32 1.0, %v2651
      %v2673 = vsub.f32 1.0, %v2653
      %v2674 = vmul.f32 %v2670, %v2666
      %v2675 = vmul.f32 %v2671, %v2667
      %v2676 = vmul.f32 %v2672, %v2668
      %v2677 = vmul.f32 %v2673, %v2669
      %v2678 = vmul.f32 %v2647, %v2444
      %v2679 = vmul.f32 %v2649, %v2445
      %v2680 = vmul.f32 %v2651, %v2446
      %v2681 = vmul.f32 %v2653, %v2447
      %v2682 = vadd.f32 %v2674, %v2678
      %v2683 = vadd.f32 %v2675, %v2679
      %v2684 = vadd.f32 %v2676, %v2680
      %v2685 = vadd.f32 %v2677, %v2681
      %s2686 = sadd.s32 %s489, 6
      %v2687 = vstv %s2686
      %vm2688 = vcmp.lt.s32.totalorder %v2687, %v377
      %vm2689 = vcmp.lt.s32.totalorder %v2687, %v380
      %v2690 = vsel %vm2688, %v2682, %v2444
      %v2691 = vsel %vm2688, %v2683, %v2445
      %v2692 = vsel %vm2689, %v2684, %v2446
      %v2693 = vsel %vm2689, %v2685, %v2447
      %s2694 = scalar_lea.vmem %s350, 336
      %v2695 = vld [vmem:[%s2694] sm:$0xff]
      %v2696 = vld [vmem:[%s2694 + $0x8] sm:$0xff]
      %v2697 = vld [vmem:[%s2694 + $0x10] sm:$0xff]
      %v2698 = vld [vmem:[%s2694 + $0x18] sm:$0xff]
      %v2699 = vld [vmem:[%s2694 + $0x20] sm:$0xff]
      %v2700 = vld [vmem:[%s2694 + $0x28] sm:$0xff]
      %v2701 = vunpack.c.l.bf16 %v2695
      %v2702 = vunpack.c.h.bf16 %v2695
      %v2703 = vunpack.c.l.bf16 %v2696
      %v2704 = vunpack.c.h.bf16 %v2696
      %v2705 = vunpack.c.l.bf16 %v2697
      %v2706 = vunpack.c.h.bf16 %v2697
      %v2707 = vunpack.c.l.bf16 %v2698
      %v2708 = vunpack.c.h.bf16 %v2698
      %v2709 = vunpack.c.l.bf16 %v2699
      %v2710 = vunpack.c.h.bf16 %v2699
      %v2711 = vunpack.c.l.bf16 %v2700
      %v2712 = vunpack.c.h.bf16 %v2700
      %v2713 = vpack.c.bf16 %v2692, %v2690
      %v2714 = vpack.c.bf16 %v2693, %v2691
      %2715 = vmatprep.subr.bf16.mxu0 %v845
      %2716 = vmatpush1.bf16.msra.mxu0 %v844
      %2717 = vmatprep.subr.bf16.mxu0 %v839
      %2718 = vmatpush1.bf16.msra.mxu0 %v838
      %2719 = vmatprep.subr.bf16.mxu0 %v833
      %2720 = vmatpush1.bf16.msra.mxu0 %v832
      %2721 = vmatprep.subr.bf16.mxu0 %v827
      %2722 = vmatpush1.bf16.msra.mxu0 %v826
      %2723 = vmatprep.subr.bf16.mxu0 %v821
      %2724 = vmatpush1.bf16.msra.mxu0 %v820
      %2725 = vmatprep.subr.bf16.mxu0 %v815
      %2726 = vmatpush1.bf16.msra.mxu0 %v814
      %2727 = vmatprep.subr.bf16.mxu0 %v809
      %2728 = vmatpush1.bf16.msra.mxu0 %v808
      %2729 = vmatprep.subr.bf16.mxu0 %v803
      %2730 = vmatpush1.bf16.msra.mxu0 %v802
      %2731 = vmatprep.subr.bf16.mxu0 %v893
      %2732 = vmatpush2.bf16.msra.mxu0 %v892
      %2733 = vmatprep.subr.bf16.mxu0 %v887
      %2734 = vmatpush2.bf16.msra.mxu0 %v886
      %2735 = vmatprep.subr.bf16.mxu0 %v881
      %2736 = vmatpush2.bf16.msra.mxu0 %v880
      %2737 = vmatprep.subr.bf16.mxu0 %v875
      %2738 = vmatpush2.bf16.msra.mxu0 %v874
      %2739 = vmatprep.subr.bf16.mxu0 %v869
      %2740 = vmatpush2.bf16.msra.mxu0 %v868
      %2741 = vmatprep.subr.bf16.mxu0 %v863
      %2742 = vmatpush2.bf16.msra.mxu0 %v862
      %2743 = vmatprep.subr.bf16.mxu0 %v857
      %2744 = vmatpush2.bf16.msra.mxu0 %v856
      %2745 = vmatprep.subr.bf16.mxu0 %v851
      %2746 = vmatpush2.bf16.msra.mxu0 %v850
      %2747 = vmatprep.mubr.bf16.mxu0 %v2714
      %2748 = vmatmul.mubr.bf16.gmra.mxu0 %v2713
      %v2749 = vpop.f32.mrf.mxu0
      %v2750 = vadd.f32 0.0, %v2749
      %v2751 = vpop.f32.mrf.mxu0
      %v2752 = vadd.f32 0.0, %v2751
      %v2753 = vpop.f32.mrf.mxu0
      %v2754 = vadd.f32 0.0, %v2753
      %v2755 = vpop.f32.mrf.mxu0
      %v2756 = vadd.f32 0.0, %v2755
      %2757 = vdwg.mxu0
      %2758 = vmatprep.subr.bf16.mxu0 %v847
      %2759 = vmatpush1.bf16.msra.mxu0 %v846
      %2760 = vmatprep.subr.bf16.mxu0 %v841
      %2761 = vmatpush1.bf16.msra.mxu0 %v840
      %2762 = vmatprep.subr.bf16.mxu0 %v835
      %2763 = vmatpush1.bf16.msra.mxu0 %v834
      %2764 = vmatprep.subr.bf16.mxu0 %v829
      %2765 = vmatpush1.bf16.msra.mxu0 %v828
      %2766 = vmatprep.subr.bf16.mxu0 %v823
      %2767 = vmatpush1.bf16.msra.mxu0 %v822
      %2768 = vmatprep.subr.bf16.mxu0 %v817
      %2769 = vmatpush1.bf16.msra.mxu0 %v816
      %2770 = vmatprep.subr.bf16.mxu0 %v811
      %2771 = vmatpush1.bf16.msra.mxu0 %v810
      %2772 = vmatprep.subr.bf16.mxu0 %v805
      %2773 = vmatpush1.bf16.msra.mxu0 %v804
      %2774 = vmatprep.subr.bf16.mxu0 %v895
      %2775 = vmatpush2.bf16.msra.mxu0 %v894
      %2776 = vmatprep.subr.bf16.mxu0 %v889
      %2777 = vmatpush2.bf16.msra.mxu0 %v888
      %2778 = vmatprep.subr.bf16.mxu0 %v883
      %2779 = vmatpush2.bf16.msra.mxu0 %v882
      %2780 = vmatprep.subr.bf16.mxu0 %v877
      %2781 = vmatpush2.bf16.msra.mxu0 %v876
      %2782 = vmatprep.subr.bf16.mxu0 %v871
      %2783 = vmatpush2.bf16.msra.mxu0 %v870
      %2784 = vmatprep.subr.bf16.mxu0 %v865
      %2785 = vmatpush2.bf16.msra.mxu0 %v864
      %2786 = vmatprep.subr.bf16.mxu0 %v859
      %2787 = vmatpush2.bf16.msra.mxu0 %v858
      %2788 = vmatprep.subr.bf16.mxu0 %v853
      %2789 = vmatpush2.bf16.msra.mxu0 %v852
      %2790 = vmatprep.mubr.bf16.mxu0 %v2714
      %2791 = vmatmul.mubr.bf16.gmra.mxu0 %v2713
      %v2792 = vpop.f32.mrf.mxu0
      %v2793 = vadd.f32 0.0, %v2792
      %v2794 = vpop.f32.mrf.mxu0
      %v2795 = vadd.f32 0.0, %v2794
      %v2796 = vpop.f32.mrf.mxu0
      %v2797 = vadd.f32 0.0, %v2796
      %v2798 = vpop.f32.mrf.mxu0
      %v2799 = vadd.f32 0.0, %v2798
      %2800 = vdwg.mxu0
      %2801 = vmatprep.subr.bf16.mxu0 %v849
      %2802 = vmatpush1.bf16.msra.mxu0 %v848
      %2803 = vmatprep.subr.bf16.mxu0 %v843
      %2804 = vmatpush1.bf16.msra.mxu0 %v842
      %2805 = vmatprep.subr.bf16.mxu0 %v837
      %2806 = vmatpush1.bf16.msra.mxu0 %v836
      %2807 = vmatprep.subr.bf16.mxu0 %v831
      %2808 = vmatpush1.bf16.msra.mxu0 %v830
      %2809 = vmatprep.subr.bf16.mxu0 %v825
      %2810 = vmatpush1.bf16.msra.mxu0 %v824
      %2811 = vmatprep.subr.bf16.mxu0 %v819
      %2812 = vmatpush1.bf16.msra.mxu0 %v818
      %2813 = vmatprep.subr.bf16.mxu0 %v813
      %2814 = vmatpush1.bf16.msra.mxu0 %v812
      %2815 = vmatprep.subr.bf16.mxu0 %v807
      %2816 = vmatpush1.bf16.msra.mxu0 %v806
      %2817 = vmatprep.subr.bf16.mxu0 %v897
      %2818 = vmatpush2.bf16.msra.mxu0 %v896
      %2819 = vmatprep.subr.bf16.mxu0 %v891
      %2820 = vmatpush2.bf16.msra.mxu0 %v890
      %2821 = vmatprep.subr.bf16.mxu0 %v885
      %2822 = vmatpush2.bf16.msra.mxu0 %v884
      %2823 = vmatprep.subr.bf16.mxu0 %v879
      %2824 = vmatpush2.bf16.msra.mxu0 %v878
      %2825 = vmatprep.subr.bf16.mxu0 %v873
      %2826 = vmatpush2.bf16.msra.mxu0 %v872
      %2827 = vmatprep.subr.bf16.mxu0 %v867
      %2828 = vmatpush2.bf16.msra.mxu0 %v866
      %2829 = vmatprep.subr.bf16.mxu0 %v861
      %2830 = vmatpush2.bf16.msra.mxu0 %v860
      %2831 = vmatprep.subr.bf16.mxu0 %v855
      %2832 = vmatpush2.bf16.msra.mxu0 %v854
      %2833 = vmatprep.mubr.bf16.mxu0 %v2714
      %2834 = vmatmul.mubr.bf16.gmra.mxu0 %v2713
      %v2835 = vpop.f32.mrf.mxu0
      %v2836 = vadd.f32 0.0, %v2835
      %v2837 = vpop.f32.mrf.mxu0
      %v2838 = vadd.f32 0.0, %v2837
      %v2839 = vpop.f32.mrf.mxu0
      %v2840 = vadd.f32 0.0, %v2839
      %v2841 = vpop.f32.mrf.mxu0
      %v2842 = vadd.f32 0.0, %v2841
      %2843 = vdwg.mxu0
      %v2844 = vadd.f32 %v2701, %v2750
      %v2845 = vadd.f32 %v2702, %v2752
      %v2846 = vadd.f32 %v2707, %v2754
      %v2847 = vadd.f32 %v2708, %v2756
      %v2848 = vxor.u32 %v2844, 2147483648
      %v2849 = vxor.u32 %v2845, 2147483648
      %v2850 = vxor.u32 %v2846, 2147483648
      %v2851 = vxor.u32 %v2847, 2147483648
      %v2852 = vmul.f32 %v2848, 1.442695
      %v2853 = vpow.pop %v2852
      %v2854 = vmul.f32 %v2849, 1.442695
      %v2855 = vpow.pop %v2854
      %v2856 = vmul.f32 %v2850, 1.442695
      %v2857 = vpow.pop %v2856
      %v2858 = vmul.f32 %v2851, 1.442695
      %v2859 = vpow.pop %v2858
      %v2860 = vadd.f32 %v2853, 1.0
      %v2861 = vadd.f32 %v2855, 1.0
      %v2862 = vadd.f32 %v2857, 1.0
      %v2863 = vadd.f32 %v2859, 1.0
      %v2864 = vrcp.pop %v2860
      %v2865 = vmul.f32 1.0, %v2864
      %v2866 = vrcp.pop %v2861
      %v2867 = vmul.f32 1.0, %v2866
      %v2868 = vrcp.pop %v2862
      %v2869 = vmul.f32 1.0, %v2868
      %v2870 = vrcp.pop %v2863
      %v2871 = vmul.f32 1.0, %v2870
      %v2872 = vadd.f32 %v2703, %v2793
      %v2873 = vadd.f32 %v2704, %v2795
      %v2874 = vadd.f32 %v2709, %v2797
      %v2875 = vadd.f32 %v2710, %v2799
      %v2876 = vxor.u32 %v2872, 2147483648
      %v2877 = vxor.u32 %v2873, 2147483648
      %v2878 = vxor.u32 %v2874, 2147483648
      %v2879 = vxor.u32 %v2875, 2147483648
      %v2880 = vmul.f32 %v2876, 1.442695
      %v2881 = vpow.pop %v2880
      %v2882 = vmul.f32 %v2877, 1.442695
      %v2883 = vpow.pop %v2882
      %v2884 = vmul.f32 %v2878, 1.442695
      %v2885 = vpow.pop %v2884
      %v2886 = vmul.f32 %v2879, 1.442695
      %v2887 = vpow.pop %v2886
      %v2888 = vadd.f32 %v2881, 1.0
      %v2889 = vadd.f32 %v2883, 1.0
      %v2890 = vadd.f32 %v2885, 1.0
      %v2891 = vadd.f32 %v2887, 1.0
      %v2892 = vrcp.pop %v2888
      %v2893 = vmul.f32 1.0, %v2892
      %v2894 = vrcp.pop %v2889
      %v2895 = vmul.f32 1.0, %v2894
      %v2896 = vrcp.pop %v2890
      %v2897 = vmul.f32 1.0, %v2896
      %v2898 = vrcp.pop %v2891
      %v2899 = vmul.f32 1.0, %v2898
      %v2900 = vadd.f32 %v2836, %v386
      %v2901 = vadd.f32 %v2838, %v390
      %v2902 = vadd.f32 %v2840, %v386
      %v2903 = vadd.f32 %v2842, %v390
      %v2904 = vmul.f32 %v2865, %v2900
      %v2905 = vmul.f32 %v2867, %v2901
      %v2906 = vmul.f32 %v2869, %v2902
      %v2907 = vmul.f32 %v2871, %v2903
      %v2908 = vadd.f32 %v2705, %v2904
      %v2909 = vadd.f32 %v2706, %v2905
      %v2910 = vadd.f32 %v2711, %v2906
      %v2911 = vadd.f32 %v2712, %v2907
      %v2912 = vtanh.pop %v2908
      %v2913 = vtanh.pop %v2909
      %v2914 = vtanh.pop %v2910
      %v2915 = vtanh.pop %v2911
      %v2916 = vsub.f32 1.0, %v2893
      %v2917 = vsub.f32 1.0, %v2895
      %v2918 = vsub.f32 1.0, %v2897
      %v2919 = vsub.f32 1.0, %v2899
      %v2920 = vmul.f32 %v2916, %v2912
      %v2921 = vmul.f32 %v2917, %v2913
      %v2922 = vmul.f32 %v2918, %v2914
      %v2923 = vmul.f32 %v2919, %v2915
      %v2924 = vmul.f32 %v2893, %v2690
      %v2925 = vmul.f32 %v2895, %v2691
      %v2926 = vmul.f32 %v2897, %v2692
      %v2927 = vmul.f32 %v2899, %v2693
      %v2928 = vadd.f32 %v2920, %v2924
      %v2929 = vadd.f32 %v2921, %v2925
      %v2930 = vadd.f32 %v2922, %v2926
      %v2931 = vadd.f32 %v2923, %v2927
      %s2932 = sadd.s32 %s489, 7
      %v2933 = vstv %s2932
      %vm2934 = vcmp.lt.s32.totalorder %v2933, %v377
      %vm2935 = vcmp.lt.s32.totalorder %v2933, %v380
      %v2936 = vsel %vm2934, %v2928, %v2690
      %v2937 = vsel %vm2934, %v2929, %v2691
      %v2938 = vsel %vm2935, %v2930, %v2692
      %v2939 = vsel %vm2935, %v2931, %v2693
      %2940 = vst [vmem:[#allocation2] sm:$0xff] %v2936
      %2941 = vst [vmem:[#allocation2 + $0x8] sm:$0xff] %v2937
      %2942 = vst [vmem:[#allocation2 + $0x10] sm:$0xff] %v2938
      %2943 = vst [vmem:[#allocation2 + $0x18] sm:$0xff] %v2939
      %p2944 = scmp.eq.s32.totalorder %s24, 1
      // Predicated region
      $region57: #{sat1_gru_forward.1} parent=51 // pred_check
        %p2945 = pneg %p2944
      $region58: #{sat1_gru_forward.1} parent=51 // pred_check_branch
        %2947 = sbr.rel (%p2945) target = $region60
      $region59: #{sat1_gru_forward.1} parent=51 // pred_region
        %v2948 = vmax.f32 %v2936, 0.0
        %v2949 = vmax.f32 %v2937, 0.0
        %v2950 = vmax.f32 %v2938, 0.0
        %v2951 = vmax.f32 %v2939, 0.0
        %v2952 = vld [vmem:[%s4] sm:$0xff]
        %v2953 = vld [vmem:[%s4 + $0x8] sm:$0xff]
        %v2954 = vld [vmem:[%s4 + $0x10] sm:$0xff]
        %v2955 = vld [vmem:[%s4 + $0x18] sm:$0xff]
        %v2956 = vld [vmem:[%s4 + $0x20] sm:$0xff]
        %v2957 = vld [vmem:[%s4 + $0x28] sm:$0xff]
        %v2958 = vld [vmem:[%s4 + $0x30] sm:$0xff]
        %v2959 = vld [vmem:[%s4 + $0x38] sm:$0xff]
        %v2960 = vld [vmem:[%s4 + $0x40] sm:$0xff]
        %v2961 = vld [vmem:[%s4 + $0x48] sm:$0xff]
        %v2962 = vld [vmem:[%s4 + $0x50] sm:$0xff]
        %v2963 = vld [vmem:[%s4 + $0x58] sm:$0xff]
        %v2964 = vld [vmem:[%s4 + $0x60] sm:$0xff]
        %v2965 = vld [vmem:[%s4 + $0x68] sm:$0xff]
        %v2966 = vld [vmem:[%s4 + $0x70] sm:$0xff]
        %v2967 = vld [vmem:[%s4 + $0x78] sm:$0xff]
        %v2968 = vld [vmem:[%s4 + $0x80] sm:$0xff]
        %v2969 = vld [vmem:[%s4 + $0x88] sm:$0xff]
        %v2970 = vld [vmem:[%s4 + $0x90] sm:$0xff]
        %v2971 = vld [vmem:[%s4 + $0x98] sm:$0xff]
        %v2972 = vld [vmem:[%s4 + $0xa0] sm:$0xff]
        %v2973 = vld [vmem:[%s4 + $0xa8] sm:$0xff]
        %v2974 = vld [vmem:[%s4 + $0xb0] sm:$0xff]
        %v2975 = vld [vmem:[%s4 + $0xb8] sm:$0xff]
        %v2976 = vld [vmem:[%s4 + $0xc0] sm:$0xff]
        %v2977 = vld [vmem:[%s4 + $0xc8] sm:$0xff]
        %v2978 = vld [vmem:[%s4 + $0xd0] sm:$0xff]
        %v2979 = vld [vmem:[%s4 + $0xd8] sm:$0xff]
        %v2980 = vld [vmem:[%s4 + $0xe0] sm:$0xff]
        %v2981 = vld [vmem:[%s4 + $0xe8] sm:$0xff]
        %v2982 = vld [vmem:[%s4 + $0xf0] sm:$0xff]
        %v2983 = vld [vmem:[%s4 + $0xf8] sm:$0xff]
        %v2984 = vld [vmem:[%s5] sm:$0x1]
        %v2986 = vlaneseq
        %v2987 = vshrl.u32 %v2986, 7
        %v2988 = vsub.s32 0, %v2987
        %v2989 = vrot.slane %v2984, %v2988
        %2991 = vmatprep.subr.mxu0 0.0
        %2992 = vmatpush1.msra.mxu0 %v2967
        %2993 = vmatprep.subr.mxu0 0.0
        %2994 = vmatpush1.msra.mxu0 %v2966
        %2995 = vmatprep.subr.mxu0 0.0
        %2996 = vmatpush1.msra.mxu0 %v2965
        %2997 = vmatprep.subr.mxu0 0.0
        %2998 = vmatpush1.msra.mxu0 %v2964
        %2999 = vmatprep.subr.mxu0 0.0
        %3000 = vmatpush1.msra.mxu0 %v2963
        %3001 = vmatprep.subr.mxu0 0.0
        %3002 = vmatpush1.msra.mxu0 %v2962
        %3003 = vmatprep.subr.mxu0 0.0
        %3004 = vmatpush1.msra.mxu0 %v2961
        %3005 = vmatprep.subr.mxu0 0.0
        %3006 = vmatpush1.msra.mxu0 %v2960
        %3007 = vmatprep.subr.mxu0 0.0
        %3008 = vmatpush1.msra.mxu0 %v2959
        %3009 = vmatprep.subr.mxu0 0.0
        %3010 = vmatpush1.msra.mxu0 %v2958
        %3011 = vmatprep.subr.mxu0 0.0
        %3012 = vmatpush1.msra.mxu0 %v2957
        %3013 = vmatprep.subr.mxu0 0.0
        %3014 = vmatpush1.msra.mxu0 %v2956
        %3015 = vmatprep.subr.mxu0 0.0
        %3016 = vmatpush1.msra.mxu0 %v2955
        %3017 = vmatprep.subr.mxu0 0.0
        %3018 = vmatpush1.msra.mxu0 %v2954
        %3019 = vmatprep.subr.mxu0 0.0
        %3020 = vmatpush1.msra.mxu0 %v2953
        %3021 = vmatprep.subr.mxu0 0.0
        %3022 = vmatpush1.msra.mxu0 %v2952
        %3023 = vmatprep.subr.mxu0 0.0
        %3024 = vmatpush2.msra.mxu0 %v2983
        %3025 = vmatprep.subr.mxu0 0.0
        %3026 = vmatpush2.msra.mxu0 %v2982
        %3027 = vmatprep.subr.mxu0 0.0
        %3028 = vmatpush2.msra.mxu0 %v2981
        %3029 = vmatprep.subr.mxu0 0.0
        %3030 = vmatpush2.msra.mxu0 %v2980
        %3031 = vmatprep.subr.mxu0 0.0
        %3032 = vmatpush2.msra.mxu0 %v2979
        %3033 = vmatprep.subr.mxu0 0.0
        %3034 = vmatpush2.msra.mxu0 %v2978
        %3035 = vmatprep.subr.mxu0 0.0
        %3036 = vmatpush2.msra.mxu0 %v2977
        %3037 = vmatprep.subr.mxu0 0.0
        %3038 = vmatpush2.msra.mxu0 %v2976
        %3039 = vmatprep.subr.mxu0 0.0
        %3040 = vmatpush2.msra.mxu0 %v2975
        %3041 = vmatprep.subr.mxu0 0.0
        %3042 = vmatpush2.msra.mxu0 %v2974
        %3043 = vmatprep.subr.mxu0 0.0
        %3044 = vmatpush2.msra.mxu0 %v2973
        %3045 = vmatprep.subr.mxu0 0.0
        %3046 = vmatpush2.msra.mxu0 %v2972
        %3047 = vmatprep.subr.mxu0 0.0
        %3048 = vmatpush2.msra.mxu0 %v2971
        %3049 = vmatprep.subr.mxu0 0.0
        %3050 = vmatpush2.msra.mxu0 %v2970
        %3051 = vmatprep.subr.mxu0 0.0
        %3052 = vmatpush2.msra.mxu0 %v2969
        %3053 = vmatprep.subr.mxu0 0.0
        %3054 = vmatpush2.msra.mxu0 %v2968
        %3055 = vmatprep.mubr.f32.mxu0 %v2949
        %3056 = vmatmul.mubr.f32.gmra.mxu0 %v2948
        %v3057 = vpop.f32.mrf.mxu0
        %v3058 = vadd.f32 %v2989, %v3057
        %v3059 = vpop.f32.mrf.mxu0
        %3060 = vmatprep.mubr.f32.mxu0 %v2951
        %3061 = vmatmul.mubr.f32.gmra.mxu0 %v2950
        %v3062 = vpop.f32.mrf.mxu0
        %v3063 = vadd.f32 %v2989, %v3062
        %v3064 = vpop.f32.mrf.mxu0
        %3065 = vdwg.mxu0
        %v3066 = vld [vmem:[%s6] sm:$0xff]
        %v3067 = vld [vmem:[%s6 + $0x8] sm:$0xff]
        %v3068 = vld [vmem:[%s6 + $0x10] sm:$0xff]
        %v3069 = vld [vmem:[%s6 + $0x18] sm:$0xff]
        %v3070 = vld [vmem:[%s6 + $0x20] sm:$0xff]
        %v3071 = vld [vmem:[%s6 + $0x28] sm:$0xff]
        %v3072 = vld [vmem:[%s6 + $0x30] sm:$0xff]
        %v3073 = vld [vmem:[%s6 + $0x38] sm:$0xff]
        %v3074 = vld [vmem:[%s6 + $0x40] sm:$0xff]
        %v3075 = vld [vmem:[%s6 + $0x48] sm:$0xff]
        %v3076 = vld [vmem:[%s6 + $0x50] sm:$0xff]
        %v3077 = vld [vmem:[%s6 + $0x58] sm:$0xff]
        %v3078 = vld [vmem:[%s6 + $0x60] sm:$0xff]
        %v3079 = vld [vmem:[%s6 + $0x68] sm:$0xff]
        %v3080 = vld [vmem:[%s6 + $0x70] sm:$0xff]
        %v3081 = vld [vmem:[%s6 + $0x78] sm:$0xff]
        %v3082 = vld [vmem:[%s7] sm:$0x1]
        %v3084 = vlaneseq
        %v3085 = vshrl.u32 %v3084, 7
        %v3086 = vsub.s32 0, %v3085
        %v3087 = vrot.slane %v3082, %v3086
        %3089 = vmatprep.subr.mxu0 0.0
        %3090 = vmatpush1.msra.mxu0 %v3081
        %3091 = vmatprep.subr.mxu0 0.0
        %3092 = vmatpush1.msra.mxu0 %v3080
        %3093 = vmatprep.subr.mxu0 0.0
        %3094 = vmatpush1.msra.mxu0 %v3079
        %3095 = vmatprep.subr.mxu0 0.0
        %3096 = vmatpush1.msra.mxu0 %v3078
        %3097 = vmatprep.subr.mxu0 0.0
        %3098 = vmatpush1.msra.mxu0 %v3077
        %3099 = vmatprep.subr.mxu0 0.0
        %3100 = vmatpush1.msra.mxu0 %v3076
        %3101 = vmatprep.subr.mxu0 0.0
        %3102 = vmatpush1.msra.mxu0 %v3075
        %3103 = vmatprep.subr.mxu0 0.0
        %3104 = vmatpush1.msra.mxu0 %v3074
        %3105 = vmatprep.subr.mxu0 0.0
        %3106 = vmatpush1.msra.mxu0 %v3073
        %3107 = vmatprep.subr.mxu0 0.0
        %3108 = vmatpush1.msra.mxu0 %v3072
        %3109 = vmatprep.subr.mxu0 0.0
        %3110 = vmatpush1.msra.mxu0 %v3071
        %3111 = vmatprep.subr.mxu0 0.0
        %3112 = vmatpush1.msra.mxu0 %v3070
        %3113 = vmatprep.subr.mxu0 0.0
        %3114 = vmatpush1.msra.mxu0 %v3069
        %3115 = vmatprep.subr.mxu0 0.0
        %3116 = vmatpush1.msra.mxu0 %v3068
        %3117 = vmatprep.subr.mxu0 0.0
        %3118 = vmatpush1.msra.mxu0 %v3067
        %3119 = vmatprep.subr.mxu0 0.0
        %3120 = vmatpush1.msra.mxu0 %v3066
        %3121 = vmatprep.subr.mxu0 0.0
        %3122 = vmatpush2.msra.mxu0 0.0
        %3123 = vmatprep.subr.mxu0 0.0
        %3124 = vmatpush2.msra.mxu0 0.0
        %3125 = vmatprep.subr.mxu0 0.0
        %3126 = vmatpush2.msra.mxu0 0.0
        %3127 = vmatprep.subr.mxu0 0.0
        %3128 = vmatpush2.msra.mxu0 0.0
        %3129 = vmatprep.subr.mxu0 0.0
        %3130 = vmatpush2.msra.mxu0 0.0
        %3131 = vmatprep.subr.mxu0 0.0
        %3132 = vmatpush2.msra.mxu0 0.0
        %3133 = vmatprep.subr.mxu0 0.0
        %3134 = vmatpush2.msra.mxu0 0.0
        %3135 = vmatprep.subr.mxu0 0.0
        %3136 = vmatpush2.msra.mxu0 0.0
        %3137 = vmatprep.subr.mxu0 0.0
        %3138 = vmatpush2.msra.mxu0 0.0
        %3139 = vmatprep.subr.mxu0 0.0
        %3140 = vmatpush2.msra.mxu0 0.0
        %3141 = vmatprep.subr.mxu0 0.0
        %3142 = vmatpush2.msra.mxu0 0.0
        %3143 = vmatprep.subr.mxu0 0.0
        %3144 = vmatpush2.msra.mxu0 0.0
        %3145 = vmatprep.subr.mxu0 0.0
        %3146 = vmatpush2.msra.mxu0 0.0
        %3147 = vmatprep.subr.mxu0 0.0
        %3148 = vmatpush2.msra.mxu0 0.0
        %3149 = vmatprep.subr.mxu0 0.0
        %3150 = vmatpush2.msra.mxu0 0.0
        %3151 = vmatprep.subr.mxu0 0.0
        %3152 = vmatpush2.msra.mxu0 0.0
        %3153 = vmatprep.mubr.f32.mxu0 0.0
        %3154 = vmatmul.mubr.f32.gmra.mxu0 %v3058
        %v3155 = vpop.f32.mrf.mxu0
        %v3156 = vadd.f32 %v3087, %v3155
        %v3157 = vpop.f32.mrf.mxu0
        %3158 = vmatprep.mubr.f32.mxu0 0.0
        %3159 = vmatmul.mubr.f32.gmra.mxu0 %v3063
        %v3160 = vpop.f32.mrf.mxu0
        %v3161 = vadd.f32 %v3087, %v3160
        %v3162 = vpop.f32.mrf.mxu0
        %3163 = vdwg.mxu0
        %3164 = vst [vmem:[%s363] sm:$0xff] %v3156
        %3165 = vst [vmem:[%s363 + $0x8] sm:$0xff] %v3161
      $region60: #{sat1_gru_forward.1} parent=51 // pred_fallthru
        _
      %s3166 = smul.u32 2, %s23
      %p3167 = scmp.lt.s32.totalorder %s3166, 1
      %s3168 = scalar_select %p3167, %s3166, 1
      %s3169 = smul.addr %s3168, 8
      %s3170 = scalar_lea.vmem %s8, %s3169
      // Predicated region
      $region61: #{sat1_gru_forward.1} parent=51 // pred_check
        %p3171 = pneg %p229
      $region62: #{sat1_gru_forward.1} parent=51 // pred_check_branch
        %3173 = sbr.rel (%p3171) target = $region64
      $region63: #{sat1_gru_forward.1} parent=51 // pred_region
        %s3174 = smul.u32 2, %s23
      $region64: #{sat1_gru_forward.1} parent=51 // pred_fallthru
        _
      // Predicated region
      $region65: #{sat1_gru_forward.1} parent=51 // pred_check
        %p3175 = pneg %p229
      $region66: #{sat1_gru_forward.1} parent=51 // pred_check_branch
        %3177 = sbr.rel (%p3175) target = $region68
      $region67: #{sat1_gru_forward.1} parent=51 // pred_region
        %s3178 = smul.u32 2, %s23
        %p3179 = scmp.lt.s32.totalorder %s3178, 1
        %s3180 = scalar_select %p3179, %s3178, 1
        %s3181 = smul.addr %s3180, 8
        %s3182 = scalar_lea.vmem %s8, %s3181
      $region68: #{sat1_gru_forward.1} parent=51 // pred_fallthru
        _
    $region52: #{sat1_gru_forward.1} parent=5 // pred_fallthru
      _
    %p3183 = scmp.le.s32.totalorder 2, %s14
    // Predicated region
    $region69: #{sat1_gru_forward.1} parent=5 // pred_check
      %p3184 = pneg %p3183
    $region70: #{sat1_gru_forward.1} parent=5 // pred_check_branch
      %3186 = sbr.rel (%p3184) target = $region72
    $region71: #{sat1_gru_forward.1} parent=5 // pred_region
      %s3187 = ssub.s32 %s14, 2
    $region72: #{sat1_gru_forward.1} parent=5 // pred_fallthru
      _
  $region6: #{sat1_gru_forward.1} parent=0 // loop_footer
    %s18 = sadd.s32 1, %s14
  $region7: #{sat1_gru_forward.1} parent=0 // loop_footer_branch
    %13 = sbr.rel target = $region3
  $region8: #{sat1_gru_forward.1} parent=0 // loop_exit
    _

</llo_original>
